<compile_context>
chip_gen: v7x
topology: tpu7x:2x2x1
jax: 0.10.0
libtpu: 0.0.40
codegen_flags: <defaults>
</compile_context>

<pallas_src>
import functools
import math

import jax
import jax.numpy as jnp
from jax.experimental import pallas as pl
from jax.experimental.pallas import tpu as pltpu

# Small CLIP-text-encoder-shaped config
VOCAB = 64
CTX = 8          # context length (seq)
D_MODEL = 32
N_HEADS = 4
N_LAYERS = 2
PROJ_DIM = 32
LN_EPS = 1e-5


def _layernorm(x, w, b):
    mu = jnp.mean(x, axis=-1, keepdims=True)
    var = jnp.mean((x - mu) ** 2, axis=-1, keepdims=True)
    return (x - mu) * jax.lax.rsqrt(var + LN_EPS) * w + b


def fused_text_kernel(eot_ref,          # SMEM (B,) int32   (scalar prefetch)
                      x_ref,            # (1, S, D)   embedded tokens for batch b
                      vecs_ref,         # (L, 16, 4D) packed LN weights / biases
                      wqkv_ref,         # (L, D, 3D)  pre-transposed, Q pre-scaled
                      wo_ref,           # (L, D, D)
                      w1_ref,           # (L, D, 4D)
                      w2_ref,           # (L, 4D, D)
                      lnf_ref,          # (2, D)  rows: ln_final_w, ln_final_b
                      proj_ref,         # (D, P)
                      out_ref,          # (1, 1, P)
                      act_ref,          # VMEM (S, D) f32 scratch (EOT gather)
                      *, num_heads, num_layers):
    b = pl.program_id(0)                # top-level only (safe for interpret + TPU)

    S = x_ref.shape[1]
    D = x_ref.shape[2]
    hd = D // num_heads

    x = x_ref[0].astype(jnp.float32)    # (S, D), stays in registers

    # Causal additive mask — built once; the layer loop below is unrolled.
    row = jax.lax.broadcasted_iota(jnp.int32, (S, S), 0)
    col = jax.lax.broadcasted_iota(jnp.int32, (S, S), 1)
    mask_add = jnp.where(col <= row, 0.0, -1e30).astype(jnp.float32)

    for l in range(num_layers):         # weights are fully VMEM-resident
        vecs = vecs_ref[l]              # (16, 4D)
        ln1_w, ln1_b = vecs[0:1, :D], vecs[1:2, :D]
        ln2_w, ln2_b = vecs[2:3, :D], vecs[3:4, :D]
        bo, b2 = vecs[4:5, :D], vecs[5:6, :D]
        bq, bk, bv = vecs[6:7, :D], vecs[7:8, :D], vecs[8:9, :D]   # bq pre-scaled
        b1 = vecs[9:10, :]              # (1, 4D)

        wqkv = wqkv_ref[l]              # (D, 3D)
        wo = wo_ref[l]                  # (D, D)
        w1 = w1_ref[l]                  # (D, 4D)
        w2 = w2_ref[l]                  # (4D, D)

        # ---- attention branch: x = x + Wo( softmax_causal(Q K^T) V ) ----
        h = _layernorm(x, ln1_w, ln1_b)
        qkv = jnp.dot(h, wqkv, preferred_element_type=jnp.float32)     # (S, 3D)
        q = qkv[:, 0 * D:1 * D] + bq     # already scaled by 1/sqrt(hd)
        k = qkv[:, 1 * D:2 * D] + bk
        v = qkv[:, 2 * D:3 * D] + bv

        attn = jnp.zeros((S, D), jnp.float32)
        for hh in range(num_heads):
            sl = slice(hh * hd, (hh + 1) * hd)
            # q_h @ k_h^T without materializing a transpose
            s = jax.lax.dot_general(q[:, sl], k[:, sl],
                                    (((1,), (1,)), ((), ())),
                                    preferred_element_type=jnp.float32) + mask_add
            s = s - jnp.max(s, axis=-1, keepdims=True)
            p = jnp.exp(s)
            p = p / jnp.sum(p, axis=-1, keepdims=True)
            o_h = jnp.dot(p, v[:, sl], preferred_element_type=jnp.float32)   # (S, hd)
            # fuse the output projection per head (no (S,D) scratch stores)
            attn = attn + jnp.dot(o_h, wo[sl, :], preferred_element_type=jnp.float32)

        x = x + attn + bo

        # ---- MLP branch: x = x + W2( QuickGELU( W1( LN2(x) ) ) ) ----
        h2 = _layernorm(x, ln2_w, ln2_b)
        m = jnp.dot(h2, w1, preferred_element_type=jnp.float32) + b1
        m = m * jax.nn.sigmoid(1.702 * m)                       # QuickGELU
        x = x + jnp.dot(m, w2, preferred_element_type=jnp.float32) + b2

    # ---- ln_final + text_projection on the EOT row only ----
    act_ref[...] = x
    e = eot_ref[b]
    xr = act_ref[pl.ds(e, 1), :]                                # (1, D) dynamic row read
    hf = _layernorm(xr, lnf_ref[0:1], lnf_ref[1:2])
    out_ref[0] = jnp.dot(hf, proj_ref[...],
                         preferred_element_type=jnp.float32).astype(out_ref.dtype)


def prepare_params(params):
    """One-time param transform: transpose weights to [in, out], fold the attn
    scale into the Q projection, stack per-layer weights along a leading layer
    axis, and pack all small per-layer vectors into one (L, 16, 4D) payload."""
    D = D_MODEL
    hd = D // N_HEADS
    scale = 1.0 / math.sqrt(hd)
    sc = jnp.concatenate([jnp.full((D,), scale, jnp.float32),
                          jnp.ones((2 * D,), jnp.float32)])     # scale only Q outputs

    def pad_row(v):                                             # (1, D) -> (1, 4D)
        return jnp.pad(v, ((0, 0), (0, 3 * D)))

    wqkv, wo, w1, w2, vecs = [], [], [], [], []
    for lp in params['layers']:
        wqkv.append(lp['wqkv'].T * sc[None, :])                 # (D, 3D), Q pre-scaled
        wo.append(lp['wo'].T)                                   # (D, D)
        w1.append(lp['w1'].T)                                   # (D, 4D)
        w2.append(lp['w2'].T)                                   # (4D, D)
        bqkv = (lp['bqkv'] * sc[None, :])[0]                    # (3D,), bq pre-scaled
        rows = [
            pad_row(lp['ln1_w']), pad_row(lp['ln1_b']),
            pad_row(lp['ln2_w']), pad_row(lp['ln2_b']),
            pad_row(lp['bo']), pad_row(lp['b2']),
            pad_row(bqkv[:D][None]), pad_row(bqkv[D:2 * D][None]), pad_row(bqkv[2 * D:][None]),
            lp['b1'],                                           # (1, 4D) full lane width
            jnp.zeros((6, 4 * D), jnp.float32),                 # pad to 16 sublanes
        ]
        vecs.append(jnp.concatenate(rows, axis=0))              # (16, 4D)

    return dict(
        token_embedding=params['token_embedding'],
        positional_embedding=params['positional_embedding'],
        wqkv=jnp.stack(wqkv), wo=jnp.stack(wo),
        w1=jnp.stack(w1), w2=jnp.stack(w2),
        vecs=jnp.stack(vecs),                                                        # (L,16,4D)
        lnf=jnp.concatenate([params['ln_final_w'], params['ln_final_b']], axis=0),   # (2, D)
        proj=params['text_projection'],                                              # (D, P)
    )


def encode_text(tokens, prep):
    """Pallas implementation of CLIP.encode_text (== TextTransformer.forward)."""
    B, S = tokens.shape
    D = prep['wo'].shape[-1]
    P = prep['proj'].shape[-1]
    L = prep['wqkv'].shape[0]

    x = prep['token_embedding'][tokens] + prep['positional_embedding'][None]   # (B, S, D)
    eot = jnp.argmax(tokens, axis=-1).astype(jnp.int32)                        # EOT = max token id

    grid_spec = pltpu.PrefetchScalarGridSpec(
        num_scalar_prefetch=1,
        grid=(B,),                                    # batch only; layers looped in-kernel
        in_specs=[
            pl.BlockSpec((1, S, D),        lambda b, e: (b, 0, 0)),   # x (per batch element)
            pl.BlockSpec((L, 16, 4 * D),   lambda b, e: (0, 0, 0)),   # packed LN / bias payload
            pl.BlockSpec((L, D, 3 * D),    lambda b, e: (0, 0, 0)),   # wqkv (all layers resident)
            pl.BlockSpec((L, D, D),        lambda b, e: (0, 0, 0)),   # wo
            pl.BlockSpec((L, D, 4 * D),    lambda b, e: (0, 0, 0)),   # w1
            pl.BlockSpec((L, 4 * D, D),    lambda b, e: (0, 0, 0)),   # w2
            pl.BlockSpec((2, D),           lambda b, e: (0, 0)),      # ln_final w/b
            pl.BlockSpec((D, P),           lambda b, e: (0, 0)),      # text_projection
        ],
        out_specs=pl.BlockSpec((1, 1, P), lambda b, e: (b, 0, 0)),
        scratch_shapes=[pltpu.VMEM((S, D), jnp.float32)],             # EOT-gather scratch
    )

    out = pl.pallas_call(
        functools.partial(fused_text_kernel, num_heads=N_HEADS, num_layers=L),
        grid_spec=grid_spec,
        out_shape=jax.ShapeDtypeStruct((B, 1, P), jnp.float32),
        compiler_params=pltpu.CompilerParams(
            dimension_semantics=("parallel",)),       # batch across TensorCores on v7x
    )(eot, x, prep['vecs'], prep['wqkv'], prep['wo'],
      prep['w1'], prep['w2'], prep['lnf'], prep['proj'])
    return out[:, 0, :]                                                        # (B, P)


# -------------------- pure-JAX reference (for correctness check) --------------------
def _ref_block(x, lp):
    def ln(v, w, b):
        mu = v.mean(-1, keepdims=True)
        var = ((v - mu) ** 2).mean(-1, keepdims=True)
        return (v - mu) / jnp.sqrt(var + LN_EPS) * w + b
    B, S, D = x.shape
    hd = D // N_HEADS
    h = ln(x, lp['ln1_w'], lp['ln1_b'])
    qkv = h @ lp['wqkv'].T + lp['bqkv']
    q, k, v = jnp.split(qkv, 3, axis=-1)
    q = q.reshape(B, S, N_HEADS, hd).transpose(0, 2, 1, 3) / math.sqrt(hd)
    k = k.reshape(B, S, N_HEADS, hd).transpose(0, 2, 1, 3)
    v = v.reshape(B, S, N_HEADS, hd).transpose(0, 2, 1, 3)
    s = q @ k.transpose(0, 1, 3, 2)
    mask = jnp.tril(jnp.ones((S, S), bool))
    s = jnp.where(mask, s, -jnp.inf)
    p = jax.nn.softmax(s, axis=-1)
    o = (p @ v).transpose(0, 2, 1, 3).reshape(B, S, D)
    x = x + o @ lp['wo'].T + lp['bo']
    h2 = ln(x, lp['ln2_w'], lp['ln2_b'])
    m = h2 @ lp['w1'].T + lp['b1']
    m = m * jax.nn.sigmoid(1.702 * m)
    return x + m @ lp['w2'].T + lp['b2']


def encode_text_ref(tokens, params):
    B, S = tokens.shape
    x = params['token_embedding'][tokens] + params['positional_embedding'][None]
    for lp in params['layers']:
        x = _ref_block(x, lp)
    mu = x.mean(-1, keepdims=True)
    var = ((x - mu) ** 2).mean(-1, keepdims=True)
    x = (x - mu) / jnp.sqrt(var + LN_EPS) * params['ln_final_w'] + params['ln_final_b']
    eot = jnp.argmax(tokens, axis=-1)
    return x[jnp.arange(B), eot] @ params['text_projection']


# -------------------- deterministic parameter init --------------------
def init_params(key):
    ks = jax.random.split(key, 3 + N_LAYERS)
    p = {
        'token_embedding': 0.02 * jax.random.normal(ks[0], (VOCAB, D_MODEL), jnp.float32),
        'positional_embedding': 0.01 * jax.random.normal(ks[1], (CTX, D_MODEL), jnp.float32),
        'text_projection': 0.05 * jax.random.normal(ks[2], (D_MODEL, PROJ_DIM), jnp.float32),
        'ln_final_w': jnp.ones((1, D_MODEL), jnp.float32),
        'ln_final_b': jnp.zeros((1, D_MODEL), jnp.float32),
        'layers': [],
    }
    for l in range(N_LAYERS):
        lk = jax.random.split(ks[3 + l], 8)
        p['layers'].append(dict(
            ln1_w=jnp.ones((1, D_MODEL), jnp.float32),
            ln1_b=jnp.zeros((1, D_MODEL), jnp.float32),
            wqkv=0.05 * jax.random.normal(lk[0], (3 * D_MODEL, D_MODEL), jnp.float32),
            bqkv=0.01 * jax.random.normal(lk[1], (1, 3 * D_MODEL), jnp.float32),
            wo=0.05 * jax.random.normal(lk[2], (D_MODEL, D_MODEL), jnp.float32),
            bo=0.01 * jax.random.normal(lk[3], (1, D_MODEL), jnp.float32),
            ln2_w=jnp.ones((1, D_MODEL), jnp.float32),
            ln2_b=jnp.zeros((1, D_MODEL), jnp.float32),
            w1=0.05 * jax.random.normal(lk[4], (4 * D_MODEL, D_MODEL), jnp.float32),
            b1=0.01 * jax.random.normal(lk[5], (1, 4 * D_MODEL), jnp.float32),
            w2=0.05 * jax.random.normal(lk[6], (D_MODEL, 4 * D_MODEL), jnp.float32),
            b2=0.01 * jax.random.normal(lk[7], (1, D_MODEL), jnp.float32),
        ))
    return p


if __name__ == "__main__":
    key = jax.random.PRNGKey(0)
    pkey, tkey = jax.random.split(key)
    params = init_params(pkey)
    tokens = jax.random.randint(tkey, (2, CTX), 0, VOCAB, dtype=jnp.int32)

    prep = prepare_params(params)            # one-time weight transform (transpose/stack/pack)
    out = jax.block_until_ready(encode_text(tokens, prep))
    ref = encode_text_ref(tokens, params)

    assert out.shape == (2, PROJ_DIM), out.shape
    assert bool(jnp.all(jnp.isfinite(out)))
    max_err = float(jnp.max(jnp.abs(out - ref)))
    assert bool(jnp.allclose(out, ref, atol=2e-3, rtol=2e-3)), f"max_err={max_err}"
    print("KERNEL_OK")
</pallas_src>

<mosaic_0001>
module attributes {stable_mosaic.version = 11 : i64} {
  func.func @fused_text_kernel(%arg0: i32, %arg1: memref<2xi32, #tpu.memory_space<smem>>, %arg2: memref<1x8x32xf32, #tpu.memory_space<vmem>>, %arg3: memref<2x16x128xf32, #tpu.memory_space<vmem>>, %arg4: memref<2x32x96xf32, #tpu.memory_space<vmem>>, %arg5: memref<2x32x32xf32, #tpu.memory_space<vmem>>, %arg6: memref<2x32x128xf32, #tpu.memory_space<vmem>>, %arg7: memref<2x128x32xf32, #tpu.memory_space<vmem>>, %arg8: memref<2x32xf32, #tpu.memory_space<vmem>>, %arg9: memref<32x32xf32, #tpu.memory_space<vmem>>, %arg10: memref<1x1x32xf32, #tpu.memory_space<vmem>>, %arg11: memref<8x32xf32, #tpu.memory_space<vmem>>) attributes {dimension_semantics = [#tpu.dimension_semantics<parallel>], iteration_bounds = array<i64: 2>, scalar_prefetch = 1 : i64, scratch_operands = 1 : i64, tpu.core_type = #tpu.core_type<tc>, window_params = [{transform_indices = @transform_0, window_bounds = array<i64: 1, 8, 32>}, {pipeline_mode = #tpu.pipeline_mode<synchronous>, transform_indices = @transform_1, window_bounds = array<i64: 2, 16, 128>}, {pipeline_mode = #tpu.pipeline_mode<synchronous>, transform_indices = @transform_2, window_bounds = array<i64: 2, 32, 96>}, {pipeline_mode = #tpu.pipeline_mode<synchronous>, transform_indices = @transform_3, window_bounds = array<i64: 2, 32, 32>}, {pipeline_mode = #tpu.pipeline_mode<synchronous>, transform_indices = @transform_4, window_bounds = array<i64: 2, 32, 128>}, {pipeline_mode = #tpu.pipeline_mode<synchronous>, transform_indices = @transform_5, window_bounds = array<i64: 2, 128, 32>}, {pipeline_mode = #tpu.pipeline_mode<synchronous>, transform_indices = @transform_6, window_bounds = array<i64: 2, 32>}, {pipeline_mode = #tpu.pipeline_mode<synchronous>, transform_indices = @transform_7, window_bounds = array<i64: 32, 32>}, {transform_indices = @transform_8, window_bounds = array<i64: 1, 1, 32>}]} {
    %c0 = arith.constant 0 : index
    %c0_0 = arith.constant 0 : index
    %c0_1 = arith.constant 0 : index
    %0 = vector.load %arg2[%c0, %c0_0, %c0_1] : memref<1x8x32xf32, #tpu.memory_space<vmem>>, vector<1x8x32xf32>
    %1 = vector.shape_cast %0 : vector<1x8x32xf32> to vector<8x32xf32>
    %2 = tpu.iota {dimensions = array<i32: 0>} : vector<8x8xi32>
    %3 = tpu.iota {dimensions = array<i32: 1>} : vector<8x8xi32>
    %4 = arith.cmpi sle, %3, %2 : vector<8x8xi32>
    %cst = arith.constant 0.000000e+00 : f32
    %cst_2 = arith.constant -1.000000e+30 : f32
    %5 = vector.broadcast %cst : f32 to vector<8x8xf32>
    %6 = vector.broadcast %cst_2 : f32 to vector<8x8xf32>
    %7 = arith.select %4, %5, %6 : vector<8x8xi1>, vector<8x8xf32>
    %c0_3 = arith.constant 0 : index
    %c0_4 = arith.constant 0 : index
    %c0_5 = arith.constant 0 : index
    %8 = vector.load %arg3[%c0_3, %c0_4, %c0_5] : memref<2x16x128xf32, #tpu.memory_space<vmem>>, vector<1x16x128xf32>
    %9 = vector.shape_cast %8 : vector<1x16x128xf32> to vector<16x128xf32>
    %10 = vector.extract_strided_slice %9 {offsets = [0, 0], sizes = [1, 32], strides = [1, 1]} : vector<16x128xf32> to vector<1x32xf32>
    %11 = vector.extract_strided_slice %9 {offsets = [1, 0], sizes = [1, 32], strides = [1, 1]} : vector<16x128xf32> to vector<1x32xf32>
    %12 = vector.extract_strided_slice %9 {offsets = [2, 0], sizes = [1, 32], strides = [1, 1]} : vector<16x128xf32> to vector<1x32xf32>
    %13 = vector.extract_strided_slice %9 {offsets = [3, 0], sizes = [1, 32], strides = [1, 1]} : vector<16x128xf32> to vector<1x32xf32>
    %14 = vector.extract_strided_slice %9 {offsets = [4, 0], sizes = [1, 32], strides = [1, 1]} : vector<16x128xf32> to vector<1x32xf32>
    %15 = vector.extract_strided_slice %9 {offsets = [5, 0], sizes = [1, 32], strides = [1, 1]} : vector<16x128xf32> to vector<1x32xf32>
    %16 = vector.extract_strided_slice %9 {offsets = [6, 0], sizes = [1, 32], strides = [1, 1]} : vector<16x128xf32> to vector<1x32xf32>
    %17 = vector.extract_strided_slice %9 {offsets = [7, 0], sizes = [1, 32], strides = [1, 1]} : vector<16x128xf32> to vector<1x32xf32>
    %18 = vector.extract_strided_slice %9 {offsets = [8, 0], sizes = [1, 32], strides = [1, 1]} : vector<16x128xf32> to vector<1x32xf32>
    %19 = vector.extract_strided_slice %9 {offsets = [9, 0], sizes = [1, 128], strides = [1, 1]} : vector<16x128xf32> to vector<1x128xf32>
    %c0_6 = arith.constant 0 : index
    %c0_7 = arith.constant 0 : index
    %c0_8 = arith.constant 0 : index
    %20 = vector.load %arg4[%c0_6, %c0_7, %c0_8] : memref<2x32x96xf32, #tpu.memory_space<vmem>>, vector<1x32x96xf32>
    %21 = vector.shape_cast %20 : vector<1x32x96xf32> to vector<32x96xf32>
    %c0_9 = arith.constant 0 : index
    %c0_10 = arith.constant 0 : index
    %c0_11 = arith.constant 0 : index
    %22 = vector.load %arg5[%c0_9, %c0_10, %c0_11] : memref<2x32x32xf32, #tpu.memory_space<vmem>>, vector<1x32x32xf32>
    %23 = vector.shape_cast %22 : vector<1x32x32xf32> to vector<32x32xf32>
    %c0_12 = arith.constant 0 : index
    %c0_13 = arith.constant 0 : index
    %c0_14 = arith.constant 0 : index
    %24 = vector.load %arg6[%c0_12, %c0_13, %c0_14] : memref<2x32x128xf32, #tpu.memory_space<vmem>>, vector<1x32x128xf32>
    %25 = vector.shape_cast %24 : vector<1x32x128xf32> to vector<32x128xf32>
    %c0_15 = arith.constant 0 : index
    %c0_16 = arith.constant 0 : index
    %c0_17 = arith.constant 0 : index
    %26 = vector.load %arg7[%c0_15, %c0_16, %c0_17] : memref<2x128x32xf32, #tpu.memory_space<vmem>>, vector<1x128x32xf32>
    %27 = vector.shape_cast %26 : vector<1x128x32xf32> to vector<128x32xf32>
    %cst_18 = arith.constant dense<0.000000e+00> : vector<8xf32>
    %28 = vector.multi_reduction <add>, %1, %cst_18 [1] : vector<8x32xf32> to vector<8xf32>
    %29 = vector.shape_cast %28 : vector<8xf32> to vector<8x1xf32>
    %cst_19 = arith.constant 3.200000e+01 : f32
    %30 = vector.broadcast %cst_19 : f32 to vector<8x1xf32>
    %31 = arith.divf %29, %30 : vector<8x1xf32>
    %32 = vector.broadcast %31 : vector<8x1xf32> to vector<8x32xf32>
    %33 = arith.subf %1, %32 : vector<8x32xf32>
    %34 = arith.mulf %33, %33 : vector<8x32xf32>
    %cst_20 = arith.constant dense<0.000000e+00> : vector<8xf32>
    %35 = vector.multi_reduction <add>, %34, %cst_20 [1] : vector<8x32xf32> to vector<8xf32>
    %36 = vector.shape_cast %35 : vector<8xf32> to vector<8x1xf32>
    %cst_21 = arith.constant 3.200000e+01 : f32
    %37 = vector.broadcast %cst_21 : f32 to vector<8x1xf32>
    %38 = arith.divf %36, %37 : vector<8x1xf32>
    %39 = vector.broadcast %31 : vector<8x1xf32> to vector<8x32xf32>
    %40 = arith.subf %1, %39 : vector<8x32xf32>
    %cst_22 = arith.constant 9.99999974E-6 : f32
    %41 = vector.broadcast %cst_22 : f32 to vector<8x1xf32>
    %42 = arith.addf %38, %41 : vector<8x1xf32>
    %43 = math.rsqrt %42 : vector<8x1xf32>
    %44 = vector.broadcast %43 : vector<8x1xf32> to vector<8x32xf32>
    %45 = arith.mulf %40, %44 : vector<8x32xf32>
    %46 = vector.broadcast %10 : vector<1x32xf32> to vector<8x32xf32>
    %47 = arith.mulf %45, %46 : vector<8x32xf32>
    %48 = vector.broadcast %11 : vector<1x32xf32> to vector<8x32xf32>
    %49 = arith.addf %47, %48 : vector<8x32xf32>
    %cst_23 = arith.constant dense<0.000000e+00> : vector<8x96xf32>
    %50 = tpu.matmul %49, %21, %cst_23 {dimension_numbers = #tpu.dot_dimension_numbers<[1], [0], [0], [1], [0, 0, 1, 1], [], []>} : vector<8x32xf32>, vector<32x96xf32>, vector<8x96xf32> -> vector<8x96xf32>
    %51 = vector.extract_strided_slice %50 {offsets = [0, 0], sizes = [8, 32], strides = [1, 1]} : vector<8x96xf32> to vector<8x32xf32>
    %52 = vector.broadcast %16 : vector<1x32xf32> to vector<8x32xf32>
    %53 = arith.addf %51, %52 : vector<8x32xf32>
    %54 = vector.extract_strided_slice %50 {offsets = [0, 32], sizes = [8, 32], strides = [1, 1]} : vector<8x96xf32> to vector<8x32xf32>
    %55 = vector.broadcast %17 : vector<1x32xf32> to vector<8x32xf32>
    %56 = arith.addf %54, %55 : vector<8x32xf32>
    %57 = vector.extract_strided_slice %50 {offsets = [0, 64], sizes = [8, 32], strides = [1, 1]} : vector<8x96xf32> to vector<8x32xf32>
    %58 = vector.broadcast %18 : vector<1x32xf32> to vector<8x32xf32>
    %59 = arith.addf %57, %58 : vector<8x32xf32>
    %cst_24 = arith.constant 0.000000e+00 : f32
    %60 = vector.broadcast %cst_24 : f32 to vector<8x32xf32>
    %61 = vector.extract_strided_slice %53 {offsets = [0, 0], sizes = [8, 8], strides = [1, 1]} : vector<8x32xf32> to vector<8x8xf32>
    %62 = vector.extract_strided_slice %56 {offsets = [0, 0], sizes = [8, 8], strides = [1, 1]} : vector<8x32xf32> to vector<8x8xf32>
    %cst_25 = arith.constant dense<0.000000e+00> : vector<8x8xf32>
    %63 = tpu.matmul %61, %62, %cst_25 {dimension_numbers = #tpu.dot_dimension_numbers<[1], [1], [0], [0], [0, 0, 1, 0], [], []>} : vector<8x8xf32>, vector<8x8xf32>, vector<8x8xf32> -> vector<8x8xf32>
    %64 = arith.addf %63, %7 : vector<8x8xf32>
    %cst_26 = arith.constant dense<0xFF800000> : vector<8xf32>
    %65 = vector.multi_reduction <maximumf>, %64, %cst_26 [1] : vector<8x8xf32> to vector<8xf32>
    %66 = vector.shape_cast %65 : vector<8xf32> to vector<8x1xf32>
    %67 = vector.broadcast %66 : vector<8x1xf32> to vector<8x8xf32>
    %68 = arith.subf %64, %67 : vector<8x8xf32>
    %69 = math.exp %68 : vector<8x8xf32>
    %cst_27 = arith.constant dense<0.000000e+00> : vector<8xf32>
    %70 = vector.multi_reduction <add>, %69, %cst_27 [1] : vector<8x8xf32> to vector<8xf32>
    %71 = vector.shape_cast %70 : vector<8xf32> to vector<8x1xf32>
    %72 = vector.broadcast %71 : vector<8x1xf32> to vector<8x8xf32>
    %73 = arith.divf %69, %72 : vector<8x8xf32>
    %74 = vector.extract_strided_slice %59 {offsets = [0, 0], sizes = [8, 8], strides = [1, 1]} : vector<8x32xf32> to vector<8x8xf32>
    %cst_28 = arith.constant dense<0.000000e+00> : vector<8x8xf32>
    %75 = tpu.matmul %73, %74, %cst_28 {dimension_numbers = #tpu.dot_dimension_numbers<[1], [0], [0], [1], [0, 0, 1, 1], [], []>} : vector<8x8xf32>, vector<8x8xf32>, vector<8x8xf32> -> vector<8x8xf32>
    %76 = vector.extract_strided_slice %23 {offsets = [0, 0], sizes = [8, 32], strides = [1, 1]} : vector<32x32xf32> to vector<8x32xf32>
    %cst_29 = arith.constant dense<0.000000e+00> : vector<8x32xf32>
    %77 = tpu.matmul %75, %76, %cst_29 {dimension_numbers = #tpu.dot_dimension_numbers<[1], [0], [0], [1], [0, 0, 1, 1], [], []>} : vector<8x8xf32>, vector<8x32xf32>, vector<8x32xf32> -> vector<8x32xf32>
    %78 = arith.addf %60, %77 : vector<8x32xf32>
    %79 = vector.extract_strided_slice %53 {offsets = [0, 8], sizes = [8, 8], strides = [1, 1]} : vector<8x32xf32> to vector<8x8xf32>
    %80 = vector.extract_strided_slice %56 {offsets = [0, 8], sizes = [8, 8], strides = [1, 1]} : vector<8x32xf32> to vector<8x8xf32>
    %cst_30 = arith.constant dense<0.000000e+00> : vector<8x8xf32>
    %81 = tpu.matmul %79, %80, %cst_30 {dimension_numbers = #tpu.dot_dimension_numbers<[1], [1], [0], [0], [0, 0, 1, 0], [], []>} : vector<8x8xf32>, vector<8x8xf32>, vector<8x8xf32> -> vector<8x8xf32>
    %82 = arith.addf %81, %7 : vector<8x8xf32>
    %cst_31 = arith.constant dense<0xFF800000> : vector<8xf32>
    %83 = vector.multi_reduction <maximumf>, %82, %cst_31 [1] : vector<8x8xf32> to vector<8xf32>
    %84 = vector.shape_cast %83 : vector<8xf32> to vector<8x1xf32>
    %85 = vector.broadcast %84 : vector<8x1xf32> to vector<8x8xf32>
    %86 = arith.subf %82, %85 : vector<8x8xf32>
    %87 = math.exp %86 : vector<8x8xf32>
    %cst_32 = arith.constant dense<0.000000e+00> : vector<8xf32>
    %88 = vector.multi_reduction <add>, %87, %cst_32 [1] : vector<8x8xf32> to vector<8xf32>
    %89 = vector.shape_cast %88 : vector<8xf32> to vector<8x1xf32>
    %90 = vector.broadcast %89 : vector<8x1xf32> to vector<8x8xf32>
    %91 = arith.divf %87, %90 : vector<8x8xf32>
    %92 = vector.extract_strided_slice %59 {offsets = [0, 8], sizes = [8, 8], strides = [1, 1]} : vector<8x32xf32> to vector<8x8xf32>
    %cst_33 = arith.constant dense<0.000000e+00> : vector<8x8xf32>
    %93 = tpu.matmul %91, %92, %cst_33 {dimension_numbers = #tpu.dot_dimension_numbers<[1], [0], [0], [1], [0, 0, 1, 1], [], []>} : vector<8x8xf32>, vector<8x8xf32>, vector<8x8xf32> -> vector<8x8xf32>
    %94 = vector.extract_strided_slice %23 {offsets = [8, 0], sizes = [8, 32], strides = [1, 1]} : vector<32x32xf32> to vector<8x32xf32>
    %cst_34 = arith.constant dense<0.000000e+00> : vector<8x32xf32>
    %95 = tpu.matmul %93, %94, %cst_34 {dimension_numbers = #tpu.dot_dimension_numbers<[1], [0], [0], [1], [0, 0, 1, 1], [], []>} : vector<8x8xf32>, vector<8x32xf32>, vector<8x32xf32> -> vector<8x32xf32>
    %96 = arith.addf %78, %95 : vector<8x32xf32>
    %97 = vector.extract_strided_slice %53 {offsets = [0, 16], sizes = [8, 8], strides = [1, 1]} : vector<8x32xf32> to vector<8x8xf32>
    %98 = vector.extract_strided_slice %56 {offsets = [0, 16], sizes = [8, 8], strides = [1, 1]} : vector<8x32xf32> to vector<8x8xf32>
    %cst_35 = arith.constant dense<0.000000e+00> : vector<8x8xf32>
    %99 = tpu.matmul %97, %98, %cst_35 {dimension_numbers = #tpu.dot_dimension_numbers<[1], [1], [0], [0], [0, 0, 1, 0], [], []>} : vector<8x8xf32>, vector<8x8xf32>, vector<8x8xf32> -> vector<8x8xf32>
    %100 = arith.addf %99, %7 : vector<8x8xf32>
    %cst_36 = arith.constant dense<0xFF800000> : vector<8xf32>
    %101 = vector.multi_reduction <maximumf>, %100, %cst_36 [1] : vector<8x8xf32> to vector<8xf32>
    %102 = vector.shape_cast %101 : vector<8xf32> to vector<8x1xf32>
    %103 = vector.broadcast %102 : vector<8x1xf32> to vector<8x8xf32>
    %104 = arith.subf %100, %103 : vector<8x8xf32>
    %105 = math.exp %104 : vector<8x8xf32>
    %cst_37 = arith.constant dense<0.000000e+00> : vector<8xf32>
    %106 = vector.multi_reduction <add>, %105, %cst_37 [1] : vector<8x8xf32> to vector<8xf32>
    %107 = vector.shape_cast %106 : vector<8xf32> to vector<8x1xf32>
    %108 = vector.broadcast %107 : vector<8x1xf32> to vector<8x8xf32>
    %109 = arith.divf %105, %108 : vector<8x8xf32>
    %110 = vector.extract_strided_slice %59 {offsets = [0, 16], sizes = [8, 8], strides = [1, 1]} : vector<8x32xf32> to vector<8x8xf32>
    %cst_38 = arith.constant dense<0.000000e+00> : vector<8x8xf32>
    %111 = tpu.matmul %109, %110, %cst_38 {dimension_numbers = #tpu.dot_dimension_numbers<[1], [0], [0], [1], [0, 0, 1, 1], [], []>} : vector<8x8xf32>, vector<8x8xf32>, vector<8x8xf32> -> vector<8x8xf32>
    %112 = vector.extract_strided_slice %23 {offsets = [16, 0], sizes = [8, 32], strides = [1, 1]} : vector<32x32xf32> to vector<8x32xf32>
    %cst_39 = arith.constant dense<0.000000e+00> : vector<8x32xf32>
    %113 = tpu.matmul %111, %112, %cst_39 {dimension_numbers = #tpu.dot_dimension_numbers<[1], [0], [0], [1], [0, 0, 1, 1], [], []>} : vector<8x8xf32>, vector<8x32xf32>, vector<8x32xf32> -> vector<8x32xf32>
    %114 = arith.addf %96, %113 : vector<8x32xf32>
    %115 = vector.extract_strided_slice %53 {offsets = [0, 24], sizes = [8, 8], strides = [1, 1]} : vector<8x32xf32> to vector<8x8xf32>
    %116 = vector.extract_strided_slice %56 {offsets = [0, 24], sizes = [8, 8], strides = [1, 1]} : vector<8x32xf32> to vector<8x8xf32>
    %cst_40 = arith.constant dense<0.000000e+00> : vector<8x8xf32>
    %117 = tpu.matmul %115, %116, %cst_40 {dimension_numbers = #tpu.dot_dimension_numbers<[1], [1], [0], [0], [0, 0, 1, 0], [], []>} : vector<8x8xf32>, vector<8x8xf32>, vector<8x8xf32> -> vector<8x8xf32>
    %118 = arith.addf %117, %7 : vector<8x8xf32>
    %cst_41 = arith.constant dense<0xFF800000> : vector<8xf32>
    %119 = vector.multi_reduction <maximumf>, %118, %cst_41 [1] : vector<8x8xf32> to vector<8xf32>
    %120 = vector.shape_cast %119 : vector<8xf32> to vector<8x1xf32>
    %121 = vector.broadcast %120 : vector<8x1xf32> to vector<8x8xf32>
    %122 = arith.subf %118, %121 : vector<8x8xf32>
    %123 = math.exp %122 : vector<8x8xf32>
    %cst_42 = arith.constant dense<0.000000e+00> : vector<8xf32>
    %124 = vector.multi_reduction <add>, %123, %cst_42 [1] : vector<8x8xf32> to vector<8xf32>
    %125 = vector.shape_cast %124 : vector<8xf32> to vector<8x1xf32>
    %126 = vector.broadcast %125 : vector<8x1xf32> to vector<8x8xf32>
    %127 = arith.divf %123, %126 : vector<8x8xf32>
    %128 = vector.extract_strided_slice %59 {offsets = [0, 24], sizes = [8, 8], strides = [1, 1]} : vector<8x32xf32> to vector<8x8xf32>
    %cst_43 = arith.constant dense<0.000000e+00> : vector<8x8xf32>
    %129 = tpu.matmul %127, %128, %cst_43 {dimension_numbers = #tpu.dot_dimension_numbers<[1], [0], [0], [1], [0, 0, 1, 1], [], []>} : vector<8x8xf32>, vector<8x8xf32>, vector<8x8xf32> -> vector<8x8xf32>
    %130 = vector.extract_strided_slice %23 {offsets = [24, 0], sizes = [8, 32], strides = [1, 1]} : vector<32x32xf32> to vector<8x32xf32>
    %cst_44 = arith.constant dense<0.000000e+00> : vector<8x32xf32>
    %131 = tpu.matmul %129, %130, %cst_44 {dimension_numbers = #tpu.dot_dimension_numbers<[1], [0], [0], [1], [0, 0, 1, 1], [], []>} : vector<8x8xf32>, vector<8x32xf32>, vector<8x32xf32> -> vector<8x32xf32>
    %132 = arith.addf %114, %131 : vector<8x32xf32>
    %133 = arith.addf %1, %132 : vector<8x32xf32>
    %134 = vector.broadcast %14 : vector<1x32xf32> to vector<8x32xf32>
    %135 = arith.addf %133, %134 : vector<8x32xf32>
    %cst_45 = arith.constant dense<0.000000e+00> : vector<8xf32>
    %136 = vector.multi_reduction <add>, %135, %cst_45 [1] : vector<8x32xf32> to vector<8xf32>
    %137 = vector.shape_cast %136 : vector<8xf32> to vector<8x1xf32>
    %cst_46 = arith.constant 3.200000e+01 : f32
    %138 = vector.broadcast %cst_46 : f32 to vector<8x1xf32>
    %139 = arith.divf %137, %138 : vector<8x1xf32>
    %140 = vector.broadcast %139 : vector<8x1xf32> to vector<8x32xf32>
    %141 = arith.subf %135, %140 : vector<8x32xf32>
    %142 = arith.mulf %141, %141 : vector<8x32xf32>
    %cst_47 = arith.constant dense<0.000000e+00> : vector<8xf32>
    %143 = vector.multi_reduction <add>, %142, %cst_47 [1] : vector<8x32xf32> to vector<8xf32>
    %144 = vector.shape_cast %143 : vector<8xf32> to vector<8x1xf32>
    %cst_48 = arith.constant 3.200000e+01 : f32
    %145 = vector.broadcast %cst_48 : f32 to vector<8x1xf32>
    %146 = arith.divf %144, %145 : vector<8x1xf32>
    %147 = vector.broadcast %139 : vector<8x1xf32> to vector<8x32xf32>
    %148 = arith.subf %135, %147 : vector<8x32xf32>
    %cst_49 = arith.constant 9.99999974E-6 : f32
    %149 = vector.broadcast %cst_49 : f32 to vector<8x1xf32>
    %150 = arith.addf %146, %149 : vector<8x1xf32>
    %151 = math.rsqrt %150 : vector<8x1xf32>
    %152 = vector.broadcast %151 : vector<8x1xf32> to vector<8x32xf32>
    %153 = arith.mulf %148, %152 : vector<8x32xf32>
    %154 = vector.broadcast %12 : vector<1x32xf32> to vector<8x32xf32>
    %155 = arith.mulf %153, %154 : vector<8x32xf32>
    %156 = vector.broadcast %13 : vector<1x32xf32> to vector<8x32xf32>
    %157 = arith.addf %155, %156 : vector<8x32xf32>
    %cst_50 = arith.constant dense<0.000000e+00> : vector<8x128xf32>
    %158 = tpu.matmul %157, %25, %cst_50 {dimension_numbers = #tpu.dot_dimension_numbers<[1], [0], [0], [1], [0, 0, 1, 1], [], []>} : vector<8x32xf32>, vector<32x128xf32>, vector<8x128xf32> -> vector<8x128xf32>
    %159 = vector.broadcast %19 : vector<1x128xf32> to vector<8x128xf32>
    %160 = arith.addf %158, %159 : vector<8x128xf32>
    %cst_51 = arith.constant 1.702000e+00 : f32
    %161 = vector.broadcast %cst_51 : f32 to vector<8x128xf32>
    %162 = arith.mulf %161, %160 : vector<8x128xf32>
    %163 = arith.negf %162 : vector<8x128xf32>
    %164 = math.exp %163 : vector<8x128xf32>
    %cst_52 = arith.constant 1.000000e+00 : f32
    %165 = vector.broadcast %cst_52 : f32 to vector<8x128xf32>
    %166 = arith.addf %165, %164 : vector<8x128xf32>
    %167 = arith.divf %165, %166 : vector<8x128xf32>
    %168 = arith.mulf %160, %167 : vector<8x128xf32>
    %cst_53 = arith.constant dense<0.000000e+00> : vector<8x32xf32>
    %169 = tpu.matmul %168, %27, %cst_53 {dimension_numbers = #tpu.dot_dimension_numbers<[1], [0], [0], [1], [0, 0, 1, 1], [], []>} : vector<8x128xf32>, vector<128x32xf32>, vector<8x32xf32> -> vector<8x32xf32>
    %170 = arith.addf %135, %169 : vector<8x32xf32>
    %171 = vector.broadcast %15 : vector<1x32xf32> to vector<8x32xf32>
    %172 = arith.addf %170, %171 : vector<8x32xf32>
    %c1 = arith.constant 1 : index
    %c0_54 = arith.constant 0 : index
    %c0_55 = arith.constant 0 : index
    %173 = vector.load %arg3[%c1, %c0_54, %c0_55] : memref<2x16x128xf32, #tpu.memory_space<vmem>>, vector<1x16x128xf32>
    %174 = vector.shape_cast %173 : vector<1x16x128xf32> to vector<16x128xf32>
    %175 = vector.extract_strided_slice %174 {offsets = [0, 0], sizes = [1, 32], strides = [1, 1]} : vector<16x128xf32> to vector<1x32xf32>
    %176 = vector.extract_strided_slice %174 {offsets = [1, 0], sizes = [1, 32], strides = [1, 1]} : vector<16x128xf32> to vector<1x32xf32>
    %177 = vector.extract_strided_slice %174 {offsets = [2, 0], sizes = [1, 32], strides = [1, 1]} : vector<16x128xf32> to vector<1x32xf32>
    %178 = vector.extract_strided_slice %174 {offsets = [3, 0], sizes = [1, 32], strides = [1, 1]} : vector<16x128xf32> to vector<1x32xf32>
    %179 = vector.extract_strided_slice %174 {offsets = [4, 0], sizes = [1, 32], strides = [1, 1]} : vector<16x128xf32> to vector<1x32xf32>
    %180 = vector.extract_strided_slice %174 {offsets = [5, 0], sizes = [1, 32], strides = [1, 1]} : vector<16x128xf32> to vector<1x32xf32>
    %181 = vector.extract_strided_slice %174 {offsets = [6, 0], sizes = [1, 32], strides = [1, 1]} : vector<16x128xf32> to vector<1x32xf32>
    %182 = vector.extract_strided_slice %174 {offsets = [7, 0], sizes = [1, 32], strides = [1, 1]} : vector<16x128xf32> to vector<1x32xf32>
    %183 = vector.extract_strided_slice %174 {offsets = [8, 0], sizes = [1, 32], strides = [1, 1]} : vector<16x128xf32> to vector<1x32xf32>
    %184 = vector.extract_strided_slice %174 {offsets = [9, 0], sizes = [1, 128], strides = [1, 1]} : vector<16x128xf32> to vector<1x128xf32>
    %c1_56 = arith.constant 1 : index
    %c0_57 = arith.constant 0 : index
    %c0_58 = arith.constant 0 : index
    %185 = vector.load %arg4[%c1_56, %c0_57, %c0_58] : memref<2x32x96xf32, #tpu.memory_space<vmem>>, vector<1x32x96xf32>
    %186 = vector.shape_cast %185 : vector<1x32x96xf32> to vector<32x96xf32>
    %c1_59 = arith.constant 1 : index
    %c0_60 = arith.constant 0 : index
    %c0_61 = arith.constant 0 : index
    %187 = vector.load %arg5[%c1_59, %c0_60, %c0_61] : memref<2x32x32xf32, #tpu.memory_space<vmem>>, vector<1x32x32xf32>
    %188 = vector.shape_cast %187 : vector<1x32x32xf32> to vector<32x32xf32>
    %c1_62 = arith.constant 1 : index
    %c0_63 = arith.constant 0 : index
    %c0_64 = arith.constant 0 : index
    %189 = vector.load %arg6[%c1_62, %c0_63, %c0_64] : memref<2x32x128xf32, #tpu.memory_space<vmem>>, vector<1x32x128xf32>
    %190 = vector.shape_cast %189 : vector<1x32x128xf32> to vector<32x128xf32>
    %c1_65 = arith.constant 1 : index
    %c0_66 = arith.constant 0 : index
    %c0_67 = arith.constant 0 : index
    %191 = vector.load %arg7[%c1_65, %c0_66, %c0_67] : memref<2x128x32xf32, #tpu.memory_space<vmem>>, vector<1x128x32xf32>
    %192 = vector.shape_cast %191 : vector<1x128x32xf32> to vector<128x32xf32>
    %cst_68 = arith.constant dense<0.000000e+00> : vector<8xf32>
    %193 = vector.multi_reduction <add>, %172, %cst_68 [1] : vector<8x32xf32> to vector<8xf32>
    %194 = vector.shape_cast %193 : vector<8xf32> to vector<8x1xf32>
    %cst_69 = arith.constant 3.200000e+01 : f32
    %195 = vector.broadcast %cst_69 : f32 to vector<8x1xf32>
    %196 = arith.divf %194, %195 : vector<8x1xf32>
    %197 = vector.broadcast %196 : vector<8x1xf32> to vector<8x32xf32>
    %198 = arith.subf %172, %197 : vector<8x32xf32>
    %199 = arith.mulf %198, %198 : vector<8x32xf32>
    %cst_70 = arith.constant dense<0.000000e+00> : vector<8xf32>
    %200 = vector.multi_reduction <add>, %199, %cst_70 [1] : vector<8x32xf32> to vector<8xf32>
    %201 = vector.shape_cast %200 : vector<8xf32> to vector<8x1xf32>
    %cst_71 = arith.constant 3.200000e+01 : f32
    %202 = vector.broadcast %cst_71 : f32 to vector<8x1xf32>
    %203 = arith.divf %201, %202 : vector<8x1xf32>
    %204 = vector.broadcast %196 : vector<8x1xf32> to vector<8x32xf32>
    %205 = arith.subf %172, %204 : vector<8x32xf32>
    %cst_72 = arith.constant 9.99999974E-6 : f32
    %206 = vector.broadcast %cst_72 : f32 to vector<8x1xf32>
    %207 = arith.addf %203, %206 : vector<8x1xf32>
    %208 = math.rsqrt %207 : vector<8x1xf32>
    %209 = vector.broadcast %208 : vector<8x1xf32> to vector<8x32xf32>
    %210 = arith.mulf %205, %209 : vector<8x32xf32>
    %211 = vector.broadcast %175 : vector<1x32xf32> to vector<8x32xf32>
    %212 = arith.mulf %210, %211 : vector<8x32xf32>
    %213 = vector.broadcast %176 : vector<1x32xf32> to vector<8x32xf32>
    %214 = arith.addf %212, %213 : vector<8x32xf32>
    %cst_73 = arith.constant dense<0.000000e+00> : vector<8x96xf32>
    %215 = tpu.matmul %214, %186, %cst_73 {dimension_numbers = #tpu.dot_dimension_numbers<[1], [0], [0], [1], [0, 0, 1, 1], [], []>} : vector<8x32xf32>, vector<32x96xf32>, vector<8x96xf32> -> vector<8x96xf32>
    %216 = vector.extract_strided_slice %215 {offsets = [0, 0], sizes = [8, 32], strides = [1, 1]} : vector<8x96xf32> to vector<8x32xf32>
    %217 = vector.broadcast %181 : vector<1x32xf32> to vector<8x32xf32>
    %218 = arith.addf %216, %217 : vector<8x32xf32>
    %219 = vector.extract_strided_slice %215 {offsets = [0, 32], sizes = [8, 32], strides = [1, 1]} : vector<8x96xf32> to vector<8x32xf32>
    %220 = vector.broadcast %182 : vector<1x32xf32> to vector<8x32xf32>
    %221 = arith.addf %219, %220 : vector<8x32xf32>
    %222 = vector.extract_strided_slice %215 {offsets = [0, 64], sizes = [8, 32], strides = [1, 1]} : vector<8x96xf32> to vector<8x32xf32>
    %223 = vector.broadcast %183 : vector<1x32xf32> to vector<8x32xf32>
    %224 = arith.addf %222, %223 : vector<8x32xf32>
    %cst_74 = arith.constant 0.000000e+00 : f32
    %225 = vector.broadcast %cst_74 : f32 to vector<8x32xf32>
    %226 = vector.extract_strided_slice %218 {offsets = [0, 0], sizes = [8, 8], strides = [1, 1]} : vector<8x32xf32> to vector<8x8xf32>
    %227 = vector.extract_strided_slice %221 {offsets = [0, 0], sizes = [8, 8], strides = [1, 1]} : vector<8x32xf32> to vector<8x8xf32>
    %cst_75 = arith.constant dense<0.000000e+00> : vector<8x8xf32>
    %228 = tpu.matmul %226, %227, %cst_75 {dimension_numbers = #tpu.dot_dimension_numbers<[1], [1], [0], [0], [0, 0, 1, 0], [], []>} : vector<8x8xf32>, vector<8x8xf32>, vector<8x8xf32> -> vector<8x8xf32>
    %229 = arith.addf %228, %7 : vector<8x8xf32>
    %cst_76 = arith.constant dense<0xFF800000> : vector<8xf32>
    %230 = vector.multi_reduction <maximumf>, %229, %cst_76 [1] : vector<8x8xf32> to vector<8xf32>
    %231 = vector.shape_cast %230 : vector<8xf32> to vector<8x1xf32>
    %232 = vector.broadcast %231 : vector<8x1xf32> to vector<8x8xf32>
    %233 = arith.subf %229, %232 : vector<8x8xf32>
    %234 = math.exp %233 : vector<8x8xf32>
    %cst_77 = arith.constant dense<0.000000e+00> : vector<8xf32>
    %235 = vector.multi_reduction <add>, %234, %cst_77 [1] : vector<8x8xf32> to vector<8xf32>
    %236 = vector.shape_cast %235 : vector<8xf32> to vector<8x1xf32>
    %237 = vector.broadcast %236 : vector<8x1xf32> to vector<8x8xf32>
    %238 = arith.divf %234, %237 : vector<8x8xf32>
    %239 = vector.extract_strided_slice %224 {offsets = [0, 0], sizes = [8, 8], strides = [1, 1]} : vector<8x32xf32> to vector<8x8xf32>
    %cst_78 = arith.constant dense<0.000000e+00> : vector<8x8xf32>
    %240 = tpu.matmul %238, %239, %cst_78 {dimension_numbers = #tpu.dot_dimension_numbers<[1], [0], [0], [1], [0, 0, 1, 1], [], []>} : vector<8x8xf32>, vector<8x8xf32>, vector<8x8xf32> -> vector<8x8xf32>
    %241 = vector.extract_strided_slice %188 {offsets = [0, 0], sizes = [8, 32], strides = [1, 1]} : vector<32x32xf32> to vector<8x32xf32>
    %cst_79 = arith.constant dense<0.000000e+00> : vector<8x32xf32>
    %242 = tpu.matmul %240, %241, %cst_79 {dimension_numbers = #tpu.dot_dimension_numbers<[1], [0], [0], [1], [0, 0, 1, 1], [], []>} : vector<8x8xf32>, vector<8x32xf32>, vector<8x32xf32> -> vector<8x32xf32>
    %243 = arith.addf %225, %242 : vector<8x32xf32>
    %244 = vector.extract_strided_slice %218 {offsets = [0, 8], sizes = [8, 8], strides = [1, 1]} : vector<8x32xf32> to vector<8x8xf32>
    %245 = vector.extract_strided_slice %221 {offsets = [0, 8], sizes = [8, 8], strides = [1, 1]} : vector<8x32xf32> to vector<8x8xf32>
    %cst_80 = arith.constant dense<0.000000e+00> : vector<8x8xf32>
    %246 = tpu.matmul %244, %245, %cst_80 {dimension_numbers = #tpu.dot_dimension_numbers<[1], [1], [0], [0], [0, 0, 1, 0], [], []>} : vector<8x8xf32>, vector<8x8xf32>, vector<8x8xf32> -> vector<8x8xf32>
    %247 = arith.addf %246, %7 : vector<8x8xf32>
    %cst_81 = arith.constant dense<0xFF800000> : vector<8xf32>
    %248 = vector.multi_reduction <maximumf>, %247, %cst_81 [1] : vector<8x8xf32> to vector<8xf32>
    %249 = vector.shape_cast %248 : vector<8xf32> to vector<8x1xf32>
    %250 = vector.broadcast %249 : vector<8x1xf32> to vector<8x8xf32>
    %251 = arith.subf %247, %250 : vector<8x8xf32>
    %252 = math.exp %251 : vector<8x8xf32>
    %cst_82 = arith.constant dense<0.000000e+00> : vector<8xf32>
    %253 = vector.multi_reduction <add>, %252, %cst_82 [1] : vector<8x8xf32> to vector<8xf32>
    %254 = vector.shape_cast %253 : vector<8xf32> to vector<8x1xf32>
    %255 = vector.broadcast %254 : vector<8x1xf32> to vector<8x8xf32>
    %256 = arith.divf %252, %255 : vector<8x8xf32>
    %257 = vector.extract_strided_slice %224 {offsets = [0, 8], sizes = [8, 8], strides = [1, 1]} : vector<8x32xf32> to vector<8x8xf32>
    %cst_83 = arith.constant dense<0.000000e+00> : vector<8x8xf32>
    %258 = tpu.matmul %256, %257, %cst_83 {dimension_numbers = #tpu.dot_dimension_numbers<[1], [0], [0], [1], [0, 0, 1, 1], [], []>} : vector<8x8xf32>, vector<8x8xf32>, vector<8x8xf32> -> vector<8x8xf32>
    %259 = vector.extract_strided_slice %188 {offsets = [8, 0], sizes = [8, 32], strides = [1, 1]} : vector<32x32xf32> to vector<8x32xf32>
    %cst_84 = arith.constant dense<0.000000e+00> : vector<8x32xf32>
    %260 = tpu.matmul %258, %259, %cst_84 {dimension_numbers = #tpu.dot_dimension_numbers<[1], [0], [0], [1], [0, 0, 1, 1], [], []>} : vector<8x8xf32>, vector<8x32xf32>, vector<8x32xf32> -> vector<8x32xf32>
    %261 = arith.addf %243, %260 : vector<8x32xf32>
    %262 = vector.extract_strided_slice %218 {offsets = [0, 16], sizes = [8, 8], strides = [1, 1]} : vector<8x32xf32> to vector<8x8xf32>
    %263 = vector.extract_strided_slice %221 {offsets = [0, 16], sizes = [8, 8], strides = [1, 1]} : vector<8x32xf32> to vector<8x8xf32>
    %cst_85 = arith.constant dense<0.000000e+00> : vector<8x8xf32>
    %264 = tpu.matmul %262, %263, %cst_85 {dimension_numbers = #tpu.dot_dimension_numbers<[1], [1], [0], [0], [0, 0, 1, 0], [], []>} : vector<8x8xf32>, vector<8x8xf32>, vector<8x8xf32> -> vector<8x8xf32>
    %265 = arith.addf %264, %7 : vector<8x8xf32>
    %cst_86 = arith.constant dense<0xFF800000> : vector<8xf32>
    %266 = vector.multi_reduction <maximumf>, %265, %cst_86 [1] : vector<8x8xf32> to vector<8xf32>
    %267 = vector.shape_cast %266 : vector<8xf32> to vector<8x1xf32>
    %268 = vector.broadcast %267 : vector<8x1xf32> to vector<8x8xf32>
    %269 = arith.subf %265, %268 : vector<8x8xf32>
    %270 = math.exp %269 : vector<8x8xf32>
    %cst_87 = arith.constant dense<0.000000e+00> : vector<8xf32>
    %271 = vector.multi_reduction <add>, %270, %cst_87 [1] : vector<8x8xf32> to vector<8xf32>
    %272 = vector.shape_cast %271 : vector<8xf32> to vector<8x1xf32>
    %273 = vector.broadcast %272 : vector<8x1xf32> to vector<8x8xf32>
    %274 = arith.divf %270, %273 : vector<8x8xf32>
    %275 = vector.extract_strided_slice %224 {offsets = [0, 16], sizes = [8, 8], strides = [1, 1]} : vector<8x32xf32> to vector<8x8xf32>
    %cst_88 = arith.constant dense<0.000000e+00> : vector<8x8xf32>
    %276 = tpu.matmul %274, %275, %cst_88 {dimension_numbers = #tpu.dot_dimension_numbers<[1], [0], [0], [1], [0, 0, 1, 1], [], []>} : vector<8x8xf32>, vector<8x8xf32>, vector<8x8xf32> -> vector<8x8xf32>
    %277 = vector.extract_strided_slice %188 {offsets = [16, 0], sizes = [8, 32], strides = [1, 1]} : vector<32x32xf32> to vector<8x32xf32>
    %cst_89 = arith.constant dense<0.000000e+00> : vector<8x32xf32>
    %278 = tpu.matmul %276, %277, %cst_89 {dimension_numbers = #tpu.dot_dimension_numbers<[1], [0], [0], [1], [0, 0, 1, 1], [], []>} : vector<8x8xf32>, vector<8x32xf32>, vector<8x32xf32> -> vector<8x32xf32>
    %279 = arith.addf %261, %278 : vector<8x32xf32>
    %280 = vector.extract_strided_slice %218 {offsets = [0, 24], sizes = [8, 8], strides = [1, 1]} : vector<8x32xf32> to vector<8x8xf32>
    %281 = vector.extract_strided_slice %221 {offsets = [0, 24], sizes = [8, 8], strides = [1, 1]} : vector<8x32xf32> to vector<8x8xf32>
    %cst_90 = arith.constant dense<0.000000e+00> : vector<8x8xf32>
    %282 = tpu.matmul %280, %281, %cst_90 {dimension_numbers = #tpu.dot_dimension_numbers<[1], [1], [0], [0], [0, 0, 1, 0], [], []>} : vector<8x8xf32>, vector<8x8xf32>, vector<8x8xf32> -> vector<8x8xf32>
    %283 = arith.addf %282, %7 : vector<8x8xf32>
    %cst_91 = arith.constant dense<0xFF800000> : vector<8xf32>
    %284 = vector.multi_reduction <maximumf>, %283, %cst_91 [1] : vector<8x8xf32> to vector<8xf32>
    %285 = vector.shape_cast %284 : vector<8xf32> to vector<8x1xf32>
    %286 = vector.broadcast %285 : vector<8x1xf32> to vector<8x8xf32>
    %287 = arith.subf %283, %286 : vector<8x8xf32>
    %288 = math.exp %287 : vector<8x8xf32>
    %cst_92 = arith.constant dense<0.000000e+00> : vector<8xf32>
    %289 = vector.multi_reduction <add>, %288, %cst_92 [1] : vector<8x8xf32> to vector<8xf32>
    %290 = vector.shape_cast %289 : vector<8xf32> to vector<8x1xf32>
    %291 = vector.broadcast %290 : vector<8x1xf32> to vector<8x8xf32>
    %292 = arith.divf %288, %291 : vector<8x8xf32>
    %293 = vector.extract_strided_slice %224 {offsets = [0, 24], sizes = [8, 8], strides = [1, 1]} : vector<8x32xf32> to vector<8x8xf32>
    %cst_93 = arith.constant dense<0.000000e+00> : vector<8x8xf32>
    %294 = tpu.matmul %292, %293, %cst_93 {dimension_numbers = #tpu.dot_dimension_numbers<[1], [0], [0], [1], [0, 0, 1, 1], [], []>} : vector<8x8xf32>, vector<8x8xf32>, vector<8x8xf32> -> vector<8x8xf32>
    %295 = vector.extract_strided_slice %188 {offsets = [24, 0], sizes = [8, 32], strides = [1, 1]} : vector<32x32xf32> to vector<8x32xf32>
    %cst_94 = arith.constant dense<0.000000e+00> : vector<8x32xf32>
    %296 = tpu.matmul %294, %295, %cst_94 {dimension_numbers = #tpu.dot_dimension_numbers<[1], [0], [0], [1], [0, 0, 1, 1], [], []>} : vector<8x8xf32>, vector<8x32xf32>, vector<8x32xf32> -> vector<8x32xf32>
    %297 = arith.addf %279, %296 : vector<8x32xf32>
    %298 = arith.addf %172, %297 : vector<8x32xf32>
    %299 = vector.broadcast %179 : vector<1x32xf32> to vector<8x32xf32>
    %300 = arith.addf %298, %299 : vector<8x32xf32>
    %cst_95 = arith.constant dense<0.000000e+00> : vector<8xf32>
    %301 = vector.multi_reduction <add>, %300, %cst_95 [1] : vector<8x32xf32> to vector<8xf32>
    %302 = vector.shape_cast %301 : vector<8xf32> to vector<8x1xf32>
    %cst_96 = arith.constant 3.200000e+01 : f32
    %303 = vector.broadcast %cst_96 : f32 to vector<8x1xf32>
    %304 = arith.divf %302, %303 : vector<8x1xf32>
    %305 = vector.broadcast %304 : vector<8x1xf32> to vector<8x32xf32>
    %306 = arith.subf %300, %305 : vector<8x32xf32>
    %307 = arith.mulf %306, %306 : vector<8x32xf32>
    %cst_97 = arith.constant dense<0.000000e+00> : vector<8xf32>
    %308 = vector.multi_reduction <add>, %307, %cst_97 [1] : vector<8x32xf32> to vector<8xf32>
    %309 = vector.shape_cast %308 : vector<8xf32> to vector<8x1xf32>
    %cst_98 = arith.constant 3.200000e+01 : f32
    %310 = vector.broadcast %cst_98 : f32 to vector<8x1xf32>
    %311 = arith.divf %309, %310 : vector<8x1xf32>
    %312 = vector.broadcast %304 : vector<8x1xf32> to vector<8x32xf32>
    %313 = arith.subf %300, %312 : vector<8x32xf32>
    %cst_99 = arith.constant 9.99999974E-6 : f32
    %314 = vector.broadcast %cst_99 : f32 to vector<8x1xf32>
    %315 = arith.addf %311, %314 : vector<8x1xf32>
    %316 = math.rsqrt %315 : vector<8x1xf32>
    %317 = vector.broadcast %316 : vector<8x1xf32> to vector<8x32xf32>
    %318 = arith.mulf %313, %317 : vector<8x32xf32>
    %319 = vector.broadcast %177 : vector<1x32xf32> to vector<8x32xf32>
    %320 = arith.mulf %318, %319 : vector<8x32xf32>
    %321 = vector.broadcast %178 : vector<1x32xf32> to vector<8x32xf32>
    %322 = arith.addf %320, %321 : vector<8x32xf32>
    %cst_100 = arith.constant dense<0.000000e+00> : vector<8x128xf32>
    %323 = tpu.matmul %322, %190, %cst_100 {dimension_numbers = #tpu.dot_dimension_numbers<[1], [0], [0], [1], [0, 0, 1, 1], [], []>} : vector<8x32xf32>, vector<32x128xf32>, vector<8x128xf32> -> vector<8x128xf32>
    %324 = vector.broadcast %184 : vector<1x128xf32> to vector<8x128xf32>
    %325 = arith.addf %323, %324 : vector<8x128xf32>
    %cst_101 = arith.constant 1.702000e+00 : f32
    %326 = vector.broadcast %cst_101 : f32 to vector<8x128xf32>
    %327 = arith.mulf %326, %325 : vector<8x128xf32>
    %328 = arith.negf %327 : vector<8x128xf32>
    %329 = math.exp %328 : vector<8x128xf32>
    %cst_102 = arith.constant 1.000000e+00 : f32
    %330 = vector.broadcast %cst_102 : f32 to vector<8x128xf32>
    %331 = arith.addf %330, %329 : vector<8x128xf32>
    %332 = arith.divf %330, %331 : vector<8x128xf32>
    %333 = arith.mulf %325, %332 : vector<8x128xf32>
    %cst_103 = arith.constant dense<0.000000e+00> : vector<8x32xf32>
    %334 = tpu.matmul %333, %192, %cst_103 {dimension_numbers = #tpu.dot_dimension_numbers<[1], [0], [0], [1], [0, 0, 1, 1], [], []>} : vector<8x128xf32>, vector<128x32xf32>, vector<8x32xf32> -> vector<8x32xf32>
    %335 = arith.addf %300, %334 : vector<8x32xf32>
    %336 = vector.broadcast %180 : vector<1x32xf32> to vector<8x32xf32>
    %337 = arith.addf %335, %336 : vector<8x32xf32>
    %c0_104 = arith.constant 0 : index
    %c0_105 = arith.constant 0 : index
    %338 = vector.load %arg11[%c0_104, %c0_105] : memref<8x32xf32, #tpu.memory_space<vmem>>, vector<8x32xf32>
    tpu.vector_store %arg11[%c0_104, %c0_105], %337 {strides = array<i32>} : memref<8x32xf32, #tpu.memory_space<vmem>>, vector<8x32xf32>,
    %339 = arith.index_cast %arg0 : i32 to index
    %340 = memref.load %arg1[%339] : memref<2xi32, #tpu.memory_space<smem>>
    %341 = arith.index_cast %340 : i32 to index
    %c0_106 = arith.constant 0 : index
    %342 = vector.load %arg11[%341, %c0_106] : memref<8x32xf32, #tpu.memory_space<vmem>>, vector<1x32xf32>
    %c0_107 = arith.constant 0 : index
    %c0_108 = arith.constant 0 : index
    %343 = vector.load %arg8[%c0_107, %c0_108] : memref<2x32xf32, #tpu.memory_space<vmem>>, vector<1x32xf32>
    %c1_109 = arith.constant 1 : index
    %c0_110 = arith.constant 0 : index
    %344 = vector.load %arg8[%c1_109, %c0_110] : memref<2x32xf32, #tpu.memory_space<vmem>>, vector<1x32xf32>
    %cst_111 = arith.constant dense<0.000000e+00> : vector<1xf32>
    %345 = vector.multi_reduction <add>, %342, %cst_111 [1] : vector<1x32xf32> to vector<1xf32>
    %346 = vector.shape_cast %345 : vector<1xf32> to vector<1x1xf32>
    %cst_112 = arith.constant 3.200000e+01 : f32
    %347 = vector.broadcast %cst_112 : f32 to vector<1x1xf32>
    %348 = arith.divf %346, %347 : vector<1x1xf32>
    %349 = vector.broadcast %348 : vector<1x1xf32> to vector<1x32xf32>
    %350 = arith.subf %342, %349 : vector<1x32xf32>
    %351 = arith.mulf %350, %350 : vector<1x32xf32>
    %cst_113 = arith.constant dense<0.000000e+00> : vector<1xf32>
    %352 = vector.multi_reduction <add>, %351, %cst_113 [1] : vector<1x32xf32> to vector<1xf32>
    %353 = vector.shape_cast %352 : vector<1xf32> to vector<1x1xf32>
    %cst_114 = arith.constant 3.200000e+01 : f32
    %354 = vector.broadcast %cst_114 : f32 to vector<1x1xf32>
    %355 = arith.divf %353, %354 : vector<1x1xf32>
    %356 = vector.broadcast %348 : vector<1x1xf32> to vector<1x32xf32>
    %357 = arith.subf %342, %356 : vector<1x32xf32>
    %cst_115 = arith.constant 9.99999974E-6 : f32
    %358 = vector.broadcast %cst_115 : f32 to vector<1x1xf32>
    %359 = arith.addf %355, %358 : vector<1x1xf32>
    %360 = math.rsqrt %359 : vector<1x1xf32>
    %361 = vector.broadcast %360 : vector<1x1xf32> to vector<1x32xf32>
    %362 = arith.mulf %357, %361 : vector<1x32xf32>
    %363 = arith.mulf %362, %343 : vector<1x32xf32>
    %364 = arith.addf %363, %344 : vector<1x32xf32>
    %c0_116 = arith.constant 0 : index
    %c0_117 = arith.constant 0 : index
    %365 = vector.load %arg9[%c0_116, %c0_117] : memref<32x32xf32, #tpu.memory_space<vmem>>, vector<32x32xf32>
    %cst_118 = arith.constant dense<0.000000e+00> : vector<1x32xf32>
    %366 = tpu.matmul %364, %365, %cst_118 {dimension_numbers = #tpu.dot_dimension_numbers<[1], [0], [0], [1], [0, 0, 1, 1], [], []>} : vector<1x32xf32>, vector<32x32xf32>, vector<1x32xf32> -> vector<1x32xf32>
    %c0_119 = arith.constant 0 : index
    %c0_120 = arith.constant 0 : index
    %c0_121 = arith.constant 0 : index
    %367 = vector.load %arg10[%c0_119, %c0_120, %c0_121] : memref<1x1x32xf32, #tpu.memory_space<vmem>>, vector<1x1x32xf32>
    %368 = vector.shape_cast %367 : vector<1x1x32xf32> to vector<1x32xf32>
    %369 = vector.shape_cast %366 : vector<1x32xf32> to vector<1x1x32xf32>
    tpu.vector_store %arg10[%c0_119, %c0_120, %c0_121], %369 {strides = array<i32>} : memref<1x1x32xf32, #tpu.memory_space<vmem>>, vector<1x1x32xf32>,
    return
  }
  func.func @transform_0(%arg0: i32, %arg1: memref<2xi32, #tpu.memory_space<smem>>) -> (i32, i32, i32) {
    %c0_i32 = arith.constant 0 : i32
    %c0_i32_0 = arith.constant 0 : i32
    %c0_i32_1 = arith.constant 0 : i32
    return %arg0, %c0_i32, %c0_i32_0 : i32, i32, i32
  }
  func.func @transform_1(%arg0: i32, %arg1: memref<2xi32, #tpu.memory_space<smem>>) -> (i32, i32, i32) {
    %c0_i32 = arith.constant 0 : i32
    %c0_i32_0 = arith.constant 0 : i32
    %c0_i32_1 = arith.constant 0 : i32
    %c0_i32_2 = arith.constant 0 : i32
    return %c0_i32, %c0_i32_0, %c0_i32_1 : i32, i32, i32
  }
  func.func @transform_2(%arg0: i32, %arg1: memref<2xi32, #tpu.memory_space<smem>>) -> (i32, i32, i32) {
    %c0_i32 = arith.constant 0 : i32
    %c0_i32_0 = arith.constant 0 : i32
    %c0_i32_1 = arith.constant 0 : i32
    %c0_i32_2 = arith.constant 0 : i32
    return %c0_i32, %c0_i32_0, %c0_i32_1 : i32, i32, i32
  }
  func.func @transform_3(%arg0: i32, %arg1: memref<2xi32, #tpu.memory_space<smem>>) -> (i32, i32, i32) {
    %c0_i32 = arith.constant 0 : i32
    %c0_i32_0 = arith.constant 0 : i32
    %c0_i32_1 = arith.constant 0 : i32
    %c0_i32_2 = arith.constant 0 : i32
    return %c0_i32, %c0_i32_0, %c0_i32_1 : i32, i32, i32
  }
  func.func @transform_4(%arg0: i32, %arg1: memref<2xi32, #tpu.memory_space<smem>>) -> (i32, i32, i32) {
    %c0_i32 = arith.constant 0 : i32
    %c0_i32_0 = arith.constant 0 : i32
    %c0_i32_1 = arith.constant 0 : i32
    %c0_i32_2 = arith.constant 0 : i32
    return %c0_i32, %c0_i32_0, %c0_i32_1 : i32, i32, i32
  }
  func.func @transform_5(%arg0: i32, %arg1: memref<2xi32, #tpu.memory_space<smem>>) -> (i32, i32, i32) {
    %c0_i32 = arith.constant 0 : i32
    %c0_i32_0 = arith.constant 0 : i32
    %c0_i32_1 = arith.constant 0 : i32
    %c0_i32_2 = arith.constant 0 : i32
    return %c0_i32, %c0_i32_0, %c0_i32_1 : i32, i32, i32
  }
  func.func @transform_6(%arg0: i32, %arg1: memref<2xi32, #tpu.memory_space<smem>>) -> (i32, i32) {
    %c0_i32 = arith.constant 0 : i32
    %c0_i32_0 = arith.constant 0 : i32
    %c0_i32_1 = arith.constant 0 : i32
    return %c0_i32, %c0_i32_0 : i32, i32
  }
  func.func @transform_7(%arg0: i32, %arg1: memref<2xi32, #tpu.memory_space<smem>>) -> (i32, i32) {
    %c0_i32 = arith.constant 0 : i32
    %c0_i32_0 = arith.constant 0 : i32
    %c0_i32_1 = arith.constant 0 : i32
    return %c0_i32, %c0_i32_0 : i32, i32
  }
  func.func @transform_8(%arg0: i32, %arg1: memref<2xi32, #tpu.memory_space<smem>>) -> (i32, i32, i32) {
    %c0_i32 = arith.constant 0 : i32
    %c0_i32_0 = arith.constant 0 : i32
    %c0_i32_1 = arith.constant 0 : i32
    return %arg0, %c0_i32, %c0_i32_0 : i32, i32, i32
  }
}

</mosaic_0001>

<llo_original>
// kernel: tpu_custom_call.1
$region0: #{tpu_custom_call.1}
  #allocation0 [shape = 'u32[]', space=smem, size = 0x4, offset = 0x4, fixed_abs, tag = 'smem constant byte address 0x4 - core index']
  #allocation1 [shape = 'u32[144,128]{1,0:T(1,128)}', space=vmem, size = 0x12000, scoped, tag = 'internal scratch']
  #allocation2 [shape = 'f32[8,32]{1,0:T(8,128)}', space=vmem, size = 0x1000, scoped, tag = 'scratch operand']
  #allocation3 [shape = 's32[1]{0}', space=sflag, size = 0x4, scoped, tag = 'scoped memory for tpu_custom_call.1']
  #allocation4 [shape = 'u8[512]{0}', space=smem, size = 0x200, scoped, tag = 'prefetched SMEM operand 0']
  %s0 = inlined_call_operand.vmem [shape: s32[2], index: 0, kind: input, shape index: {}]
  %s1 = inlined_call_operand.vmem [shape: f32[2,8,32], index: 1, kind: input, shape index: {}]
  %s2 = inlined_call_operand.vmem [shape: f32[2,16,128], index: 2, kind: input, shape index: {}]
  %s3 = inlined_call_operand.vmem [shape: f32[2,32,96], index: 3, kind: input, shape index: {}]
  %s4 = inlined_call_operand.vmem [shape: f32[2,32,32], index: 4, kind: input, shape index: {}]
  %s5 = inlined_call_operand.vmem [shape: f32[2,32,128], index: 5, kind: input, shape index: {}]
  %s6 = inlined_call_operand.vmem [shape: f32[2,128,32], index: 6, kind: input, shape index: {}]
  %s7 = inlined_call_operand.vmem [shape: f32[2,32], index: 7, kind: input, shape index: {}]
  %s8 = inlined_call_operand.vmem [shape: f32[32,32], index: 8, kind: input, shape index: {}]
  %s9 = inlined_call_operand.hbm [shape: f32[2,1,32], index: 9, kind: output, shape index: {}]
  %s10 = sld [smem:[#allocation0]]
  $region65: #{tpu_custom_call.1} parent=0
    _
  %s12 = ssub.s32 1, %s10
  %s13 = scalar_select 0, %s12, %s10
  %s14 = sshll.u32 %s0, 4
  %s15 = int_to_ptr.vmem [resolvable:$true] %s14
  %17 = dma.vmem_to_smem %s15, 16, [#allocation4], [#allocation3]
  %18 = dma.done [#allocation3], 16
  %19 = sfence
  $region1: #{tpu_custom_call.1} parent=0
    #allocation5 [shape = 'u8[1024]{0}', space=vmem, size = 0x400, scoped, tag = 'output window, operand 0']
    #allocation6 [shape = 's32[2]{0}', space=sflag, size = 0x8, scoped, tag = 'scoped memory for tpu_custom_call.1']
    %20 = vsyncpa [#allocation6], 0
    %s21 = scalar_lea.sflag [#allocation6], 1
    %22 = vsyncpa %s21, 0
    loop: start=0, step=1, limit=4
    $region2: #{tpu_custom_call.1} parent=1 // loop_pre_header
      _
    $region3: #{tpu_custom_call.1} parent=1 // loop_header
      %s24 = sphi 0, %s28
      %p25 = scmp.ge.s32.totalorder %s24, 4
      %s34 = sphi 0, %s36
      %s37 = sphi 0, %s34
      %s38 = sphi 0, %s37
      %s54 = sphi 0, %s38
      %s58 = sphi 0, %s58
      %s60 = sphi 0, %s58
      %s61 = sphi 0, %s60
      %s75 = sphi 0, %s61
      %s79 = sphi 0, %s79
      %s81 = sphi 0, %s79
      %s82 = sphi 0, %s81
      %s96 = sphi 0, %s82
      %s100 = sphi 0, %s100
      %s102 = sphi 0, %s100
      %s103 = sphi 0, %s102
      %s117 = sphi 0, %s103
      %s121 = sphi 0, %s121
      %s123 = sphi 0, %s121
      %s124 = sphi 0, %s123
      %s138 = sphi 0, %s124
      %s142 = sphi 0, %s142
      %s144 = sphi 0, %s142
      %s145 = sphi 0, %s144
      %s159 = sphi 0, %s145
      %s163 = sphi 0, %s163
      %s165 = sphi 0, %s163
      %s166 = sphi 0, %s165
      %s180 = sphi 0, %s166
      %s184 = sphi 0, %s184
      %s186 = sphi 0, %s184
      %s187 = sphi 0, %s186
      %s201 = sphi 0, %s187
      %s207 = sphi 0, %s209
      %s210 = sphi 0, %s207
      %s211 = sphi 0, %s210
      %s227 = sphi 0, %s211
    $region4: #{tpu_custom_call.1} parent=1 // loop_header_branch
      %27 = sbr.rel (%p25) target = $region8
    $region5: #{tpu_custom_call.1} parent=1 // loop_body
      %s29 = ssub.s32 %s24, 1
      %s30 = ssub.s32 %s24, 2
      %s31 = sadd.s32 %s24, 1
      %s32 = ssub.s32 %s24, %s31
      %p33 = scmp.eq.s32.totalorder %s32, 0
      %s35 = sadd.s32 %s34, 1
      %s36 = scalar_select %p33, %s34, %s35
      %p39 = pneg %p33
      %p40 = scmp.eq.s32.totalorder %s24, 1
      %p41 = por %p39, %p40
      %p42 = scmp.ne.s32.totalorder %s34, %s37
      %p43 = scmp.eq.s32.totalorder %s24, 0
      %p44 = por %p42, %p43
      %p45 = scmp.ne.s32.totalorder %s34, %s37
      %p46 = scmp.eq.s32.totalorder %s29, 1
      %p47 = por %p45, %p46
      %p48 = scmp.ne.s32.totalorder %s37, %s38
      %p49 = scmp.eq.s32.totalorder %s29, 0
      %p50 = por %p48, %p49
      %p51 = scmp.ne.s32.totalorder %s37, %s38
      %p52 = scmp.eq.s32.totalorder %s30, 1
      %p53 = por %p51, %p52
      %p55 = scmp.ne.s32.totalorder %s38, %s54
      %p56 = scmp.eq.s32.totalorder %s30, 0
      %p57 = por %p55, %p56
      %s59 = sadd.s32 %s58, 1
      %p62 = scmp.eq.s32.totalorder %s24, 1
      %p63 = scmp.ne.s32.totalorder %s58, %s60
      %p64 = scmp.eq.s32.totalorder %s24, 0
      %p65 = por %p63, %p64
      %p66 = scmp.ne.s32.totalorder %s58, %s60
      %p67 = scmp.eq.s32.totalorder %s29, 1
      %p68 = por %p66, %p67
      %p69 = scmp.ne.s32.totalorder %s60, %s61
      %p70 = scmp.eq.s32.totalorder %s29, 0
      %p71 = por %p69, %p70
      %p72 = scmp.ne.s32.totalorder %s60, %s61
      %p73 = scmp.eq.s32.totalorder %s30, 1
      %p74 = por %p72, %p73
      %p76 = scmp.ne.s32.totalorder %s61, %s75
      %p77 = scmp.eq.s32.totalorder %s30, 0
      %p78 = por %p76, %p77
      %s80 = sadd.s32 %s79, 1
      %p83 = scmp.eq.s32.totalorder %s24, 1
      %p84 = scmp.ne.s32.totalorder %s79, %s81
      %p85 = scmp.eq.s32.totalorder %s24, 0
      %p86 = por %p84, %p85
      %p87 = scmp.ne.s32.totalorder %s79, %s81
      %p88 = scmp.eq.s32.totalorder %s29, 1
      %p89 = por %p87, %p88
      %p90 = scmp.ne.s32.totalorder %s81, %s82
      %p91 = scmp.eq.s32.totalorder %s29, 0
      %p92 = por %p90, %p91
      %p93 = scmp.ne.s32.totalorder %s81, %s82
      %p94 = scmp.eq.s32.totalorder %s30, 1
      %p95 = por %p93, %p94
      %p97 = scmp.ne.s32.totalorder %s82, %s96
      %p98 = scmp.eq.s32.totalorder %s30, 0
      %p99 = por %p97, %p98
      %s101 = sadd.s32 %s100, 1
      %p104 = scmp.eq.s32.totalorder %s24, 1
      %p105 = scmp.ne.s32.totalorder %s100, %s102
      %p106 = scmp.eq.s32.totalorder %s24, 0
      %p107 = por %p105, %p106
      %p108 = scmp.ne.s32.totalorder %s100, %s102
      %p109 = scmp.eq.s32.totalorder %s29, 1
      %p110 = por %p108, %p109
      %p111 = scmp.ne.s32.totalorder %s102, %s103
      %p112 = scmp.eq.s32.totalorder %s29, 0
      %p113 = por %p111, %p112
      %p114 = scmp.ne.s32.totalorder %s102, %s103
      %p115 = scmp.eq.s32.totalorder %s30, 1
      %p116 = por %p114, %p115
      %p118 = scmp.ne.s32.totalorder %s103, %s117
      %p119 = scmp.eq.s32.totalorder %s30, 0
      %p120 = por %p118, %p119
      %s122 = sadd.s32 %s121, 1
      %p125 = scmp.eq.s32.totalorder %s24, 1
      %p126 = scmp.ne.s32.totalorder %s121, %s123
      %p127 = scmp.eq.s32.totalorder %s24, 0
      %p128 = por %p126, %p127
      %p129 = scmp.ne.s32.totalorder %s121, %s123
      %p130 = scmp.eq.s32.totalorder %s29, 1
      %p131 = por %p129, %p130
      %p132 = scmp.ne.s32.totalorder %s123, %s124
      %p133 = scmp.eq.s32.totalorder %s29, 0
      %p134 = por %p132, %p133
      %p135 = scmp.ne.s32.totalorder %s123, %s124
      %p136 = scmp.eq.s32.totalorder %s30, 1
      %p137 = por %p135, %p136
      %p139 = scmp.ne.s32.totalorder %s124, %s138
      %p140 = scmp.eq.s32.totalorder %s30, 0
      %p141 = por %p139, %p140
      %s143 = sadd.s32 %s142, 1
      %p146 = scmp.eq.s32.totalorder %s24, 1
      %p147 = scmp.ne.s32.totalorder %s142, %s144
      %p148 = scmp.eq.s32.totalorder %s24, 0
      %p149 = por %p147, %p148
      %p150 = scmp.ne.s32.totalorder %s142, %s144
      %p151 = scmp.eq.s32.totalorder %s29, 1
      %p152 = por %p150, %p151
      %p153 = scmp.ne.s32.totalorder %s144, %s145
      %p154 = scmp.eq.s32.totalorder %s29, 0
      %p155 = por %p153, %p154
      %p156 = scmp.ne.s32.totalorder %s144, %s145
      %p157 = scmp.eq.s32.totalorder %s30, 1
      %p158 = por %p156, %p157
      %p160 = scmp.ne.s32.totalorder %s145, %s159
      %p161 = scmp.eq.s32.totalorder %s30, 0
      %p162 = por %p160, %p161
      %s164 = sadd.s32 %s163, 1
      %p167 = scmp.eq.s32.totalorder %s24, 1
      %p168 = scmp.ne.s32.totalorder %s163, %s165
      %p169 = scmp.eq.s32.totalorder %s24, 0
      %p170 = por %p168, %p169
      %p171 = scmp.ne.s32.totalorder %s163, %s165
      %p172 = scmp.eq.s32.totalorder %s29, 1
      %p173 = por %p171, %p172
      %p174 = scmp.ne.s32.totalorder %s165, %s166
      %p175 = scmp.eq.s32.totalorder %s29, 0
      %p176 = por %p174, %p175
      %p177 = scmp.ne.s32.totalorder %s165, %s166
      %p178 = scmp.eq.s32.totalorder %s30, 1
      %p179 = por %p177, %p178
      %p181 = scmp.ne.s32.totalorder %s166, %s180
      %p182 = scmp.eq.s32.totalorder %s30, 0
      %p183 = por %p181, %p182
      %s185 = sadd.s32 %s184, 1
      %p188 = scmp.eq.s32.totalorder %s24, 1
      %p189 = scmp.ne.s32.totalorder %s184, %s186
      %p190 = scmp.eq.s32.totalorder %s24, 0
      %p191 = por %p189, %p190
      %p192 = scmp.ne.s32.totalorder %s184, %s186
      %p193 = scmp.eq.s32.totalorder %s29, 1
      %p194 = por %p192, %p193
      %p195 = scmp.ne.s32.totalorder %s186, %s187
      %p196 = scmp.eq.s32.totalorder %s29, 0
      %p197 = por %p195, %p196
      %p198 = scmp.ne.s32.totalorder %s186, %s187
      %p199 = scmp.eq.s32.totalorder %s30, 1
      %p200 = por %p198, %p199
      %p202 = scmp.ne.s32.totalorder %s187, %s201
      %p203 = scmp.eq.s32.totalorder %s30, 0
      %p204 = por %p202, %p203
      %s205 = ssub.s32 %s24, %s31
      %p206 = scmp.eq.s32.totalorder %s205, 0
      %s208 = sadd.s32 %s207, 1
      %s209 = scalar_select %p206, %s207, %s208
      %p212 = pneg %p206
      %p213 = scmp.eq.s32.totalorder %s24, 1
      %p214 = por %p212, %p213
      %p215 = scmp.ne.s32.totalorder %s207, %s210
      %p216 = scmp.eq.s32.totalorder %s24, 0
      %p217 = por %p215, %p216
      %p218 = scmp.ne.s32.totalorder %s207, %s210
      %p219 = scmp.eq.s32.totalorder %s29, 1
      %p220 = por %p218, %p219
      %p221 = scmp.ne.s32.totalorder %s210, %s211
      %p222 = scmp.eq.s32.totalorder %s29, 0
      %p223 = por %p221, %p222
      %p224 = scmp.ne.s32.totalorder %s210, %s211
      %p225 = scmp.eq.s32.totalorder %s30, 1
      %p226 = por %p224, %p225
      %p228 = scmp.ne.s32.totalorder %s211, %s227
      %p229 = scmp.eq.s32.totalorder %s30, 0
      %p230 = por %p228, %p229
      %p231 = scmp.le.s32.totalorder 1, %s24
      %p232 = scmp.lt.s32.totalorder %s24, 3
      %p233 = pnand %p231, %p232
      %p234 = pneg %p233
      // Predicated region
      $region9: #{tpu_custom_call.1} parent=5 // pred_check
        _
      $region10: #{tpu_custom_call.1} parent=5 // pred_check_branch
        %236 = sbr.rel (%p233) target = $region12
      $region11: #{tpu_custom_call.1} parent=5 // pred_region
        %s237 = ssub.s32 %s24, 1
        // Predicated region
        $region13: #{tpu_custom_call.1} parent=11 // pred_check
          %p238 = pneg %p71
        $region14: #{tpu_custom_call.1} parent=11 // pred_check_branch
          %240 = sbr.rel (%p238) target = $region16
        $region15: #{tpu_custom_call.1} parent=11 // pred_region
          _
        $region16: #{tpu_custom_call.1} parent=11 // pred_fallthru
          _
        // Predicated region
        $region17: #{tpu_custom_call.1} parent=11 // pred_check
          %p241 = pneg %p92
        $region18: #{tpu_custom_call.1} parent=11 // pred_check_branch
          %243 = sbr.rel (%p241) target = $region20
        $region19: #{tpu_custom_call.1} parent=11 // pred_region
          _
        $region20: #{tpu_custom_call.1} parent=11 // pred_fallthru
          _
        // Predicated region
        $region21: #{tpu_custom_call.1} parent=11 // pred_check
          %p244 = pneg %p113
        $region22: #{tpu_custom_call.1} parent=11 // pred_check_branch
          %246 = sbr.rel (%p244) target = $region24
        $region23: #{tpu_custom_call.1} parent=11 // pred_region
          _
        $region24: #{tpu_custom_call.1} parent=11 // pred_fallthru
          _
        // Predicated region
        $region25: #{tpu_custom_call.1} parent=11 // pred_check
          %p247 = pneg %p134
        $region26: #{tpu_custom_call.1} parent=11 // pred_check_branch
          %249 = sbr.rel (%p247) target = $region28
        $region27: #{tpu_custom_call.1} parent=11 // pred_region
          _
        $region28: #{tpu_custom_call.1} parent=11 // pred_fallthru
          _
        // Predicated region
        $region29: #{tpu_custom_call.1} parent=11 // pred_check
          %p250 = pneg %p155
        $region30: #{tpu_custom_call.1} parent=11 // pred_check_branch
          %252 = sbr.rel (%p250) target = $region32
        $region31: #{tpu_custom_call.1} parent=11 // pred_region
          _
        $region32: #{tpu_custom_call.1} parent=11 // pred_fallthru
          _
        // Predicated region
        $region33: #{tpu_custom_call.1} parent=11 // pred_check
          %p253 = pneg %p176
        $region34: #{tpu_custom_call.1} parent=11 // pred_check_branch
          %255 = sbr.rel (%p253) target = $region36
        $region35: #{tpu_custom_call.1} parent=11 // pred_region
          _
        $region36: #{tpu_custom_call.1} parent=11 // pred_fallthru
          _
        // Predicated region
        $region37: #{tpu_custom_call.1} parent=11 // pred_check
          %p256 = pneg %p197
        $region38: #{tpu_custom_call.1} parent=11 // pred_check_branch
          %258 = sbr.rel (%p256) target = $region40
        $region39: #{tpu_custom_call.1} parent=11 // pred_region
          _
        $region40: #{tpu_custom_call.1} parent=11 // pred_fallthru
          _
      $region12: #{tpu_custom_call.1} parent=5 // pred_fallthru
        _
      %p259 = scmp.lt.s32.totalorder %s24, 2
      // Predicated region
      $region41: #{tpu_custom_call.1} parent=5 // pred_check
        %p260 = pneg %p259
      $region42: #{tpu_custom_call.1} parent=5 // pred_check_branch
        %262 = sbr.rel (%p260) target = $region44
      $region43: #{tpu_custom_call.1} parent=5 // pred_region
        // Predicated region
        $region45: #{tpu_custom_call.1} parent=43 // pred_check
          %p263 = pneg %p44
        $region46: #{tpu_custom_call.1} parent=43 // pred_check_branch
          %265 = sbr.rel (%p263) target = $region48
        $region47: #{tpu_custom_call.1} parent=43 // pred_region
          %p266 = scmp.lt.s32.totalorder %s24, 1
          %s267 = scalar_select %p266, %s24, 1
          %s268 = smul.addr %s267, 8
          %s269 = scalar_lea.vmem %s1, %s268
        $region48: #{tpu_custom_call.1} parent=43 // pred_fallthru
          _
      $region44: #{tpu_custom_call.1} parent=5 // pred_fallthru
        _
      %p270 = scmp.le.s32.totalorder 1, %s24
      %p271 = scmp.lt.s32.totalorder %s24, 3
      %p272 = pnand %p270, %p271
      %p273 = pneg %p272
      // Predicated region
      $region49: #{tpu_custom_call.1} parent=5 // pred_check
        _
      $region50: #{tpu_custom_call.1} parent=5 // pred_check_branch
        %275 = sbr.rel (%p272) target = $region52
      $region51: #{tpu_custom_call.1} parent=5 // pred_region
        %s276 = ssub.s32 %s24, 1
        %p277 = scmp.lt.s32.totalorder %s29, 1
        %s278 = scalar_select %p277, %s29, 1
        %s279 = smul.addr %s278, 8
        %s280 = scalar_lea.vmem %s1, %s279
        %p281 = pneg %p50
        %p282 = pneg %p47
        %p283 = pneg %p71
        %p284 = pneg %p68
        %p285 = pneg %p92
        %p286 = pneg %p89
        %p287 = pneg %p113
        %p288 = pneg %p110
        %p289 = pneg %p134
        %p290 = pneg %p131
        %p291 = pneg %p155
        %p292 = pneg %p152
        %p293 = pneg %p176
        %p294 = pneg %p173
        %p295 = pneg %p197
        %p296 = pneg %p194
        %p297 = pneg %p223
        %p298 = pneg %p220
        %s299 = sand.u32 %s210, 1
        %s300 = scalar_lea.sflag [#allocation6], %s299
        %s301 = sand.u32 %s210, 1
        %s302 = scalar_lea.vmem [#allocation5], %s301
        %p303 = scmp.lt.s32.totalorder %s29, 1
        %s304 = scalar_select %p303, %s29, 1
        %s305 = smul.addr %s304, 8
        %s306 = scalar_lea.vmem %s1, %s305
        %v307 = vld [vmem:[%s306] sm:$0xff]
        %v308 = vlaneseq
        %v309 = vshrl.u32 %v308, 7
        %v310 = vlaneseq
        %v311 = vand.u32 %v310, 127
        %vm312 = vcmp.le.s32.totalorder %v311, %v309
        %v313 = vsel %vm312, 0.0, -1e+30
        %v314 = vld [vmem:[%s2] sm:$0xff]
        %v315 = vld [vmem:[%s2 + $0x8] sm:$0xff]
        %v316 = vld [vmem:[%s3] sm:$0xff]
        %v317 = vld [vmem:[%s3 + $0x8] sm:$0xff]
        %v318 = vld [vmem:[%s3 + $0x10] sm:$0xff]
        %v319 = vld [vmem:[%s3 + $0x18] sm:$0xff]
        %v320 = vld [vmem:[%s4] sm:$0xff]
        %v321 = vld [vmem:[%s4 + $0x8] sm:$0xff]
        %v322 = vld [vmem:[%s4 + $0x10] sm:$0xff]
        %v323 = vld [vmem:[%s4 + $0x18] sm:$0xff]
        %v324 = vld [vmem:[%s5] sm:$0xff]
        %v325 = vld [vmem:[%s5 + $0x8] sm:$0xff]
        %v326 = vld [vmem:[%s5 + $0x10] sm:$0xff]
        %v327 = vld [vmem:[%s5 + $0x18] sm:$0xff]
        %v328 = vld [vmem:[%s6] sm:$0xff]
        %v329 = vld [vmem:[%s6 + $0x8] sm:$0xff]
        %v330 = vld [vmem:[%s6 + $0x10] sm:$0xff]
        %v331 = vld [vmem:[%s6 + $0x18] sm:$0xff]
        %v332 = vld [vmem:[%s6 + $0x20] sm:$0xff]
        %v333 = vld [vmem:[%s6 + $0x28] sm:$0xff]
        %v334 = vld [vmem:[%s6 + $0x30] sm:$0xff]
        %v335 = vld [vmem:[%s6 + $0x38] sm:$0xff]
        %v336 = vld [vmem:[%s6 + $0x40] sm:$0xff]
        %v337 = vld [vmem:[%s6 + $0x48] sm:$0xff]
        %v338 = vld [vmem:[%s6 + $0x50] sm:$0xff]
        %v339 = vld [vmem:[%s6 + $0x58] sm:$0xff]
        %v340 = vld [vmem:[%s6 + $0x60] sm:$0xff]
        %v341 = vld [vmem:[%s6 + $0x68] sm:$0xff]
        %v342 = vld [vmem:[%s6 + $0x70] sm:$0xff]
        %v343 = vld [vmem:[%s6 + $0x78] sm:$0xff]
        %vm344 = vcmask 261120
        %v345 = vsel %vm344, %v307, 0.0
        %346 = vadd.xlane.f32.xlu0 %v345
        %v347 = vpop.xlane.xlu0 %346
        %v348 = vrcp.pop 32.0
        %v349 = vmul.f32 %v347, %v348
        %v350 = vsub.f32 %v307, %v349
        %v351 = vmul.f32 %v350, %v350
        %v352 = vsel %vm344, %v351, 0.0
        %353 = vadd.xlane.f32.xlu0 %v352
        %v354 = vpop.xlane.xlu0 %353
        %v355 = vmul.f32 %v354, %v348
        %v356 = vadd.f32 %v355, 1e-05
        %v357 = vrsqrt.pop %v356
        %v358 = vmul.f32 %v350, %v357
        %v359 = vlaneseq
        %v360 = vshrl.u32 %v359, 7
        %v361 = vsub.s32 0, %v360
        %v362 = vrot.slane %v314, %v361
        %v363 = vmul.f32 %v358, %v362
        %v364 = vlaneseq
        %v365 = vshrl.u32 %v364, 7
        %v366 = vsub.s32 1, %v365
        %v367 = vrot.slane %v314, %v366
        %v368 = vadd.f32 %v363, %v367
        %v370 = vsel %vm344, %v368, 0
        %372 = vmatprep.subr.mxu0 0.0
        %373 = vmatpush1.msra.mxu0 %v316
        %374 = vmatprep.subr.mxu0 0.0
        %375 = vmatpush1.msra.mxu0 %v317
        %376 = vmatprep.subr.mxu0 0.0
        %377 = vmatpush1.msra.mxu0 %v318
        %378 = vmatprep.subr.mxu0 0.0
        %379 = vmatpush1.msra.mxu0 %v319
        %380 = vmatprep.subr.mxu0 0.0
        %381 = vmatpush1.msra.mxu0 0.0
        %382 = vmatprep.subr.mxu0 0.0
        %383 = vmatpush1.msra.mxu0 0.0
        %384 = vmatprep.subr.mxu0 0.0
        %385 = vmatpush1.msra.mxu0 0.0
        %386 = vmatprep.subr.mxu0 0.0
        %387 = vmatpush1.msra.mxu0 0.0
        %388 = vmatprep.subr.mxu0 0.0
        %389 = vmatpush1.msra.mxu0 0.0
        %390 = vmatprep.subr.mxu0 0.0
        %391 = vmatpush1.msra.mxu0 0.0
        %392 = vmatprep.subr.mxu0 0.0
        %393 = vmatpush1.msra.mxu0 0.0
        %394 = vmatprep.subr.mxu0 0.0
        %395 = vmatpush1.msra.mxu0 0.0
        %396 = vmatprep.subr.mxu0 0.0
        %397 = vmatpush1.msra.mxu0 0.0
        %398 = vmatprep.subr.mxu0 0.0
        %399 = vmatpush1.msra.mxu0 0.0
        %400 = vmatprep.subr.mxu0 0.0
        %401 = vmatpush1.msra.mxu0 0.0
        %402 = vmatprep.subr.mxu0 0.0
        %403 = vmatpush1.msra.mxu0 0.0
        %404 = vmatprep.subr.mxu0 0.0
        %405 = vmatpush1.msra.mxu0 0.0
        %406 = vmatprep.subr.mxu0 0.0
        %407 = vmatpush1.msra.mxu0 0.0
        %408 = vmatprep.subr.mxu0 0.0
        %409 = vmatpush1.msra.mxu0 0.0
        %410 = vmatprep.subr.mxu0 0.0
        %411 = vmatpush1.msra.mxu0 0.0
        %412 = vmatprep.subr.mxu0 0.0
        %413 = vmatpush1.msra.mxu0 0.0
        %414 = vmatprep.subr.mxu0 0.0
        %415 = vmatpush1.msra.mxu0 0.0
        %416 = vmatprep.subr.mxu0 0.0
        %417 = vmatpush1.msra.mxu0 0.0
        %418 = vmatprep.subr.mxu0 0.0
        %419 = vmatpush1.msra.mxu0 0.0
        %420 = vmatprep.subr.mxu0 0.0
        %421 = vmatpush1.msra.mxu0 0.0
        %422 = vmatprep.subr.mxu0 0.0
        %423 = vmatpush1.msra.mxu0 0.0
        %424 = vmatprep.subr.mxu0 0.0
        %425 = vmatpush1.msra.mxu0 0.0
        %426 = vmatprep.subr.mxu0 0.0
        %427 = vmatpush1.msra.mxu0 0.0
        %428 = vmatprep.subr.mxu0 0.0
        %429 = vmatpush1.msra.mxu0 0.0
        %430 = vmatprep.subr.mxu0 0.0
        %431 = vmatpush1.msra.mxu0 0.0
        %432 = vmatprep.subr.mxu0 0.0
        %433 = vmatpush1.msra.mxu0 0.0
        %434 = vmatprep.subr.mxu0 0.0
        %435 = vmatpush1.msra.mxu0 0.0
        %436 = vmatprep.mubr.f32.mxu0 0.0
        %437 = vmatmul.mubr.f32.gmra.mrb[0].mxu0 %v370
        %v438 = vpop.f32.mrb[0].mxu0
        %v439 = vadd.f32 0.0, %v438
        %v440 = vpop.f32.mrb[0].mxu0
        %441 = vdwg.mxu0
        %v442 = vlaneseq
        %v443 = vshrl.u32 %v442, 7
        %v444 = vsub.s32 6, %v443
        %v445 = vrot.slane %v314, %v444
        %v446 = vadd.f32 %v439, %v445
        %v447 = vlaneseq
        %v448 = vshrl.u32 %v447, 7
        %v449 = vsub.s32 7, %v448
        %v450 = vrot.slane %v314, %v449
        %452 = vrot.lane.b32.xlu0 %v450, 32
        %v453 = vpop.permute.xlu0 %452
        %v455 = vadd.f32 %v439, %v453
        %v456 = vlaneseq
        %v457 = vshrl.u32 %v456, 7
        %v458 = vsub.s32 0, %v457
        %v459 = vrot.slane %v315, %v458
        %461 = vrot.lane.b32.xlu0 %v459, 64
        %v462 = vpop.permute.xlu0 %461
        %v464 = vadd.f32 %v439, %v462
        %466 = vrot.lane.b32.xlu0 %v455, 96
        %v467 = vpop.permute.xlu0 %466
        %vm468 = vcmask 64512
        %v470 = vsel %vm468, %v446, 0
        %v472 = vsel %vm468, %v467, 0
        %474 = vmatprep.subr.mxu0 0.0
        %475 = vmatpush1.xpose.msra.mxu0 %v472
        %476 = vmatprep.subr.mxu0 0.0
        %477 = vmatpush1.xpose.msra.mxu0 0.0
        %478 = vmatprep.subr.mxu0 0.0
        %479 = vmatpush1.xpose.msra.mxu0 0.0
        %480 = vmatprep.subr.mxu0 0.0
        %481 = vmatpush1.xpose.msra.mxu0 0.0
        %482 = vmatprep.subr.mxu0 0.0
        %483 = vmatpush1.xpose.msra.mxu0 0.0
        %484 = vmatprep.subr.mxu0 0.0
        %485 = vmatpush1.xpose.msra.mxu0 0.0
        %486 = vmatprep.subr.mxu0 0.0
        %487 = vmatpush1.xpose.msra.mxu0 0.0
        %488 = vmatprep.subr.mxu0 0.0
        %489 = vmatpush1.xpose.msra.mxu0 0.0
        %490 = vmatprep.subr.mxu0 0.0
        %491 = vmatpush1.xpose.msra.mxu0 0.0
        %492 = vmatprep.subr.mxu0 0.0
        %493 = vmatpush1.xpose.msra.mxu0 0.0
        %494 = vmatprep.subr.mxu0 0.0
        %495 = vmatpush1.xpose.msra.mxu0 0.0
        %496 = vmatprep.subr.mxu0 0.0
        %497 = vmatpush1.xpose.msra.mxu0 0.0
        %498 = vmatprep.subr.mxu0 0.0
        %499 = vmatpush1.xpose.msra.mxu0 0.0
        %500 = vmatprep.subr.mxu0 0.0
        %501 = vmatpush1.xpose.msra.mxu0 0.0
        %502 = vmatprep.subr.mxu0 0.0
        %503 = vmatpush1.xpose.msra.mxu0 0.0
        %504 = vmatprep.subr.mxu0 0.0
        %505 = vmatpush1.xpose.msra.mxu0 0.0
        %506 = vmatprep.subr.mxu0 0.0
        %507 = vmatpush1.xpose.msra.mxu0 0.0
        %508 = vmatprep.subr.mxu0 0.0
        %509 = vmatpush1.xpose.msra.mxu0 0.0
        %510 = vmatprep.subr.mxu0 0.0
        %511 = vmatpush1.xpose.msra.mxu0 0.0
        %512 = vmatprep.subr.mxu0 0.0
        %513 = vmatpush1.xpose.msra.mxu0 0.0
        %514 = vmatprep.subr.mxu0 0.0
        %515 = vmatpush1.xpose.msra.mxu0 0.0
        %516 = vmatprep.subr.mxu0 0.0
        %517 = vmatpush1.xpose.msra.mxu0 0.0
        %518 = vmatprep.subr.mxu0 0.0
        %519 = vmatpush1.xpose.msra.mxu0 0.0
        %520 = vmatprep.subr.mxu0 0.0
        %521 = vmatpush1.xpose.msra.mxu0 0.0
        %522 = vmatprep.subr.mxu0 0.0
        %523 = vmatpush1.xpose.msra.mxu0 0.0
        %524 = vmatprep.subr.mxu0 0.0
        %525 = vmatpush1.xpose.msra.mxu0 0.0
        %526 = vmatprep.subr.mxu0 0.0
        %527 = vmatpush1.xpose.msra.mxu0 0.0
        %528 = vmatprep.subr.mxu0 0.0
        %529 = vmatpush1.xpose.msra.mxu0 0.0
        %530 = vmatprep.subr.mxu0 0.0
        %531 = vmatpush1.xpose.msra.mxu0 0.0
        %532 = vmatprep.subr.mxu0 0.0
        %533 = vmatpush1.xpose.msra.mxu0 0.0
        %534 = vmatprep.subr.mxu0 0.0
        %535 = vmatpush1.xpose.msra.mxu0 0.0
        %536 = vmatprep.subr.mxu0 0.0
        %537 = vmatpush1.xpose.msra.mxu0 0.0
        %538 = vmatprep.mubr.f32.mxu0 0.0
        %539 = vmatmul.mubr.f32.gmra.mrb[0].mxu0 %v470
        %v540 = vpop.f32.mrb[0].mxu0
        %v541 = vadd.f32 %v313, %v540
        %v542 = vpop.f32.mrb[0].mxu0
        %543 = vdwg.mxu0
        %v544 = vsel %vm468, %v541, -inf
        %545 = vmax.xlane.f32.xlu0 %v544
        %v546 = vpop.xlane.xlu0 %545
        %v547 = vsub.f32 %v541, %v546
        %v548 = vmul.f32 %v547, 1.442695
        %v549 = vpow.pop %v548
        %v550 = vsel %vm468, %v549, 0.0
        %551 = vadd.xlane.f32.xlu0 %v550
        %v552 = vpop.xlane.xlu0 %551
        %v553 = vrcp.pop %v552
        %v554 = vmul.f32 %v549, %v553
        %556 = vrot.lane.b32.xlu0 %v464, 64
        %v557 = vpop.permute.xlu0 %556
        %v560 = vsel %vm468, %v554, 0
        %562 = vmatprep.subr.mxu0 0.0
        %563 = vmatpush1.msra.mxu0 %v557
        %564 = vmatprep.subr.mxu0 0.0
        %565 = vmatpush1.msra.mxu0 0.0
        %566 = vmatprep.subr.mxu0 0.0
        %567 = vmatpush1.msra.mxu0 0.0
        %568 = vmatprep.subr.mxu0 0.0
        %569 = vmatpush1.msra.mxu0 0.0
        %570 = vmatprep.subr.mxu0 0.0
        %571 = vmatpush1.msra.mxu0 0.0
        %572 = vmatprep.subr.mxu0 0.0
        %573 = vmatpush1.msra.mxu0 0.0
        %574 = vmatprep.subr.mxu0 0.0
        %575 = vmatpush1.msra.mxu0 0.0
        %576 = vmatprep.subr.mxu0 0.0
        %577 = vmatpush1.msra.mxu0 0.0
        %578 = vmatprep.subr.mxu0 0.0
        %579 = vmatpush1.msra.mxu0 0.0
        %580 = vmatprep.subr.mxu0 0.0
        %581 = vmatpush1.msra.mxu0 0.0
        %582 = vmatprep.subr.mxu0 0.0
        %583 = vmatpush1.msra.mxu0 0.0
        %584 = vmatprep.subr.mxu0 0.0
        %585 = vmatpush1.msra.mxu0 0.0
        %586 = vmatprep.subr.mxu0 0.0
        %587 = vmatpush1.msra.mxu0 0.0
        %588 = vmatprep.subr.mxu0 0.0
        %589 = vmatpush1.msra.mxu0 0.0
        %590 = vmatprep.subr.mxu0 0.0
        %591 = vmatpush1.msra.mxu0 0.0
        %592 = vmatprep.subr.mxu0 0.0
        %593 = vmatpush1.msra.mxu0 0.0
        %594 = vmatprep.subr.mxu0 0.0
        %595 = vmatpush1.msra.mxu0 0.0
        %596 = vmatprep.subr.mxu0 0.0
        %597 = vmatpush1.msra.mxu0 0.0
        %598 = vmatprep.subr.mxu0 0.0
        %599 = vmatpush1.msra.mxu0 0.0
        %600 = vmatprep.subr.mxu0 0.0
        %601 = vmatpush1.msra.mxu0 0.0
        %602 = vmatprep.subr.mxu0 0.0
        %603 = vmatpush1.msra.mxu0 0.0
        %604 = vmatprep.subr.mxu0 0.0
        %605 = vmatpush1.msra.mxu0 0.0
        %606 = vmatprep.subr.mxu0 0.0
        %607 = vmatpush1.msra.mxu0 0.0
        %608 = vmatprep.subr.mxu0 0.0
        %609 = vmatpush1.msra.mxu0 0.0
        %610 = vmatprep.subr.mxu0 0.0
        %611 = vmatpush1.msra.mxu0 0.0
        %612 = vmatprep.subr.mxu0 0.0
        %613 = vmatpush1.msra.mxu0 0.0
        %614 = vmatprep.subr.mxu0 0.0
        %615 = vmatpush1.msra.mxu0 0.0
        %616 = vmatprep.subr.mxu0 0.0
        %617 = vmatpush1.msra.mxu0 0.0
        %618 = vmatprep.subr.mxu0 0.0
        %619 = vmatpush1.msra.mxu0 0.0
        %620 = vmatprep.subr.mxu0 0.0
        %621 = vmatpush1.msra.mxu0 0.0
        %622 = vmatprep.subr.mxu0 0.0
        %623 = vmatpush1.msra.mxu0 0.0
        %624 = vmatprep.subr.mxu0 0.0
        %625 = vmatpush1.msra.mxu0 0.0
        %626 = vmatprep.mubr.f32.mxu0 0.0
        %627 = vmatmul.mubr.f32.gmra.mrb[0].mxu0 %v560
        %v628 = vpop.f32.mrb[0].mxu0
        %v629 = vadd.f32 0.0, %v628
        %v630 = vpop.f32.mrb[0].mxu0
        %631 = vdwg.mxu0
        %632 = vrot.lane.b32.xlu0 %v446, 120
        %v633 = vpop.permute.xlu0 %632
        %634 = vrot.lane.b32.xlu0 %v455, 88
        %v635 = vpop.permute.xlu0 %634
        %v636 = vsel %vm468, %v633, 0
        %v638 = vsel %vm468, %v635, 0
        %640 = vmatprep.subr.mxu0 0.0
        %641 = vmatpush1.xpose.msra.mxu0 %v638
        %642 = vmatprep.subr.mxu0 0.0
        %643 = vmatpush1.xpose.msra.mxu0 0.0
        %644 = vmatprep.subr.mxu0 0.0
        %645 = vmatpush1.xpose.msra.mxu0 0.0
        %646 = vmatprep.subr.mxu0 0.0
        %647 = vmatpush1.xpose.msra.mxu0 0.0
        %648 = vmatprep.subr.mxu0 0.0
        %649 = vmatpush1.xpose.msra.mxu0 0.0
        %650 = vmatprep.subr.mxu0 0.0
        %651 = vmatpush1.xpose.msra.mxu0 0.0
        %652 = vmatprep.subr.mxu0 0.0
        %653 = vmatpush1.xpose.msra.mxu0 0.0
        %654 = vmatprep.subr.mxu0 0.0
        %655 = vmatpush1.xpose.msra.mxu0 0.0
        %656 = vmatprep.subr.mxu0 0.0
        %657 = vmatpush1.xpose.msra.mxu0 0.0
        %658 = vmatprep.subr.mxu0 0.0
        %659 = vmatpush1.xpose.msra.mxu0 0.0
        %660 = vmatprep.subr.mxu0 0.0
        %661 = vmatpush1.xpose.msra.mxu0 0.0
        %662 = vmatprep.subr.mxu0 0.0
        %663 = vmatpush1.xpose.msra.mxu0 0.0
        %664 = vmatprep.subr.mxu0 0.0
        %665 = vmatpush1.xpose.msra.mxu0 0.0
        %666 = vmatprep.subr.mxu0 0.0
        %667 = vmatpush1.xpose.msra.mxu0 0.0
        %668 = vmatprep.subr.mxu0 0.0
        %669 = vmatpush1.xpose.msra.mxu0 0.0
        %670 = vmatprep.subr.mxu0 0.0
        %671 = vmatpush1.xpose.msra.mxu0 0.0
        %672 = vmatprep.subr.mxu0 0.0
        %673 = vmatpush1.xpose.msra.mxu0 0.0
        %674 = vmatprep.subr.mxu0 0.0
        %675 = vmatpush1.xpose.msra.mxu0 0.0
        %676 = vmatprep.subr.mxu0 0.0
        %677 = vmatpush1.xpose.msra.mxu0 0.0
        %678 = vmatprep.subr.mxu0 0.0
        %679 = vmatpush1.xpose.msra.mxu0 0.0
        %680 = vmatprep.subr.mxu0 0.0
        %681 = vmatpush1.xpose.msra.mxu0 0.0
        %682 = vmatprep.subr.mxu0 0.0
        %683 = vmatpush1.xpose.msra.mxu0 0.0
        %684 = vmatprep.subr.mxu0 0.0
        %685 = vmatpush1.xpose.msra.mxu0 0.0
        %686 = vmatprep.subr.mxu0 0.0
        %687 = vmatpush1.xpose.msra.mxu0 0.0
        %688 = vmatprep.subr.mxu0 0.0
        %689 = vmatpush1.xpose.msra.mxu0 0.0
        %690 = vmatprep.subr.mxu0 0.0
        %691 = vmatpush1.xpose.msra.mxu0 0.0
        %692 = vmatprep.subr.mxu0 0.0
        %693 = vmatpush1.xpose.msra.mxu0 0.0
        %694 = vmatprep.subr.mxu0 0.0
        %695 = vmatpush1.xpose.msra.mxu0 0.0
        %696 = vmatprep.subr.mxu0 0.0
        %697 = vmatpush1.xpose.msra.mxu0 0.0
        %698 = vmatprep.subr.mxu0 0.0
        %699 = vmatpush1.xpose.msra.mxu0 0.0
        %700 = vmatprep.subr.mxu0 0.0
        %701 = vmatpush1.xpose.msra.mxu0 0.0
        %702 = vmatprep.subr.mxu0 0.0
        %703 = vmatpush1.xpose.msra.mxu0 0.0
        %704 = vmatprep.mubr.f32.mxu0 0.0
        %705 = vmatmul.mubr.f32.gmra.mrb[0].mxu0 %v636
        %v706 = vpop.f32.mrb[0].mxu0
        %v707 = vadd.f32 %v313, %v706
        %v708 = vpop.f32.mrb[0].mxu0
        %709 = vdwg.mxu0
        %v710 = vsel %vm468, %v707, -inf
        %711 = vmax.xlane.f32.xlu0 %v710
        %v712 = vpop.xlane.xlu0 %711
        %v713 = vsub.f32 %v707, %v712
        %v714 = vmul.f32 %v713, 1.442695
        %v715 = vpow.pop %v714
        %v716 = vsel %vm468, %v715, 0.0
        %717 = vadd.xlane.f32.xlu0 %v716
        %v718 = vpop.xlane.xlu0 %717
        %v719 = vrcp.pop %v718
        %v720 = vmul.f32 %v715, %v719
        %721 = vrot.lane.b32.xlu0 %v464, 56
        %v722 = vpop.permute.xlu0 %721
        %v725 = vsel %vm468, %v720, 0
        %727 = vmatprep.subr.mxu0 0.0
        %728 = vmatpush1.msra.mxu0 %v722
        %729 = vmatprep.subr.mxu0 0.0
        %730 = vmatpush1.msra.mxu0 0.0
        %731 = vmatprep.subr.mxu0 0.0
        %732 = vmatpush1.msra.mxu0 0.0
        %733 = vmatprep.subr.mxu0 0.0
        %734 = vmatpush1.msra.mxu0 0.0
        %735 = vmatprep.subr.mxu0 0.0
        %736 = vmatpush1.msra.mxu0 0.0
        %737 = vmatprep.subr.mxu0 0.0
        %738 = vmatpush1.msra.mxu0 0.0
        %739 = vmatprep.subr.mxu0 0.0
        %740 = vmatpush1.msra.mxu0 0.0
        %741 = vmatprep.subr.mxu0 0.0
        %742 = vmatpush1.msra.mxu0 0.0
        %743 = vmatprep.subr.mxu0 0.0
        %744 = vmatpush1.msra.mxu0 0.0
        %745 = vmatprep.subr.mxu0 0.0
        %746 = vmatpush1.msra.mxu0 0.0
        %747 = vmatprep.subr.mxu0 0.0
        %748 = vmatpush1.msra.mxu0 0.0
        %749 = vmatprep.subr.mxu0 0.0
        %750 = vmatpush1.msra.mxu0 0.0
        %751 = vmatprep.subr.mxu0 0.0
        %752 = vmatpush1.msra.mxu0 0.0
        %753 = vmatprep.subr.mxu0 0.0
        %754 = vmatpush1.msra.mxu0 0.0
        %755 = vmatprep.subr.mxu0 0.0
        %756 = vmatpush1.msra.mxu0 0.0
        %757 = vmatprep.subr.mxu0 0.0
        %758 = vmatpush1.msra.mxu0 0.0
        %759 = vmatprep.subr.mxu0 0.0
        %760 = vmatpush1.msra.mxu0 0.0
        %761 = vmatprep.subr.mxu0 0.0
        %762 = vmatpush1.msra.mxu0 0.0
        %763 = vmatprep.subr.mxu0 0.0
        %764 = vmatpush1.msra.mxu0 0.0
        %765 = vmatprep.subr.mxu0 0.0
        %766 = vmatpush1.msra.mxu0 0.0
        %767 = vmatprep.subr.mxu0 0.0
        %768 = vmatpush1.msra.mxu0 0.0
        %769 = vmatprep.subr.mxu0 0.0
        %770 = vmatpush1.msra.mxu0 0.0
        %771 = vmatprep.subr.mxu0 0.0
        %772 = vmatpush1.msra.mxu0 0.0
        %773 = vmatprep.subr.mxu0 0.0
        %774 = vmatpush1.msra.mxu0 0.0
        %775 = vmatprep.subr.mxu0 0.0
        %776 = vmatpush1.msra.mxu0 0.0
        %777 = vmatprep.subr.mxu0 0.0
        %778 = vmatpush1.msra.mxu0 0.0
        %779 = vmatprep.subr.mxu0 0.0
        %780 = vmatpush1.msra.mxu0 0.0
        %781 = vmatprep.subr.mxu0 0.0
        %782 = vmatpush1.msra.mxu0 0.0
        %783 = vmatprep.subr.mxu0 0.0
        %784 = vmatpush1.msra.mxu0 0.0
        %785 = vmatprep.subr.mxu0 0.0
        %786 = vmatpush1.msra.mxu0 0.0
        %787 = vmatprep.subr.mxu0 0.0
        %788 = vmatpush1.msra.mxu0 0.0
        %789 = vmatprep.subr.mxu0 0.0
        %790 = vmatpush1.msra.mxu0 0.0
        %791 = vmatprep.mubr.f32.mxu0 0.0
        %792 = vmatmul.mubr.f32.gmra.mrb[0].mxu0 %v725
        %v793 = vpop.f32.mrb[0].mxu0
        %v794 = vadd.f32 0.0, %v793
        %v795 = vpop.f32.mrb[0].mxu0
        %796 = vdwg.mxu0
        %v798 = vsel %vm468, %v794, 0
        %800 = vmatprep.subr.mxu0 0.0
        %801 = vmatpush1.msra.mxu0 %v321
        %802 = vmatprep.subr.mxu0 0.0
        %803 = vmatpush1.msra.mxu0 0.0
        %804 = vmatprep.subr.mxu0 0.0
        %805 = vmatpush1.msra.mxu0 0.0
        %806 = vmatprep.subr.mxu0 0.0
        %807 = vmatpush1.msra.mxu0 0.0
        %808 = vmatprep.subr.mxu0 0.0
        %809 = vmatpush1.msra.mxu0 0.0
        %810 = vmatprep.subr.mxu0 0.0
        %811 = vmatpush1.msra.mxu0 0.0
        %812 = vmatprep.subr.mxu0 0.0
        %813 = vmatpush1.msra.mxu0 0.0
        %814 = vmatprep.subr.mxu0 0.0
        %815 = vmatpush1.msra.mxu0 0.0
        %816 = vmatprep.subr.mxu0 0.0
        %817 = vmatpush1.msra.mxu0 0.0
        %818 = vmatprep.subr.mxu0 0.0
        %819 = vmatpush1.msra.mxu0 0.0
        %820 = vmatprep.subr.mxu0 0.0
        %821 = vmatpush1.msra.mxu0 0.0
        %822 = vmatprep.subr.mxu0 0.0
        %823 = vmatpush1.msra.mxu0 0.0
        %824 = vmatprep.subr.mxu0 0.0
        %825 = vmatpush1.msra.mxu0 0.0
        %826 = vmatprep.subr.mxu0 0.0
        %827 = vmatpush1.msra.mxu0 0.0
        %828 = vmatprep.subr.mxu0 0.0
        %829 = vmatpush1.msra.mxu0 0.0
        %830 = vmatprep.subr.mxu0 0.0
        %831 = vmatpush1.msra.mxu0 0.0
        %832 = vmatprep.subr.mxu0 0.0
        %833 = vmatpush1.msra.mxu0 0.0
        %834 = vmatprep.subr.mxu0 0.0
        %835 = vmatpush1.msra.mxu0 0.0
        %836 = vmatprep.subr.mxu0 0.0
        %837 = vmatpush1.msra.mxu0 0.0
        %838 = vmatprep.subr.mxu0 0.0
        %839 = vmatpush1.msra.mxu0 0.0
        %840 = vmatprep.subr.mxu0 0.0
        %841 = vmatpush1.msra.mxu0 0.0
        %842 = vmatprep.subr.mxu0 0.0
        %843 = vmatpush1.msra.mxu0 0.0
        %844 = vmatprep.subr.mxu0 0.0
        %845 = vmatpush1.msra.mxu0 0.0
        %846 = vmatprep.subr.mxu0 0.0
        %847 = vmatpush1.msra.mxu0 0.0
        %848 = vmatprep.subr.mxu0 0.0
        %849 = vmatpush1.msra.mxu0 0.0
        %850 = vmatprep.subr.mxu0 0.0
        %851 = vmatpush1.msra.mxu0 0.0
        %852 = vmatprep.subr.mxu0 0.0
        %853 = vmatpush1.msra.mxu0 0.0
        %854 = vmatprep.subr.mxu0 0.0
        %855 = vmatpush1.msra.mxu0 0.0
        %856 = vmatprep.subr.mxu0 0.0
        %857 = vmatpush1.msra.mxu0 0.0
        %858 = vmatprep.subr.mxu0 0.0
        %859 = vmatpush1.msra.mxu0 0.0
        %860 = vmatprep.subr.mxu0 0.0
        %861 = vmatpush1.msra.mxu0 0.0
        %862 = vmatprep.subr.mxu0 0.0
        %863 = vmatpush1.msra.mxu0 0.0
        %864 = vmatprep.mubr.f32.mxu0 0.0
        %865 = vmatmul.mubr.f32.gmra.mrb[0].mxu0 %v798
        %v866 = vpop.f32.mrb[0].mxu0
        %v867 = vadd.f32 0.0, %v866
        %v868 = vpop.f32.mrb[0].mxu0
        %869 = vdwg.mxu0
        %v871 = vsel %vm468, %v629, 0
        %873 = vmatprep.subr.mxu0 0.0
        %874 = vmatpush1.msra.mxu0 %v320
        %875 = vmatprep.subr.mxu0 0.0
        %876 = vmatpush1.msra.mxu0 0.0
        %877 = vmatprep.subr.mxu0 0.0
        %878 = vmatpush1.msra.mxu0 0.0
        %879 = vmatprep.subr.mxu0 0.0
        %880 = vmatpush1.msra.mxu0 0.0
        %881 = vmatprep.subr.mxu0 0.0
        %882 = vmatpush1.msra.mxu0 0.0
        %883 = vmatprep.subr.mxu0 0.0
        %884 = vmatpush1.msra.mxu0 0.0
        %885 = vmatprep.subr.mxu0 0.0
        %886 = vmatpush1.msra.mxu0 0.0
        %887 = vmatprep.subr.mxu0 0.0
        %888 = vmatpush1.msra.mxu0 0.0
        %889 = vmatprep.subr.mxu0 0.0
        %890 = vmatpush1.msra.mxu0 0.0
        %891 = vmatprep.subr.mxu0 0.0
        %892 = vmatpush1.msra.mxu0 0.0
        %893 = vmatprep.subr.mxu0 0.0
        %894 = vmatpush1.msra.mxu0 0.0
        %895 = vmatprep.subr.mxu0 0.0
        %896 = vmatpush1.msra.mxu0 0.0
        %897 = vmatprep.subr.mxu0 0.0
        %898 = vmatpush1.msra.mxu0 0.0
        %899 = vmatprep.subr.mxu0 0.0
        %900 = vmatpush1.msra.mxu0 0.0
        %901 = vmatprep.subr.mxu0 0.0
        %902 = vmatpush1.msra.mxu0 0.0
        %903 = vmatprep.subr.mxu0 0.0
        %904 = vmatpush1.msra.mxu0 0.0
        %905 = vmatprep.subr.mxu0 0.0
        %906 = vmatpush1.msra.mxu0 0.0
        %907 = vmatprep.subr.mxu0 0.0
        %908 = vmatpush1.msra.mxu0 0.0
        %909 = vmatprep.subr.mxu0 0.0
        %910 = vmatpush1.msra.mxu0 0.0
        %911 = vmatprep.subr.mxu0 0.0
        %912 = vmatpush1.msra.mxu0 0.0
        %913 = vmatprep.subr.mxu0 0.0
        %914 = vmatpush1.msra.mxu0 0.0
        %915 = vmatprep.subr.mxu0 0.0
        %916 = vmatpush1.msra.mxu0 0.0
        %917 = vmatprep.subr.mxu0 0.0
        %918 = vmatpush1.msra.mxu0 0.0
        %919 = vmatprep.subr.mxu0 0.0
        %920 = vmatpush1.msra.mxu0 0.0
        %921 = vmatprep.subr.mxu0 0.0
        %922 = vmatpush1.msra.mxu0 0.0
        %923 = vmatprep.subr.mxu0 0.0
        %924 = vmatpush1.msra.mxu0 0.0
        %925 = vmatprep.subr.mxu0 0.0
        %926 = vmatpush1.msra.mxu0 0.0
        %927 = vmatprep.subr.mxu0 0.0
        %928 = vmatpush1.msra.mxu0 0.0
        %929 = vmatprep.subr.mxu0 0.0
        %930 = vmatpush1.msra.mxu0 0.0
        %931 = vmatprep.subr.mxu0 0.0
        %932 = vmatpush1.msra.mxu0 0.0
        %933 = vmatprep.subr.mxu0 0.0
        %934 = vmatpush1.msra.mxu0 0.0
        %935 = vmatprep.subr.mxu0 0.0
        %936 = vmatpush1.msra.mxu0 0.0
        %937 = vmatprep.mubr.f32.mxu0 0.0
        %938 = vmatmul.mubr.f32.gmra.mrb[0].mxu0 %v871
        %v939 = vpop.f32.mrb[0].mxu0
        %v940 = vadd.f32 %v867, %v939
        %v941 = vpop.f32.mrb[0].mxu0
        %942 = vdwg.mxu0
        %943 = vrot.lane.b32.xlu0 %v446, 112
        %v944 = vpop.permute.xlu0 %943
        %945 = vrot.lane.b32.xlu0 %v455, 80
        %v946 = vpop.permute.xlu0 %945
        %v947 = vsel %vm468, %v944, 0
        %v949 = vsel %vm468, %v946, 0
        %951 = vmatprep.subr.mxu0 0.0
        %952 = vmatpush1.xpose.msra.mxu0 %v949
        %953 = vmatprep.subr.mxu0 0.0
        %954 = vmatpush1.xpose.msra.mxu0 0.0
        %955 = vmatprep.subr.mxu0 0.0
        %956 = vmatpush1.xpose.msra.mxu0 0.0
        %957 = vmatprep.subr.mxu0 0.0
        %958 = vmatpush1.xpose.msra.mxu0 0.0
        %959 = vmatprep.subr.mxu0 0.0
        %960 = vmatpush1.xpose.msra.mxu0 0.0
        %961 = vmatprep.subr.mxu0 0.0
        %962 = vmatpush1.xpose.msra.mxu0 0.0
        %963 = vmatprep.subr.mxu0 0.0
        %964 = vmatpush1.xpose.msra.mxu0 0.0
        %965 = vmatprep.subr.mxu0 0.0
        %966 = vmatpush1.xpose.msra.mxu0 0.0
        %967 = vmatprep.subr.mxu0 0.0
        %968 = vmatpush1.xpose.msra.mxu0 0.0
        %969 = vmatprep.subr.mxu0 0.0
        %970 = vmatpush1.xpose.msra.mxu0 0.0
        %971 = vmatprep.subr.mxu0 0.0
        %972 = vmatpush1.xpose.msra.mxu0 0.0
        %973 = vmatprep.subr.mxu0 0.0
        %974 = vmatpush1.xpose.msra.mxu0 0.0
        %975 = vmatprep.subr.mxu0 0.0
        %976 = vmatpush1.xpose.msra.mxu0 0.0
        %977 = vmatprep.subr.mxu0 0.0
        %978 = vmatpush1.xpose.msra.mxu0 0.0
        %979 = vmatprep.subr.mxu0 0.0
        %980 = vmatpush1.xpose.msra.mxu0 0.0
        %981 = vmatprep.subr.mxu0 0.0
        %982 = vmatpush1.xpose.msra.mxu0 0.0
        %983 = vmatprep.subr.mxu0 0.0
        %984 = vmatpush1.xpose.msra.mxu0 0.0
        %985 = vmatprep.subr.mxu0 0.0
        %986 = vmatpush1.xpose.msra.mxu0 0.0
        %987 = vmatprep.subr.mxu0 0.0
        %988 = vmatpush1.xpose.msra.mxu0 0.0
        %989 = vmatprep.subr.mxu0 0.0
        %990 = vmatpush1.xpose.msra.mxu0 0.0
        %991 = vmatprep.subr.mxu0 0.0
        %992 = vmatpush1.xpose.msra.mxu0 0.0
        %993 = vmatprep.subr.mxu0 0.0
        %994 = vmatpush1.xpose.msra.mxu0 0.0
        %995 = vmatprep.subr.mxu0 0.0
        %996 = vmatpush1.xpose.msra.mxu0 0.0
        %997 = vmatprep.subr.mxu0 0.0
        %998 = vmatpush1.xpose.msra.mxu0 0.0
        %999 = vmatprep.subr.mxu0 0.0
        %1000 = vmatpush1.xpose.msra.mxu0 0.0
        %1001 = vmatprep.subr.mxu0 0.0
        %1002 = vmatpush1.xpose.msra.mxu0 0.0
        %1003 = vmatprep.subr.mxu0 0.0
        %1004 = vmatpush1.xpose.msra.mxu0 0.0
        %1005 = vmatprep.subr.mxu0 0.0
        %1006 = vmatpush1.xpose.msra.mxu0 0.0
        %1007 = vmatprep.subr.mxu0 0.0
        %1008 = vmatpush1.xpose.msra.mxu0 0.0
        %1009 = vmatprep.subr.mxu0 0.0
        %1010 = vmatpush1.xpose.msra.mxu0 0.0
        %1011 = vmatprep.subr.mxu0 0.0
        %1012 = vmatpush1.xpose.msra.mxu0 0.0
        %1013 = vmatprep.subr.mxu0 0.0
        %1014 = vmatpush1.xpose.msra.mxu0 0.0
        %1015 = vmatprep.mubr.f32.mxu0 0.0
        %1016 = vmatmul.mubr.f32.gmra.mrb[0].mxu0 %v947
        %v1017 = vpop.f32.mrb[0].mxu0
        %v1018 = vadd.f32 %v313, %v1017
        %v1019 = vpop.f32.mrb[0].mxu0
        %1020 = vdwg.mxu0
        %v1021 = vsel %vm468, %v1018, -inf
        %1022 = vmax.xlane.f32.xlu0 %v1021
        %v1023 = vpop.xlane.xlu0 %1022
        %v1024 = vsub.f32 %v1018, %v1023
        %v1025 = vmul.f32 %v1024, 1.442695
        %v1026 = vpow.pop %v1025
        %v1027 = vsel %vm468, %v1026, 0.0
        %1028 = vadd.xlane.f32.xlu0 %v1027
        %v1029 = vpop.xlane.xlu0 %1028
        %v1030 = vrcp.pop %v1029
        %v1031 = vmul.f32 %v1026, %v1030
        %1032 = vrot.lane.b32.xlu0 %v464, 48
        %v1033 = vpop.permute.xlu0 %1032
        %v1036 = vsel %vm468, %v1031, 0
        %1038 = vmatprep.subr.mxu0 0.0
        %1039 = vmatpush1.msra.mxu0 %v1033
        %1040 = vmatprep.subr.mxu0 0.0
        %1041 = vmatpush1.msra.mxu0 0.0
        %1042 = vmatprep.subr.mxu0 0.0
        %1043 = vmatpush1.msra.mxu0 0.0
        %1044 = vmatprep.subr.mxu0 0.0
        %1045 = vmatpush1.msra.mxu0 0.0
        %1046 = vmatprep.subr.mxu0 0.0
        %1047 = vmatpush1.msra.mxu0 0.0
        %1048 = vmatprep.subr.mxu0 0.0
        %1049 = vmatpush1.msra.mxu0 0.0
        %1050 = vmatprep.subr.mxu0 0.0
        %1051 = vmatpush1.msra.mxu0 0.0
        %1052 = vmatprep.subr.mxu0 0.0
        %1053 = vmatpush1.msra.mxu0 0.0
        %1054 = vmatprep.subr.mxu0 0.0
        %1055 = vmatpush1.msra.mxu0 0.0
        %1056 = vmatprep.subr.mxu0 0.0
        %1057 = vmatpush1.msra.mxu0 0.0
        %1058 = vmatprep.subr.mxu0 0.0
        %1059 = vmatpush1.msra.mxu0 0.0
        %1060 = vmatprep.subr.mxu0 0.0
        %1061 = vmatpush1.msra.mxu0 0.0
        %1062 = vmatprep.subr.mxu0 0.0
        %1063 = vmatpush1.msra.mxu0 0.0
        %1064 = vmatprep.subr.mxu0 0.0
        %1065 = vmatpush1.msra.mxu0 0.0
        %1066 = vmatprep.subr.mxu0 0.0
        %1067 = vmatpush1.msra.mxu0 0.0
        %1068 = vmatprep.subr.mxu0 0.0
        %1069 = vmatpush1.msra.mxu0 0.0
        %1070 = vmatprep.subr.mxu0 0.0
        %1071 = vmatpush1.msra.mxu0 0.0
        %1072 = vmatprep.subr.mxu0 0.0
        %1073 = vmatpush1.msra.mxu0 0.0
        %1074 = vmatprep.subr.mxu0 0.0
        %1075 = vmatpush1.msra.mxu0 0.0
        %1076 = vmatprep.subr.mxu0 0.0
        %1077 = vmatpush1.msra.mxu0 0.0
        %1078 = vmatprep.subr.mxu0 0.0
        %1079 = vmatpush1.msra.mxu0 0.0
        %1080 = vmatprep.subr.mxu0 0.0
        %1081 = vmatpush1.msra.mxu0 0.0
        %1082 = vmatprep.subr.mxu0 0.0
        %1083 = vmatpush1.msra.mxu0 0.0
        %1084 = vmatprep.subr.mxu0 0.0
        %1085 = vmatpush1.msra.mxu0 0.0
        %1086 = vmatprep.subr.mxu0 0.0
        %1087 = vmatpush1.msra.mxu0 0.0
        %1088 = vmatprep.subr.mxu0 0.0
        %1089 = vmatpush1.msra.mxu0 0.0
        %1090 = vmatprep.subr.mxu0 0.0
        %1091 = vmatpush1.msra.mxu0 0.0
        %1092 = vmatprep.subr.mxu0 0.0
        %1093 = vmatpush1.msra.mxu0 0.0
        %1094 = vmatprep.subr.mxu0 0.0
        %1095 = vmatpush1.msra.mxu0 0.0
        %1096 = vmatprep.subr.mxu0 0.0
        %1097 = vmatpush1.msra.mxu0 0.0
        %1098 = vmatprep.subr.mxu0 0.0
        %1099 = vmatpush1.msra.mxu0 0.0
        %1100 = vmatprep.subr.mxu0 0.0
        %1101 = vmatpush1.msra.mxu0 0.0
        %1102 = vmatprep.mubr.f32.mxu0 0.0
        %1103 = vmatmul.mubr.f32.gmra.mrb[0].mxu0 %v1036
        %v1104 = vpop.f32.mrb[0].mxu0
        %v1105 = vadd.f32 0.0, %v1104
        %v1106 = vpop.f32.mrb[0].mxu0
        %1107 = vdwg.mxu0
        %v1109 = vsel %vm468, %v1105, 0
        %1111 = vmatprep.subr.mxu0 0.0
        %1112 = vmatpush1.msra.mxu0 %v322
        %1113 = vmatprep.subr.mxu0 0.0
        %1114 = vmatpush1.msra.mxu0 0.0
        %1115 = vmatprep.subr.mxu0 0.0
        %1116 = vmatpush1.msra.mxu0 0.0
        %1117 = vmatprep.subr.mxu0 0.0
        %1118 = vmatpush1.msra.mxu0 0.0
        %1119 = vmatprep.subr.mxu0 0.0
        %1120 = vmatpush1.msra.mxu0 0.0
        %1121 = vmatprep.subr.mxu0 0.0
        %1122 = vmatpush1.msra.mxu0 0.0
        %1123 = vmatprep.subr.mxu0 0.0
        %1124 = vmatpush1.msra.mxu0 0.0
        %1125 = vmatprep.subr.mxu0 0.0
        %1126 = vmatpush1.msra.mxu0 0.0
        %1127 = vmatprep.subr.mxu0 0.0
        %1128 = vmatpush1.msra.mxu0 0.0
        %1129 = vmatprep.subr.mxu0 0.0
        %1130 = vmatpush1.msra.mxu0 0.0
        %1131 = vmatprep.subr.mxu0 0.0
        %1132 = vmatpush1.msra.mxu0 0.0
        %1133 = vmatprep.subr.mxu0 0.0
        %1134 = vmatpush1.msra.mxu0 0.0
        %1135 = vmatprep.subr.mxu0 0.0
        %1136 = vmatpush1.msra.mxu0 0.0
        %1137 = vmatprep.subr.mxu0 0.0
        %1138 = vmatpush1.msra.mxu0 0.0
        %1139 = vmatprep.subr.mxu0 0.0
        %1140 = vmatpush1.msra.mxu0 0.0
        %1141 = vmatprep.subr.mxu0 0.0
        %1142 = vmatpush1.msra.mxu0 0.0
        %1143 = vmatprep.subr.mxu0 0.0
        %1144 = vmatpush1.msra.mxu0 0.0
        %1145 = vmatprep.subr.mxu0 0.0
        %1146 = vmatpush1.msra.mxu0 0.0
        %1147 = vmatprep.subr.mxu0 0.0
        %1148 = vmatpush1.msra.mxu0 0.0
        %1149 = vmatprep.subr.mxu0 0.0
        %1150 = vmatpush1.msra.mxu0 0.0
        %1151 = vmatprep.subr.mxu0 0.0
        %1152 = vmatpush1.msra.mxu0 0.0
        %1153 = vmatprep.subr.mxu0 0.0
        %1154 = vmatpush1.msra.mxu0 0.0
        %1155 = vmatprep.subr.mxu0 0.0
        %1156 = vmatpush1.msra.mxu0 0.0
        %1157 = vmatprep.subr.mxu0 0.0
        %1158 = vmatpush1.msra.mxu0 0.0
        %1159 = vmatprep.subr.mxu0 0.0
        %1160 = vmatpush1.msra.mxu0 0.0
        %1161 = vmatprep.subr.mxu0 0.0
        %1162 = vmatpush1.msra.mxu0 0.0
        %1163 = vmatprep.subr.mxu0 0.0
        %1164 = vmatpush1.msra.mxu0 0.0
        %1165 = vmatprep.subr.mxu0 0.0
        %1166 = vmatpush1.msra.mxu0 0.0
        %1167 = vmatprep.subr.mxu0 0.0
        %1168 = vmatpush1.msra.mxu0 0.0
        %1169 = vmatprep.subr.mxu0 0.0
        %1170 = vmatpush1.msra.mxu0 0.0
        %1171 = vmatprep.subr.mxu0 0.0
        %1172 = vmatpush1.msra.mxu0 0.0
        %1173 = vmatprep.subr.mxu0 0.0
        %1174 = vmatpush1.msra.mxu0 0.0
        %1175 = vmatprep.mubr.f32.mxu0 0.0
        %1176 = vmatmul.mubr.f32.gmra.mrb[0].mxu0 %v1109
        %v1177 = vpop.f32.mrb[0].mxu0
        %v1178 = vadd.f32 0.0, %v1177
        %v1179 = vpop.f32.mrb[0].mxu0
        %1180 = vdwg.mxu0
        %v1181 = vadd.f32 %v940, %v1178
        %1182 = vrot.lane.b32.xlu0 %v446, 104
        %v1183 = vpop.permute.xlu0 %1182
        %1184 = vrot.lane.b32.xlu0 %v455, 72
        %v1185 = vpop.permute.xlu0 %1184
        %v1186 = vsel %vm468, %v1183, 0
        %v1188 = vsel %vm468, %v1185, 0
        %1190 = vmatprep.subr.mxu0 0.0
        %1191 = vmatpush1.xpose.msra.mxu0 %v1188
        %1192 = vmatprep.subr.mxu0 0.0
        %1193 = vmatpush1.xpose.msra.mxu0 0.0
        %1194 = vmatprep.subr.mxu0 0.0
        %1195 = vmatpush1.xpose.msra.mxu0 0.0
        %1196 = vmatprep.subr.mxu0 0.0
        %1197 = vmatpush1.xpose.msra.mxu0 0.0
        %1198 = vmatprep.subr.mxu0 0.0
        %1199 = vmatpush1.xpose.msra.mxu0 0.0
        %1200 = vmatprep.subr.mxu0 0.0
        %1201 = vmatpush1.xpose.msra.mxu0 0.0
        %1202 = vmatprep.subr.mxu0 0.0
        %1203 = vmatpush1.xpose.msra.mxu0 0.0
        %1204 = vmatprep.subr.mxu0 0.0
        %1205 = vmatpush1.xpose.msra.mxu0 0.0
        %1206 = vmatprep.subr.mxu0 0.0
        %1207 = vmatpush1.xpose.msra.mxu0 0.0
        %1208 = vmatprep.subr.mxu0 0.0
        %1209 = vmatpush1.xpose.msra.mxu0 0.0
        %1210 = vmatprep.subr.mxu0 0.0
        %1211 = vmatpush1.xpose.msra.mxu0 0.0
        %1212 = vmatprep.subr.mxu0 0.0
        %1213 = vmatpush1.xpose.msra.mxu0 0.0
        %1214 = vmatprep.subr.mxu0 0.0
        %1215 = vmatpush1.xpose.msra.mxu0 0.0
        %1216 = vmatprep.subr.mxu0 0.0
        %1217 = vmatpush1.xpose.msra.mxu0 0.0
        %1218 = vmatprep.subr.mxu0 0.0
        %1219 = vmatpush1.xpose.msra.mxu0 0.0
        %1220 = vmatprep.subr.mxu0 0.0
        %1221 = vmatpush1.xpose.msra.mxu0 0.0
        %1222 = vmatprep.subr.mxu0 0.0
        %1223 = vmatpush1.xpose.msra.mxu0 0.0
        %1224 = vmatprep.subr.mxu0 0.0
        %1225 = vmatpush1.xpose.msra.mxu0 0.0
        %1226 = vmatprep.subr.mxu0 0.0
        %1227 = vmatpush1.xpose.msra.mxu0 0.0
        %1228 = vmatprep.subr.mxu0 0.0
        %1229 = vmatpush1.xpose.msra.mxu0 0.0
        %1230 = vmatprep.subr.mxu0 0.0
        %1231 = vmatpush1.xpose.msra.mxu0 0.0
        %1232 = vmatprep.subr.mxu0 0.0
        %1233 = vmatpush1.xpose.msra.mxu0 0.0
        %1234 = vmatprep.subr.mxu0 0.0
        %1235 = vmatpush1.xpose.msra.mxu0 0.0
        %1236 = vmatprep.subr.mxu0 0.0
        %1237 = vmatpush1.xpose.msra.mxu0 0.0
        %1238 = vmatprep.subr.mxu0 0.0
        %1239 = vmatpush1.xpose.msra.mxu0 0.0
        %1240 = vmatprep.subr.mxu0 0.0
        %1241 = vmatpush1.xpose.msra.mxu0 0.0
        %1242 = vmatprep.subr.mxu0 0.0
        %1243 = vmatpush1.xpose.msra.mxu0 0.0
        %1244 = vmatprep.subr.mxu0 0.0
        %1245 = vmatpush1.xpose.msra.mxu0 0.0
        %1246 = vmatprep.subr.mxu0 0.0
        %1247 = vmatpush1.xpose.msra.mxu0 0.0
        %1248 = vmatprep.subr.mxu0 0.0
        %1249 = vmatpush1.xpose.msra.mxu0 0.0
        %1250 = vmatprep.subr.mxu0 0.0
        %1251 = vmatpush1.xpose.msra.mxu0 0.0
        %1252 = vmatprep.subr.mxu0 0.0
        %1253 = vmatpush1.xpose.msra.mxu0 0.0
        %1254 = vmatprep.mubr.f32.mxu0 0.0
        %1255 = vmatmul.mubr.f32.gmra.mrb[0].mxu0 %v1186
        %v1256 = vpop.f32.mrb[0].mxu0
        %v1257 = vadd.f32 %v313, %v1256
        %v1258 = vpop.f32.mrb[0].mxu0
        %1259 = vdwg.mxu0
        %v1260 = vsel %vm468, %v1257, -inf
        %1261 = vmax.xlane.f32.xlu0 %v1260
        %v1262 = vpop.xlane.xlu0 %1261
        %v1263 = vsub.f32 %v1257, %v1262
        %v1264 = vmul.f32 %v1263, 1.442695
        %v1265 = vpow.pop %v1264
        %v1266 = vsel %vm468, %v1265, 0.0
        %1267 = vadd.xlane.f32.xlu0 %v1266
        %v1268 = vpop.xlane.xlu0 %1267
        %v1269 = vrcp.pop %v1268
        %v1270 = vmul.f32 %v1265, %v1269
        %1271 = vrot.lane.b32.xlu0 %v464, 40
        %v1272 = vpop.permute.xlu0 %1271
        %v1275 = vsel %vm468, %v1270, 0
        %1277 = vmatprep.subr.mxu0 0.0
        %1278 = vmatpush1.msra.mxu0 %v1272
        %1279 = vmatprep.subr.mxu0 0.0
        %1280 = vmatpush1.msra.mxu0 0.0
        %1281 = vmatprep.subr.mxu0 0.0
        %1282 = vmatpush1.msra.mxu0 0.0
        %1283 = vmatprep.subr.mxu0 0.0
        %1284 = vmatpush1.msra.mxu0 0.0
        %1285 = vmatprep.subr.mxu0 0.0
        %1286 = vmatpush1.msra.mxu0 0.0
        %1287 = vmatprep.subr.mxu0 0.0
        %1288 = vmatpush1.msra.mxu0 0.0
        %1289 = vmatprep.subr.mxu0 0.0
        %1290 = vmatpush1.msra.mxu0 0.0
        %1291 = vmatprep.subr.mxu0 0.0
        %1292 = vmatpush1.msra.mxu0 0.0
        %1293 = vmatprep.subr.mxu0 0.0
        %1294 = vmatpush1.msra.mxu0 0.0
        %1295 = vmatprep.subr.mxu0 0.0
        %1296 = vmatpush1.msra.mxu0 0.0
        %1297 = vmatprep.subr.mxu0 0.0
        %1298 = vmatpush1.msra.mxu0 0.0
        %1299 = vmatprep.subr.mxu0 0.0
        %1300 = vmatpush1.msra.mxu0 0.0
        %1301 = vmatprep.subr.mxu0 0.0
        %1302 = vmatpush1.msra.mxu0 0.0
        %1303 = vmatprep.subr.mxu0 0.0
        %1304 = vmatpush1.msra.mxu0 0.0
        %1305 = vmatprep.subr.mxu0 0.0
        %1306 = vmatpush1.msra.mxu0 0.0
        %1307 = vmatprep.subr.mxu0 0.0
        %1308 = vmatpush1.msra.mxu0 0.0
        %1309 = vmatprep.subr.mxu0 0.0
        %1310 = vmatpush1.msra.mxu0 0.0
        %1311 = vmatprep.subr.mxu0 0.0
        %1312 = vmatpush1.msra.mxu0 0.0
        %1313 = vmatprep.subr.mxu0 0.0
        %1314 = vmatpush1.msra.mxu0 0.0
        %1315 = vmatprep.subr.mxu0 0.0
        %1316 = vmatpush1.msra.mxu0 0.0
        %1317 = vmatprep.subr.mxu0 0.0
        %1318 = vmatpush1.msra.mxu0 0.0
        %1319 = vmatprep.subr.mxu0 0.0
        %1320 = vmatpush1.msra.mxu0 0.0
        %1321 = vmatprep.subr.mxu0 0.0
        %1322 = vmatpush1.msra.mxu0 0.0
        %1323 = vmatprep.subr.mxu0 0.0
        %1324 = vmatpush1.msra.mxu0 0.0
        %1325 = vmatprep.subr.mxu0 0.0
        %1326 = vmatpush1.msra.mxu0 0.0
        %1327 = vmatprep.subr.mxu0 0.0
        %1328 = vmatpush1.msra.mxu0 0.0
        %1329 = vmatprep.subr.mxu0 0.0
        %1330 = vmatpush1.msra.mxu0 0.0
        %1331 = vmatprep.subr.mxu0 0.0
        %1332 = vmatpush1.msra.mxu0 0.0
        %1333 = vmatprep.subr.mxu0 0.0
        %1334 = vmatpush1.msra.mxu0 0.0
        %1335 = vmatprep.subr.mxu0 0.0
        %1336 = vmatpush1.msra.mxu0 0.0
        %1337 = vmatprep.subr.mxu0 0.0
        %1338 = vmatpush1.msra.mxu0 0.0
        %1339 = vmatprep.subr.mxu0 0.0
        %1340 = vmatpush1.msra.mxu0 0.0
        %1341 = vmatprep.mubr.f32.mxu0 0.0
        %1342 = vmatmul.mubr.f32.gmra.mrb[0].mxu0 %v1275
        %v1343 = vpop.f32.mrb[0].mxu0
        %v1344 = vadd.f32 0.0, %v1343
        %v1345 = vpop.f32.mrb[0].mxu0
        %1346 = vdwg.mxu0
        %v1348 = vsel %vm468, %v1344, 0
        %1350 = vmatprep.subr.mxu0 0.0
        %1351 = vmatpush1.msra.mxu0 %v323
        %1352 = vmatprep.subr.mxu0 0.0
        %1353 = vmatpush1.msra.mxu0 0.0
        %1354 = vmatprep.subr.mxu0 0.0
        %1355 = vmatpush1.msra.mxu0 0.0
        %1356 = vmatprep.subr.mxu0 0.0
        %1357 = vmatpush1.msra.mxu0 0.0
        %1358 = vmatprep.subr.mxu0 0.0
        %1359 = vmatpush1.msra.mxu0 0.0
        %1360 = vmatprep.subr.mxu0 0.0
        %1361 = vmatpush1.msra.mxu0 0.0
        %1362 = vmatprep.subr.mxu0 0.0
        %1363 = vmatpush1.msra.mxu0 0.0
        %1364 = vmatprep.subr.mxu0 0.0
        %1365 = vmatpush1.msra.mxu0 0.0
        %1366 = vmatprep.subr.mxu0 0.0
        %1367 = vmatpush1.msra.mxu0 0.0
        %1368 = vmatprep.subr.mxu0 0.0
        %1369 = vmatpush1.msra.mxu0 0.0
        %1370 = vmatprep.subr.mxu0 0.0
        %1371 = vmatpush1.msra.mxu0 0.0
        %1372 = vmatprep.subr.mxu0 0.0
        %1373 = vmatpush1.msra.mxu0 0.0
        %1374 = vmatprep.subr.mxu0 0.0
        %1375 = vmatpush1.msra.mxu0 0.0
        %1376 = vmatprep.subr.mxu0 0.0
        %1377 = vmatpush1.msra.mxu0 0.0
        %1378 = vmatprep.subr.mxu0 0.0
        %1379 = vmatpush1.msra.mxu0 0.0
        %1380 = vmatprep.subr.mxu0 0.0
        %1381 = vmatpush1.msra.mxu0 0.0
        %1382 = vmatprep.subr.mxu0 0.0
        %1383 = vmatpush1.msra.mxu0 0.0
        %1384 = vmatprep.subr.mxu0 0.0
        %1385 = vmatpush1.msra.mxu0 0.0
        %1386 = vmatprep.subr.mxu0 0.0
        %1387 = vmatpush1.msra.mxu0 0.0
        %1388 = vmatprep.subr.mxu0 0.0
        %1389 = vmatpush1.msra.mxu0 0.0
        %1390 = vmatprep.subr.mxu0 0.0
        %1391 = vmatpush1.msra.mxu0 0.0
        %1392 = vmatprep.subr.mxu0 0.0
        %1393 = vmatpush1.msra.mxu0 0.0
        %1394 = vmatprep.subr.mxu0 0.0
        %1395 = vmatpush1.msra.mxu0 0.0
        %1396 = vmatprep.subr.mxu0 0.0
        %1397 = vmatpush1.msra.mxu0 0.0
        %1398 = vmatprep.subr.mxu0 0.0
        %1399 = vmatpush1.msra.mxu0 0.0
        %1400 = vmatprep.subr.mxu0 0.0
        %1401 = vmatpush1.msra.mxu0 0.0
        %1402 = vmatprep.subr.mxu0 0.0
        %1403 = vmatpush1.msra.mxu0 0.0
        %1404 = vmatprep.subr.mxu0 0.0
        %1405 = vmatpush1.msra.mxu0 0.0
        %1406 = vmatprep.subr.mxu0 0.0
        %1407 = vmatpush1.msra.mxu0 0.0
        %1408 = vmatprep.subr.mxu0 0.0
        %1409 = vmatpush1.msra.mxu0 0.0
        %1410 = vmatprep.subr.mxu0 0.0
        %1411 = vmatpush1.msra.mxu0 0.0
        %1412 = vmatprep.subr.mxu0 0.0
        %1413 = vmatpush1.msra.mxu0 0.0
        %1414 = vmatprep.mubr.f32.mxu0 0.0
        %1415 = vmatmul.mubr.f32.gmra.mrb[0].mxu0 %v1348
        %v1416 = vpop.f32.mrb[0].mxu0
        %v1417 = vadd.f32 0.0, %v1416
        %v1418 = vpop.f32.mrb[0].mxu0
        %1419 = vdwg.mxu0
        %v1420 = vadd.f32 %v1181, %v1417
        %v1421 = vadd.f32 %v307, %v1420
        %v1422 = vlaneseq
        %v1423 = vshrl.u32 %v1422, 7
        %v1424 = vsub.s32 4, %v1423
        %v1425 = vrot.slane %v314, %v1424
        %v1426 = vadd.f32 %v1421, %v1425
        %v1427 = vsel %vm344, %v1426, 0.0
        %1428 = vadd.xlane.f32.xlu0 %v1427
        %v1429 = vpop.xlane.xlu0 %1428
        %v1430 = vmul.f32 %v1429, %v348
        %v1431 = vsub.f32 %v1426, %v1430
        %v1432 = vmul.f32 %v1431, %v1431
        %v1433 = vsel %vm344, %v1432, 0.0
        %1434 = vadd.xlane.f32.xlu0 %v1433
        %v1435 = vpop.xlane.xlu0 %1434
        %v1436 = vmul.f32 %v1435, %v348
        %v1437 = vadd.f32 %v1436, 1e-05
        %v1438 = vrsqrt.pop %v1437
        %v1439 = vmul.f32 %v1431, %v1438
        %v1440 = vlaneseq
        %v1441 = vshrl.u32 %v1440, 7
        %v1442 = vsub.s32 2, %v1441
        %v1443 = vrot.slane %v314, %v1442
        %v1444 = vmul.f32 %v1439, %v1443
        %v1445 = vlaneseq
        %v1446 = vshrl.u32 %v1445, 7
        %v1447 = vsub.s32 3, %v1446
        %v1448 = vrot.slane %v314, %v1447
        %v1449 = vadd.f32 %v1444, %v1448
        %v1450 = vlaneseq
        %v1451 = vshrl.u32 %v1450, 7
        %v1452 = vsub.s32 1, %v1451
        %v1453 = vrot.slane %v315, %v1452
        %v1455 = vsel %vm344, %v1449, 0
        %1457 = vmatprep.subr.mxu0 0.0
        %1458 = vmatpush1.msra.mxu0 %v324
        %1459 = vmatprep.subr.mxu0 0.0
        %1460 = vmatpush1.msra.mxu0 %v325
        %1461 = vmatprep.subr.mxu0 0.0
        %1462 = vmatpush1.msra.mxu0 %v326
        %1463 = vmatprep.subr.mxu0 0.0
        %1464 = vmatpush1.msra.mxu0 %v327
        %1465 = vmatprep.subr.mxu0 0.0
        %1466 = vmatpush1.msra.mxu0 0.0
        %1467 = vmatprep.subr.mxu0 0.0
        %1468 = vmatpush1.msra.mxu0 0.0
        %1469 = vmatprep.subr.mxu0 0.0
        %1470 = vmatpush1.msra.mxu0 0.0
        %1471 = vmatprep.subr.mxu0 0.0
        %1472 = vmatpush1.msra.mxu0 0.0
        %1473 = vmatprep.subr.mxu0 0.0
        %1474 = vmatpush1.msra.mxu0 0.0
        %1475 = vmatprep.subr.mxu0 0.0
        %1476 = vmatpush1.msra.mxu0 0.0
        %1477 = vmatprep.subr.mxu0 0.0
        %1478 = vmatpush1.msra.mxu0 0.0
        %1479 = vmatprep.subr.mxu0 0.0
        %1480 = vmatpush1.msra.mxu0 0.0
        %1481 = vmatprep.subr.mxu0 0.0
        %1482 = vmatpush1.msra.mxu0 0.0
        %1483 = vmatprep.subr.mxu0 0.0
        %1484 = vmatpush1.msra.mxu0 0.0
        %1485 = vmatprep.subr.mxu0 0.0
        %1486 = vmatpush1.msra.mxu0 0.0
        %1487 = vmatprep.subr.mxu0 0.0
        %1488 = vmatpush1.msra.mxu0 0.0
        %1489 = vmatprep.subr.mxu0 0.0
        %1490 = vmatpush1.msra.mxu0 0.0
        %1491 = vmatprep.subr.mxu0 0.0
        %1492 = vmatpush1.msra.mxu0 0.0
        %1493 = vmatprep.subr.mxu0 0.0
        %1494 = vmatpush1.msra.mxu0 0.0
        %1495 = vmatprep.subr.mxu0 0.0
        %1496 = vmatpush1.msra.mxu0 0.0
        %1497 = vmatprep.subr.mxu0 0.0
        %1498 = vmatpush1.msra.mxu0 0.0
        %1499 = vmatprep.subr.mxu0 0.0
        %1500 = vmatpush1.msra.mxu0 0.0
        %1501 = vmatprep.subr.mxu0 0.0
        %1502 = vmatpush1.msra.mxu0 0.0
        %1503 = vmatprep.subr.mxu0 0.0
        %1504 = vmatpush1.msra.mxu0 0.0
        %1505 = vmatprep.subr.mxu0 0.0
        %1506 = vmatpush1.msra.mxu0 0.0
        %1507 = vmatprep.subr.mxu0 0.0
        %1508 = vmatpush1.msra.mxu0 0.0
        %1509 = vmatprep.subr.mxu0 0.0
        %1510 = vmatpush1.msra.mxu0 0.0
        %1511 = vmatprep.subr.mxu0 0.0
        %1512 = vmatpush1.msra.mxu0 0.0
        %1513 = vmatprep.subr.mxu0 0.0
        %1514 = vmatpush1.msra.mxu0 0.0
        %1515 = vmatprep.subr.mxu0 0.0
        %1516 = vmatpush1.msra.mxu0 0.0
        %1517 = vmatprep.subr.mxu0 0.0
        %1518 = vmatpush1.msra.mxu0 0.0
        %1519 = vmatprep.subr.mxu0 0.0
        %1520 = vmatpush1.msra.mxu0 0.0
        %1521 = vmatprep.mubr.f32.mxu0 0.0
        %1522 = vmatmul.mubr.f32.gmra.mrb[0].mxu0 %v1455
        %v1523 = vpop.f32.mrb[0].mxu0
        %v1524 = vadd.f32 %v1453, %v1523
        %v1525 = vpop.f32.mrb[0].mxu0
        %1526 = vdwg.mxu0
        %v1527 = vmul.f32 %v1524, 1.702
        %v1528 = vxor.u32 %v1527, 2147483648
        %v1529 = vmul.f32 %v1528, 1.442695
        %v1530 = vpow.pop %v1529
        %v1531 = vadd.f32 %v1530, 1.0
        %v1532 = vrcp.pop %v1531
        %v1533 = vmul.f32 1.0, %v1532
        %v1534 = vmul.f32 %v1524, %v1533
        %1535 = vmatprep.subr.mxu0 0.0
        %1536 = vmatpush1.msra.mxu0 %v328
        %1537 = vmatprep.subr.mxu0 0.0
        %1538 = vmatpush1.msra.mxu0 %v329
        %1539 = vmatprep.subr.mxu0 0.0
        %1540 = vmatpush1.msra.mxu0 %v330
        %1541 = vmatprep.subr.mxu0 0.0
        %1542 = vmatpush1.msra.mxu0 %v331
        %1543 = vmatprep.subr.mxu0 0.0
        %1544 = vmatpush1.msra.mxu0 %v332
        %1545 = vmatprep.subr.mxu0 0.0
        %1546 = vmatpush1.msra.mxu0 %v333
        %1547 = vmatprep.subr.mxu0 0.0
        %1548 = vmatpush1.msra.mxu0 %v334
        %1549 = vmatprep.subr.mxu0 0.0
        %1550 = vmatpush1.msra.mxu0 %v335
        %1551 = vmatprep.subr.mxu0 0.0
        %1552 = vmatpush1.msra.mxu0 %v336
        %1553 = vmatprep.subr.mxu0 0.0
        %1554 = vmatpush1.msra.mxu0 %v337
        %1555 = vmatprep.subr.mxu0 0.0
        %1556 = vmatpush1.msra.mxu0 %v338
        %1557 = vmatprep.subr.mxu0 0.0
        %1558 = vmatpush1.msra.mxu0 %v339
        %1559 = vmatprep.subr.mxu0 0.0
        %1560 = vmatpush1.msra.mxu0 %v340
        %1561 = vmatprep.subr.mxu0 0.0
        %1562 = vmatpush1.msra.mxu0 %v341
        %1563 = vmatprep.subr.mxu0 0.0
        %1564 = vmatpush1.msra.mxu0 %v342
        %1565 = vmatprep.subr.mxu0 0.0
        %1566 = vmatpush1.msra.mxu0 %v343
        %1567 = vmatprep.subr.mxu0 0.0
        %1568 = vmatpush1.msra.mxu0 0.0
        %1569 = vmatprep.subr.mxu0 0.0
        %1570 = vmatpush1.msra.mxu0 0.0
        %1571 = vmatprep.subr.mxu0 0.0
        %1572 = vmatpush1.msra.mxu0 0.0
        %1573 = vmatprep.subr.mxu0 0.0
        %1574 = vmatpush1.msra.mxu0 0.0
        %1575 = vmatprep.subr.mxu0 0.0
        %1576 = vmatpush1.msra.mxu0 0.0
        %1577 = vmatprep.subr.mxu0 0.0
        %1578 = vmatpush1.msra.mxu0 0.0
        %1579 = vmatprep.subr.mxu0 0.0
        %1580 = vmatpush1.msra.mxu0 0.0
        %1581 = vmatprep.subr.mxu0 0.0
        %1582 = vmatpush1.msra.mxu0 0.0
        %1583 = vmatprep.subr.mxu0 0.0
        %1584 = vmatpush1.msra.mxu0 0.0
        %1585 = vmatprep.subr.mxu0 0.0
        %1586 = vmatpush1.msra.mxu0 0.0
        %1587 = vmatprep.subr.mxu0 0.0
        %1588 = vmatpush1.msra.mxu0 0.0
        %1589 = vmatprep.subr.mxu0 0.0
        %1590 = vmatpush1.msra.mxu0 0.0
        %1591 = vmatprep.subr.mxu0 0.0
        %1592 = vmatpush1.msra.mxu0 0.0
        %1593 = vmatprep.subr.mxu0 0.0
        %1594 = vmatpush1.msra.mxu0 0.0
        %1595 = vmatprep.subr.mxu0 0.0
        %1596 = vmatpush1.msra.mxu0 0.0
        %1597 = vmatprep.subr.mxu0 0.0
        %1598 = vmatpush1.msra.mxu0 0.0
        %1599 = vmatprep.mubr.f32.mxu0 0.0
        %1600 = vmatmul.mubr.f32.gmra.mrb[0].mxu0 %v1534
        %v1601 = vpop.f32.mrb[0].mxu0
        %v1602 = vadd.f32 0.0, %v1601
        %v1603 = vpop.f32.mrb[0].mxu0
        %1604 = vdwg.mxu0
        %v1605 = vadd.f32 %v1426, %v1602
        %v1606 = vlaneseq
        %v1607 = vshrl.u32 %v1606, 7
        %v1608 = vsub.s32 5, %v1607
        %v1609 = vrot.slane %v314, %v1608
        %v1610 = vadd.f32 %v1605, %v1609
        %s1611 = scalar_lea.vmem %s2, 16
        %v1612 = vld [vmem:[%s1611] sm:$0xff]
        %v1613 = vld [vmem:[%s1611 + $0x8] sm:$0xff]
        %s1614 = scalar_lea.vmem %s3, 32
        %v1615 = vld [vmem:[%s1614] sm:$0xff]
        %v1616 = vld [vmem:[%s1614 + $0x8] sm:$0xff]
        %v1617 = vld [vmem:[%s1614 + $0x10] sm:$0xff]
        %v1618 = vld [vmem:[%s1614 + $0x18] sm:$0xff]
        %s1619 = scalar_lea.vmem %s4, 32
        %v1620 = vld [vmem:[%s1619] sm:$0xff]
        %v1621 = vld [vmem:[%s1619 + $0x8] sm:$0xff]
        %v1622 = vld [vmem:[%s1619 + $0x10] sm:$0xff]
        %v1623 = vld [vmem:[%s1619 + $0x18] sm:$0xff]
        %s1624 = scalar_lea.vmem %s5, 32
        %v1625 = vld [vmem:[%s1624] sm:$0xff]
        %v1626 = vld [vmem:[%s1624 + $0x8] sm:$0xff]
        %v1627 = vld [vmem:[%s1624 + $0x10] sm:$0xff]
        %v1628 = vld [vmem:[%s1624 + $0x18] sm:$0xff]
        %s1629 = scalar_lea.vmem %s6, 128
        %v1630 = vld [vmem:[%s1629] sm:$0xff]
        %v1631 = vld [vmem:[%s1629 + $0x8] sm:$0xff]
        %v1632 = vld [vmem:[%s1629 + $0x10] sm:$0xff]
        %v1633 = vld [vmem:[%s1629 + $0x18] sm:$0xff]
        %v1634 = vld [vmem:[%s1629 + $0x20] sm:$0xff]
        %v1635 = vld [vmem:[%s1629 + $0x28] sm:$0xff]
        %v1636 = vld [vmem:[%s1629 + $0x30] sm:$0xff]
        %v1637 = vld [vmem:[%s1629 + $0x38] sm:$0xff]
        %v1638 = vld [vmem:[%s1629 + $0x40] sm:$0xff]
        %v1639 = vld [vmem:[%s1629 + $0x48] sm:$0xff]
        %v1640 = vld [vmem:[%s1629 + $0x50] sm:$0xff]
        %v1641 = vld [vmem:[%s1629 + $0x58] sm:$0xff]
        %v1642 = vld [vmem:[%s1629 + $0x60] sm:$0xff]
        %v1643 = vld [vmem:[%s1629 + $0x68] sm:$0xff]
        %v1644 = vld [vmem:[%s1629 + $0x70] sm:$0xff]
        %v1645 = vld [vmem:[%s1629 + $0x78] sm:$0xff]
        %v1646 = vsel %vm344, %v1610, 0.0
        %1647 = vadd.xlane.f32.xlu0 %v1646
        %v1648 = vpop.xlane.xlu0 %1647
        %v1649 = vmul.f32 %v1648, %v348
        %v1650 = vsub.f32 %v1610, %v1649
        %v1651 = vmul.f32 %v1650, %v1650
        %v1652 = vsel %vm344, %v1651, 0.0
        %1653 = vadd.xlane.f32.xlu0 %v1652
        %v1654 = vpop.xlane.xlu0 %1653
        %v1655 = vmul.f32 %v1654, %v348
        %v1656 = vadd.f32 %v1655, 1e-05
        %v1657 = vrsqrt.pop %v1656
        %v1658 = vmul.f32 %v1650, %v1657
        %v1659 = vlaneseq
        %v1660 = vshrl.u32 %v1659, 7
        %v1661 = vsub.s32 0, %v1660
        %v1662 = vrot.slane %v1612, %v1661
        %v1663 = vmul.f32 %v1658, %v1662
        %v1664 = vlaneseq
        %v1665 = vshrl.u32 %v1664, 7
        %v1666 = vsub.s32 1, %v1665
        %v1667 = vrot.slane %v1612, %v1666
        %v1668 = vadd.f32 %v1663, %v1667
        %v1670 = vsel %vm344, %v1668, 0
        %1672 = vmatprep.subr.mxu0 0.0
        %1673 = vmatpush1.msra.mxu0 %v1615
        %1674 = vmatprep.subr.mxu0 0.0
        %1675 = vmatpush1.msra.mxu0 %v1616
        %1676 = vmatprep.subr.mxu0 0.0
        %1677 = vmatpush1.msra.mxu0 %v1617
        %1678 = vmatprep.subr.mxu0 0.0
        %1679 = vmatpush1.msra.mxu0 %v1618
        %1680 = vmatprep.subr.mxu0 0.0
        %1681 = vmatpush1.msra.mxu0 0.0
        %1682 = vmatprep.subr.mxu0 0.0
        %1683 = vmatpush1.msra.mxu0 0.0
        %1684 = vmatprep.subr.mxu0 0.0
        %1685 = vmatpush1.msra.mxu0 0.0
        %1686 = vmatprep.subr.mxu0 0.0
        %1687 = vmatpush1.msra.mxu0 0.0
        %1688 = vmatprep.subr.mxu0 0.0
        %1689 = vmatpush1.msra.mxu0 0.0
        %1690 = vmatprep.subr.mxu0 0.0
        %1691 = vmatpush1.msra.mxu0 0.0
        %1692 = vmatprep.subr.mxu0 0.0
        %1693 = vmatpush1.msra.mxu0 0.0
        %1694 = vmatprep.subr.mxu0 0.0
        %1695 = vmatpush1.msra.mxu0 0.0
        %1696 = vmatprep.subr.mxu0 0.0
        %1697 = vmatpush1.msra.mxu0 0.0
        %1698 = vmatprep.subr.mxu0 0.0
        %1699 = vmatpush1.msra.mxu0 0.0
        %1700 = vmatprep.subr.mxu0 0.0
        %1701 = vmatpush1.msra.mxu0 0.0
        %1702 = vmatprep.subr.mxu0 0.0
        %1703 = vmatpush1.msra.mxu0 0.0
        %1704 = vmatprep.subr.mxu0 0.0
        %1705 = vmatpush1.msra.mxu0 0.0
        %1706 = vmatprep.subr.mxu0 0.0
        %1707 = vmatpush1.msra.mxu0 0.0
        %1708 = vmatprep.subr.mxu0 0.0
        %1709 = vmatpush1.msra.mxu0 0.0
        %1710 = vmatprep.subr.mxu0 0.0
        %1711 = vmatpush1.msra.mxu0 0.0
        %1712 = vmatprep.subr.mxu0 0.0
        %1713 = vmatpush1.msra.mxu0 0.0
        %1714 = vmatprep.subr.mxu0 0.0
        %1715 = vmatpush1.msra.mxu0 0.0
        %1716 = vmatprep.subr.mxu0 0.0
        %1717 = vmatpush1.msra.mxu0 0.0
        %1718 = vmatprep.subr.mxu0 0.0
        %1719 = vmatpush1.msra.mxu0 0.0
        %1720 = vmatprep.subr.mxu0 0.0
        %1721 = vmatpush1.msra.mxu0 0.0
        %1722 = vmatprep.subr.mxu0 0.0
        %1723 = vmatpush1.msra.mxu0 0.0
        %1724 = vmatprep.subr.mxu0 0.0
        %1725 = vmatpush1.msra.mxu0 0.0
        %1726 = vmatprep.subr.mxu0 0.0
        %1727 = vmatpush1.msra.mxu0 0.0
        %1728 = vmatprep.subr.mxu0 0.0
        %1729 = vmatpush1.msra.mxu0 0.0
        %1730 = vmatprep.subr.mxu0 0.0
        %1731 = vmatpush1.msra.mxu0 0.0
        %1732 = vmatprep.subr.mxu0 0.0
        %1733 = vmatpush1.msra.mxu0 0.0
        %1734 = vmatprep.subr.mxu0 0.0
        %1735 = vmatpush1.msra.mxu0 0.0
        %1736 = vmatprep.mubr.f32.mxu0 0.0
        %1737 = vmatmul.mubr.f32.gmra.mrb[0].mxu0 %v1670
        %v1738 = vpop.f32.mrb[0].mxu0
        %v1739 = vadd.f32 0.0, %v1738
        %v1740 = vpop.f32.mrb[0].mxu0
        %1741 = vdwg.mxu0
        %v1742 = vlaneseq
        %v1743 = vshrl.u32 %v1742, 7
        %v1744 = vsub.s32 6, %v1743
        %v1745 = vrot.slane %v1612, %v1744
        %v1746 = vadd.f32 %v1739, %v1745
        %v1747 = vlaneseq
        %v1748 = vshrl.u32 %v1747, 7
        %v1749 = vsub.s32 7, %v1748
        %v1750 = vrot.slane %v1612, %v1749
        %1752 = vrot.lane.b32.xlu0 %v1750, 32
        %v1753 = vpop.permute.xlu0 %1752
        %v1755 = vadd.f32 %v1739, %v1753
        %v1756 = vlaneseq
        %v1757 = vshrl.u32 %v1756, 7
        %v1758 = vsub.s32 0, %v1757
        %v1759 = vrot.slane %v1613, %v1758
        %1761 = vrot.lane.b32.xlu0 %v1759, 64
        %v1762 = vpop.permute.xlu0 %1761
        %v1764 = vadd.f32 %v1739, %v1762
        %1766 = vrot.lane.b32.xlu0 %v1755, 96
        %v1767 = vpop.permute.xlu0 %1766
        %v1769 = vsel %vm468, %v1746, 0
        %v1771 = vsel %vm468, %v1767, 0
        %1773 = vmatprep.subr.mxu0 0.0
        %1774 = vmatpush1.xpose.msra.mxu0 %v1771
        %1775 = vmatprep.subr.mxu0 0.0
        %1776 = vmatpush1.xpose.msra.mxu0 0.0
        %1777 = vmatprep.subr.mxu0 0.0
        %1778 = vmatpush1.xpose.msra.mxu0 0.0
        %1779 = vmatprep.subr.mxu0 0.0
        %1780 = vmatpush1.xpose.msra.mxu0 0.0
        %1781 = vmatprep.subr.mxu0 0.0
        %1782 = vmatpush1.xpose.msra.mxu0 0.0
        %1783 = vmatprep.subr.mxu0 0.0
        %1784 = vmatpush1.xpose.msra.mxu0 0.0
        %1785 = vmatprep.subr.mxu0 0.0
        %1786 = vmatpush1.xpose.msra.mxu0 0.0
        %1787 = vmatprep.subr.mxu0 0.0
        %1788 = vmatpush1.xpose.msra.mxu0 0.0
        %1789 = vmatprep.subr.mxu0 0.0
        %1790 = vmatpush1.xpose.msra.mxu0 0.0
        %1791 = vmatprep.subr.mxu0 0.0
        %1792 = vmatpush1.xpose.msra.mxu0 0.0
        %1793 = vmatprep.subr.mxu0 0.0
        %1794 = vmatpush1.xpose.msra.mxu0 0.0
        %1795 = vmatprep.subr.mxu0 0.0
        %1796 = vmatpush1.xpose.msra.mxu0 0.0
        %1797 = vmatprep.subr.mxu0 0.0
        %1798 = vmatpush1.xpose.msra.mxu0 0.0
        %1799 = vmatprep.subr.mxu0 0.0
        %1800 = vmatpush1.xpose.msra.mxu0 0.0
        %1801 = vmatprep.subr.mxu0 0.0
        %1802 = vmatpush1.xpose.msra.mxu0 0.0
        %1803 = vmatprep.subr.mxu0 0.0
        %1804 = vmatpush1.xpose.msra.mxu0 0.0
        %1805 = vmatprep.subr.mxu0 0.0
        %1806 = vmatpush1.xpose.msra.mxu0 0.0
        %1807 = vmatprep.subr.mxu0 0.0
        %1808 = vmatpush1.xpose.msra.mxu0 0.0
        %1809 = vmatprep.subr.mxu0 0.0
        %1810 = vmatpush1.xpose.msra.mxu0 0.0
        %1811 = vmatprep.subr.mxu0 0.0
        %1812 = vmatpush1.xpose.msra.mxu0 0.0
        %1813 = vmatprep.subr.mxu0 0.0
        %1814 = vmatpush1.xpose.msra.mxu0 0.0
        %1815 = vmatprep.subr.mxu0 0.0
        %1816 = vmatpush1.xpose.msra.mxu0 0.0
        %1817 = vmatprep.subr.mxu0 0.0
        %1818 = vmatpush1.xpose.msra.mxu0 0.0
        %1819 = vmatprep.subr.mxu0 0.0
        %1820 = vmatpush1.xpose.msra.mxu0 0.0
        %1821 = vmatprep.subr.mxu0 0.0
        %1822 = vmatpush1.xpose.msra.mxu0 0.0
        %1823 = vmatprep.subr.mxu0 0.0
        %1824 = vmatpush1.xpose.msra.mxu0 0.0
        %1825 = vmatprep.subr.mxu0 0.0
        %1826 = vmatpush1.xpose.msra.mxu0 0.0
        %1827 = vmatprep.subr.mxu0 0.0
        %1828 = vmatpush1.xpose.msra.mxu0 0.0
        %1829 = vmatprep.subr.mxu0 0.0
        %1830 = vmatpush1.xpose.msra.mxu0 0.0
        %1831 = vmatprep.subr.mxu0 0.0
        %1832 = vmatpush1.xpose.msra.mxu0 0.0
        %1833 = vmatprep.subr.mxu0 0.0
        %1834 = vmatpush1.xpose.msra.mxu0 0.0
        %1835 = vmatprep.subr.mxu0 0.0
        %1836 = vmatpush1.xpose.msra.mxu0 0.0
        %1837 = vmatprep.mubr.f32.mxu0 0.0
        %1838 = vmatmul.mubr.f32.gmra.mrb[0].mxu0 %v1769
        %v1839 = vpop.f32.mrb[0].mxu0
        %v1840 = vadd.f32 %v313, %v1839
        %v1841 = vpop.f32.mrb[0].mxu0
        %1842 = vdwg.mxu0
        %v1843 = vsel %vm468, %v1840, -inf
        %1844 = vmax.xlane.f32.xlu0 %v1843
        %v1845 = vpop.xlane.xlu0 %1844
        %v1846 = vsub.f32 %v1840, %v1845
        %v1847 = vmul.f32 %v1846, 1.442695
        %v1848 = vpow.pop %v1847
        %v1849 = vsel %vm468, %v1848, 0.0
        %1850 = vadd.xlane.f32.xlu0 %v1849
        %v1851 = vpop.xlane.xlu0 %1850
        %v1852 = vrcp.pop %v1851
        %v1853 = vmul.f32 %v1848, %v1852
        %1855 = vrot.lane.b32.xlu0 %v1764, 64
        %v1856 = vpop.permute.xlu0 %1855
        %v1859 = vsel %vm468, %v1853, 0
        %1861 = vmatprep.subr.mxu0 0.0
        %1862 = vmatpush1.msra.mxu0 %v1856
        %1863 = vmatprep.subr.mxu0 0.0
        %1864 = vmatpush1.msra.mxu0 0.0
        %1865 = vmatprep.subr.mxu0 0.0
        %1866 = vmatpush1.msra.mxu0 0.0
        %1867 = vmatprep.subr.mxu0 0.0
        %1868 = vmatpush1.msra.mxu0 0.0
        %1869 = vmatprep.subr.mxu0 0.0
        %1870 = vmatpush1.msra.mxu0 0.0
        %1871 = vmatprep.subr.mxu0 0.0
        %1872 = vmatpush1.msra.mxu0 0.0
        %1873 = vmatprep.subr.mxu0 0.0
        %1874 = vmatpush1.msra.mxu0 0.0
        %1875 = vmatprep.subr.mxu0 0.0
        %1876 = vmatpush1.msra.mxu0 0.0
        %1877 = vmatprep.subr.mxu0 0.0
        %1878 = vmatpush1.msra.mxu0 0.0
        %1879 = vmatprep.subr.mxu0 0.0
        %1880 = vmatpush1.msra.mxu0 0.0
        %1881 = vmatprep.subr.mxu0 0.0
        %1882 = vmatpush1.msra.mxu0 0.0
        %1883 = vmatprep.subr.mxu0 0.0
        %1884 = vmatpush1.msra.mxu0 0.0
        %1885 = vmatprep.subr.mxu0 0.0
        %1886 = vmatpush1.msra.mxu0 0.0
        %1887 = vmatprep.subr.mxu0 0.0
        %1888 = vmatpush1.msra.mxu0 0.0
        %1889 = vmatprep.subr.mxu0 0.0
        %1890 = vmatpush1.msra.mxu0 0.0
        %1891 = vmatprep.subr.mxu0 0.0
        %1892 = vmatpush1.msra.mxu0 0.0
        %1893 = vmatprep.subr.mxu0 0.0
        %1894 = vmatpush1.msra.mxu0 0.0
        %1895 = vmatprep.subr.mxu0 0.0
        %1896 = vmatpush1.msra.mxu0 0.0
        %1897 = vmatprep.subr.mxu0 0.0
        %1898 = vmatpush1.msra.mxu0 0.0
        %1899 = vmatprep.subr.mxu0 0.0
        %1900 = vmatpush1.msra.mxu0 0.0
        %1901 = vmatprep.subr.mxu0 0.0
        %1902 = vmatpush1.msra.mxu0 0.0
        %1903 = vmatprep.subr.mxu0 0.0
        %1904 = vmatpush1.msra.mxu0 0.0
        %1905 = vmatprep.subr.mxu0 0.0
        %1906 = vmatpush1.msra.mxu0 0.0
        %1907 = vmatprep.subr.mxu0 0.0
        %1908 = vmatpush1.msra.mxu0 0.0
        %1909 = vmatprep.subr.mxu0 0.0
        %1910 = vmatpush1.msra.mxu0 0.0
        %1911 = vmatprep.subr.mxu0 0.0
        %1912 = vmatpush1.msra.mxu0 0.0
        %1913 = vmatprep.subr.mxu0 0.0
        %1914 = vmatpush1.msra.mxu0 0.0
        %1915 = vmatprep.subr.mxu0 0.0
        %1916 = vmatpush1.msra.mxu0 0.0
        %1917 = vmatprep.subr.mxu0 0.0
        %1918 = vmatpush1.msra.mxu0 0.0
        %1919 = vmatprep.subr.mxu0 0.0
        %1920 = vmatpush1.msra.mxu0 0.0
        %1921 = vmatprep.subr.mxu0 0.0
        %1922 = vmatpush1.msra.mxu0 0.0
        %1923 = vmatprep.subr.mxu0 0.0
        %1924 = vmatpush1.msra.mxu0 0.0
        %1925 = vmatprep.mubr.f32.mxu0 0.0
        %1926 = vmatmul.mubr.f32.gmra.mrb[0].mxu0 %v1859
        %v1927 = vpop.f32.mrb[0].mxu0
        %v1928 = vadd.f32 0.0, %v1927
        %v1929 = vpop.f32.mrb[0].mxu0
        %1930 = vdwg.mxu0
        %1931 = vrot.lane.b32.xlu0 %v1746, 120
        %v1932 = vpop.permute.xlu0 %1931
        %1933 = vrot.lane.b32.xlu0 %v1755, 88
        %v1934 = vpop.permute.xlu0 %1933
        %v1935 = vsel %vm468, %v1932, 0
        %v1937 = vsel %vm468, %v1934, 0
        %1939 = vmatprep.subr.mxu0 0.0
        %1940 = vmatpush1.xpose.msra.mxu0 %v1937
        %1941 = vmatprep.subr.mxu0 0.0
        %1942 = vmatpush1.xpose.msra.mxu0 0.0
        %1943 = vmatprep.subr.mxu0 0.0
        %1944 = vmatpush1.xpose.msra.mxu0 0.0
        %1945 = vmatprep.subr.mxu0 0.0
        %1946 = vmatpush1.xpose.msra.mxu0 0.0
        %1947 = vmatprep.subr.mxu0 0.0
        %1948 = vmatpush1.xpose.msra.mxu0 0.0
        %1949 = vmatprep.subr.mxu0 0.0
        %1950 = vmatpush1.xpose.msra.mxu0 0.0
        %1951 = vmatprep.subr.mxu0 0.0
        %1952 = vmatpush1.xpose.msra.mxu0 0.0
        %1953 = vmatprep.subr.mxu0 0.0
        %1954 = vmatpush1.xpose.msra.mxu0 0.0
        %1955 = vmatprep.subr.mxu0 0.0
        %1956 = vmatpush1.xpose.msra.mxu0 0.0
        %1957 = vmatprep.subr.mxu0 0.0
        %1958 = vmatpush1.xpose.msra.mxu0 0.0
        %1959 = vmatprep.subr.mxu0 0.0
        %1960 = vmatpush1.xpose.msra.mxu0 0.0
        %1961 = vmatprep.subr.mxu0 0.0
        %1962 = vmatpush1.xpose.msra.mxu0 0.0
        %1963 = vmatprep.subr.mxu0 0.0
        %1964 = vmatpush1.xpose.msra.mxu0 0.0
        %1965 = vmatprep.subr.mxu0 0.0
        %1966 = vmatpush1.xpose.msra.mxu0 0.0
        %1967 = vmatprep.subr.mxu0 0.0
        %1968 = vmatpush1.xpose.msra.mxu0 0.0
        %1969 = vmatprep.subr.mxu0 0.0
        %1970 = vmatpush1.xpose.msra.mxu0 0.0
        %1971 = vmatprep.subr.mxu0 0.0
        %1972 = vmatpush1.xpose.msra.mxu0 0.0
        %1973 = vmatprep.subr.mxu0 0.0
        %1974 = vmatpush1.xpose.msra.mxu0 0.0
        %1975 = vmatprep.subr.mxu0 0.0
        %1976 = vmatpush1.xpose.msra.mxu0 0.0
        %1977 = vmatprep.subr.mxu0 0.0
        %1978 = vmatpush1.xpose.msra.mxu0 0.0
        %1979 = vmatprep.subr.mxu0 0.0
        %1980 = vmatpush1.xpose.msra.mxu0 0.0
        %1981 = vmatprep.subr.mxu0 0.0
        %1982 = vmatpush1.xpose.msra.mxu0 0.0
        %1983 = vmatprep.subr.mxu0 0.0
        %1984 = vmatpush1.xpose.msra.mxu0 0.0
        %1985 = vmatprep.subr.mxu0 0.0
        %1986 = vmatpush1.xpose.msra.mxu0 0.0
        %1987 = vmatprep.subr.mxu0 0.0
        %1988 = vmatpush1.xpose.msra.mxu0 0.0
        %1989 = vmatprep.subr.mxu0 0.0
        %1990 = vmatpush1.xpose.msra.mxu0 0.0
        %1991 = vmatprep.subr.mxu0 0.0
        %1992 = vmatpush1.xpose.msra.mxu0 0.0
        %1993 = vmatprep.subr.mxu0 0.0
        %1994 = vmatpush1.xpose.msra.mxu0 0.0
        %1995 = vmatprep.subr.mxu0 0.0
        %1996 = vmatpush1.xpose.msra.mxu0 0.0
        %1997 = vmatprep.subr.mxu0 0.0
        %1998 = vmatpush1.xpose.msra.mxu0 0.0
        %1999 = vmatprep.subr.mxu0 0.0
        %2000 = vmatpush1.xpose.msra.mxu0 0.0
        %2001 = vmatprep.subr.mxu0 0.0
        %2002 = vmatpush1.xpose.msra.mxu0 0.0
        %2003 = vmatprep.mubr.f32.mxu0 0.0
        %2004 = vmatmul.mubr.f32.gmra.mrb[0].mxu0 %v1935
        %v2005 = vpop.f32.mrb[0].mxu0
        %v2006 = vadd.f32 %v313, %v2005
        %v2007 = vpop.f32.mrb[0].mxu0
        %2008 = vdwg.mxu0
        %v2009 = vsel %vm468, %v2006, -inf
        %2010 = vmax.xlane.f32.xlu0 %v2009
        %v2011 = vpop.xlane.xlu0 %2010
        %v2012 = vsub.f32 %v2006, %v2011
        %v2013 = vmul.f32 %v2012, 1.442695
        %v2014 = vpow.pop %v2013
        %v2015 = vsel %vm468, %v2014, 0.0
        %2016 = vadd.xlane.f32.xlu0 %v2015
        %v2017 = vpop.xlane.xlu0 %2016
        %v2018 = vrcp.pop %v2017
        %v2019 = vmul.f32 %v2014, %v2018
        %2020 = vrot.lane.b32.xlu0 %v1764, 56
        %v2021 = vpop.permute.xlu0 %2020
        %v2024 = vsel %vm468, %v2019, 0
        %2026 = vmatprep.subr.mxu0 0.0
        %2027 = vmatpush1.msra.mxu0 %v2021
        %2028 = vmatprep.subr.mxu0 0.0
        %2029 = vmatpush1.msra.mxu0 0.0
        %2030 = vmatprep.subr.mxu0 0.0
        %2031 = vmatpush1.msra.mxu0 0.0
        %2032 = vmatprep.subr.mxu0 0.0
        %2033 = vmatpush1.msra.mxu0 0.0
        %2034 = vmatprep.subr.mxu0 0.0
        %2035 = vmatpush1.msra.mxu0 0.0
        %2036 = vmatprep.subr.mxu0 0.0
        %2037 = vmatpush1.msra.mxu0 0.0
        %2038 = vmatprep.subr.mxu0 0.0
        %2039 = vmatpush1.msra.mxu0 0.0
        %2040 = vmatprep.subr.mxu0 0.0
        %2041 = vmatpush1.msra.mxu0 0.0
        %2042 = vmatprep.subr.mxu0 0.0
        %2043 = vmatpush1.msra.mxu0 0.0
        %2044 = vmatprep.subr.mxu0 0.0
        %2045 = vmatpush1.msra.mxu0 0.0
        %2046 = vmatprep.subr.mxu0 0.0
        %2047 = vmatpush1.msra.mxu0 0.0
        %2048 = vmatprep.subr.mxu0 0.0
        %2049 = vmatpush1.msra.mxu0 0.0
        %2050 = vmatprep.subr.mxu0 0.0
        %2051 = vmatpush1.msra.mxu0 0.0
        %2052 = vmatprep.subr.mxu0 0.0
        %2053 = vmatpush1.msra.mxu0 0.0
        %2054 = vmatprep.subr.mxu0 0.0
        %2055 = vmatpush1.msra.mxu0 0.0
        %2056 = vmatprep.subr.mxu0 0.0
        %2057 = vmatpush1.msra.mxu0 0.0
        %2058 = vmatprep.subr.mxu0 0.0
        %2059 = vmatpush1.msra.mxu0 0.0
        %2060 = vmatprep.subr.mxu0 0.0
        %2061 = vmatpush1.msra.mxu0 0.0
        %2062 = vmatprep.subr.mxu0 0.0
        %2063 = vmatpush1.msra.mxu0 0.0
        %2064 = vmatprep.subr.mxu0 0.0
        %2065 = vmatpush1.msra.mxu0 0.0
        %2066 = vmatprep.subr.mxu0 0.0
        %2067 = vmatpush1.msra.mxu0 0.0
        %2068 = vmatprep.subr.mxu0 0.0
        %2069 = vmatpush1.msra.mxu0 0.0
        %2070 = vmatprep.subr.mxu0 0.0
        %2071 = vmatpush1.msra.mxu0 0.0
        %2072 = vmatprep.subr.mxu0 0.0
        %2073 = vmatpush1.msra.mxu0 0.0
        %2074 = vmatprep.subr.mxu0 0.0
        %2075 = vmatpush1.msra.mxu0 0.0
        %2076 = vmatprep.subr.mxu0 0.0
        %2077 = vmatpush1.msra.mxu0 0.0
        %2078 = vmatprep.subr.mxu0 0.0
        %2079 = vmatpush1.msra.mxu0 0.0
        %2080 = vmatprep.subr.mxu0 0.0
        %2081 = vmatpush1.msra.mxu0 0.0
        %2082 = vmatprep.subr.mxu0 0.0
        %2083 = vmatpush1.msra.mxu0 0.0
        %2084 = vmatprep.subr.mxu0 0.0
        %2085 = vmatpush1.msra.mxu0 0.0
        %2086 = vmatprep.subr.mxu0 0.0
        %2087 = vmatpush1.msra.mxu0 0.0
        %2088 = vmatprep.subr.mxu0 0.0
        %2089 = vmatpush1.msra.mxu0 0.0
        %2090 = vmatprep.mubr.f32.mxu0 0.0
        %2091 = vmatmul.mubr.f32.gmra.mrb[0].mxu0 %v2024
        %v2092 = vpop.f32.mrb[0].mxu0
        %v2093 = vadd.f32 0.0, %v2092
        %v2094 = vpop.f32.mrb[0].mxu0
        %2095 = vdwg.mxu0
        %v2097 = vsel %vm468, %v2093, 0
        %2099 = vmatprep.subr.mxu0 0.0
        %2100 = vmatpush1.msra.mxu0 %v1621
        %2101 = vmatprep.subr.mxu0 0.0
        %2102 = vmatpush1.msra.mxu0 0.0
        %2103 = vmatprep.subr.mxu0 0.0
        %2104 = vmatpush1.msra.mxu0 0.0
        %2105 = vmatprep.subr.mxu0 0.0
        %2106 = vmatpush1.msra.mxu0 0.0
        %2107 = vmatprep.subr.mxu0 0.0
        %2108 = vmatpush1.msra.mxu0 0.0
        %2109 = vmatprep.subr.mxu0 0.0
        %2110 = vmatpush1.msra.mxu0 0.0
        %2111 = vmatprep.subr.mxu0 0.0
        %2112 = vmatpush1.msra.mxu0 0.0
        %2113 = vmatprep.subr.mxu0 0.0
        %2114 = vmatpush1.msra.mxu0 0.0
        %2115 = vmatprep.subr.mxu0 0.0
        %2116 = vmatpush1.msra.mxu0 0.0
        %2117 = vmatprep.subr.mxu0 0.0
        %2118 = vmatpush1.msra.mxu0 0.0
        %2119 = vmatprep.subr.mxu0 0.0
        %2120 = vmatpush1.msra.mxu0 0.0
        %2121 = vmatprep.subr.mxu0 0.0
        %2122 = vmatpush1.msra.mxu0 0.0
        %2123 = vmatprep.subr.mxu0 0.0
        %2124 = vmatpush1.msra.mxu0 0.0
        %2125 = vmatprep.subr.mxu0 0.0
        %2126 = vmatpush1.msra.mxu0 0.0
        %2127 = vmatprep.subr.mxu0 0.0
        %2128 = vmatpush1.msra.mxu0 0.0
        %2129 = vmatprep.subr.mxu0 0.0
        %2130 = vmatpush1.msra.mxu0 0.0
        %2131 = vmatprep.subr.mxu0 0.0
        %2132 = vmatpush1.msra.mxu0 0.0
        %2133 = vmatprep.subr.mxu0 0.0
        %2134 = vmatpush1.msra.mxu0 0.0
        %2135 = vmatprep.subr.mxu0 0.0
        %2136 = vmatpush1.msra.mxu0 0.0
        %2137 = vmatprep.subr.mxu0 0.0
        %2138 = vmatpush1.msra.mxu0 0.0
        %2139 = vmatprep.subr.mxu0 0.0
        %2140 = vmatpush1.msra.mxu0 0.0
        %2141 = vmatprep.subr.mxu0 0.0
        %2142 = vmatpush1.msra.mxu0 0.0
        %2143 = vmatprep.subr.mxu0 0.0
        %2144 = vmatpush1.msra.mxu0 0.0
        %2145 = vmatprep.subr.mxu0 0.0
        %2146 = vmatpush1.msra.mxu0 0.0
        %2147 = vmatprep.subr.mxu0 0.0
        %2148 = vmatpush1.msra.mxu0 0.0
        %2149 = vmatprep.subr.mxu0 0.0
        %2150 = vmatpush1.msra.mxu0 0.0
        %2151 = vmatprep.subr.mxu0 0.0
        %2152 = vmatpush1.msra.mxu0 0.0
        %2153 = vmatprep.subr.mxu0 0.0
        %2154 = vmatpush1.msra.mxu0 0.0
        %2155 = vmatprep.subr.mxu0 0.0
        %2156 = vmatpush1.msra.mxu0 0.0
        %2157 = vmatprep.subr.mxu0 0.0
        %2158 = vmatpush1.msra.mxu0 0.0
        %2159 = vmatprep.subr.mxu0 0.0
        %2160 = vmatpush1.msra.mxu0 0.0
        %2161 = vmatprep.subr.mxu0 0.0
        %2162 = vmatpush1.msra.mxu0 0.0
        %2163 = vmatprep.mubr.f32.mxu0 0.0
        %2164 = vmatmul.mubr.f32.gmra.mrb[0].mxu0 %v2097
        %v2165 = vpop.f32.mrb[0].mxu0
        %v2166 = vadd.f32 0.0, %v2165
        %v2167 = vpop.f32.mrb[0].mxu0
        %2168 = vdwg.mxu0
        %v2170 = vsel %vm468, %v1928, 0
        %2172 = vmatprep.subr.mxu0 0.0
        %2173 = vmatpush1.msra.mxu0 %v1620
        %2174 = vmatprep.subr.mxu0 0.0
        %2175 = vmatpush1.msra.mxu0 0.0
        %2176 = vmatprep.subr.mxu0 0.0
        %2177 = vmatpush1.msra.mxu0 0.0
        %2178 = vmatprep.subr.mxu0 0.0
        %2179 = vmatpush1.msra.mxu0 0.0
        %2180 = vmatprep.subr.mxu0 0.0
        %2181 = vmatpush1.msra.mxu0 0.0
        %2182 = vmatprep.subr.mxu0 0.0
        %2183 = vmatpush1.msra.mxu0 0.0
        %2184 = vmatprep.subr.mxu0 0.0
        %2185 = vmatpush1.msra.mxu0 0.0
        %2186 = vmatprep.subr.mxu0 0.0
        %2187 = vmatpush1.msra.mxu0 0.0
        %2188 = vmatprep.subr.mxu0 0.0
        %2189 = vmatpush1.msra.mxu0 0.0
        %2190 = vmatprep.subr.mxu0 0.0
        %2191 = vmatpush1.msra.mxu0 0.0
        %2192 = vmatprep.subr.mxu0 0.0
        %2193 = vmatpush1.msra.mxu0 0.0
        %2194 = vmatprep.subr.mxu0 0.0
        %2195 = vmatpush1.msra.mxu0 0.0
        %2196 = vmatprep.subr.mxu0 0.0
        %2197 = vmatpush1.msra.mxu0 0.0
        %2198 = vmatprep.subr.mxu0 0.0
        %2199 = vmatpush1.msra.mxu0 0.0
        %2200 = vmatprep.subr.mxu0 0.0
        %2201 = vmatpush1.msra.mxu0 0.0
        %2202 = vmatprep.subr.mxu0 0.0
        %2203 = vmatpush1.msra.mxu0 0.0
        %2204 = vmatprep.subr.mxu0 0.0
        %2205 = vmatpush1.msra.mxu0 0.0
        %2206 = vmatprep.subr.mxu0 0.0
        %2207 = vmatpush1.msra.mxu0 0.0
        %2208 = vmatprep.subr.mxu0 0.0
        %2209 = vmatpush1.msra.mxu0 0.0
        %2210 = vmatprep.subr.mxu0 0.0
        %2211 = vmatpush1.msra.mxu0 0.0
        %2212 = vmatprep.subr.mxu0 0.0
        %2213 = vmatpush1.msra.mxu0 0.0
        %2214 = vmatprep.subr.mxu0 0.0
        %2215 = vmatpush1.msra.mxu0 0.0
        %2216 = vmatprep.subr.mxu0 0.0
        %2217 = vmatpush1.msra.mxu0 0.0
        %2218 = vmatprep.subr.mxu0 0.0
        %2219 = vmatpush1.msra.mxu0 0.0
        %2220 = vmatprep.subr.mxu0 0.0
        %2221 = vmatpush1.msra.mxu0 0.0
        %2222 = vmatprep.subr.mxu0 0.0
        %2223 = vmatpush1.msra.mxu0 0.0
        %2224 = vmatprep.subr.mxu0 0.0
        %2225 = vmatpush1.msra.mxu0 0.0
        %2226 = vmatprep.subr.mxu0 0.0
        %2227 = vmatpush1.msra.mxu0 0.0
        %2228 = vmatprep.subr.mxu0 0.0
        %2229 = vmatpush1.msra.mxu0 0.0
        %2230 = vmatprep.subr.mxu0 0.0
        %2231 = vmatpush1.msra.mxu0 0.0
        %2232 = vmatprep.subr.mxu0 0.0
        %2233 = vmatpush1.msra.mxu0 0.0
        %2234 = vmatprep.subr.mxu0 0.0
        %2235 = vmatpush1.msra.mxu0 0.0
        %2236 = vmatprep.mubr.f32.mxu0 0.0
        %2237 = vmatmul.mubr.f32.gmra.mrb[0].mxu0 %v2170
        %v2238 = vpop.f32.mrb[0].mxu0
        %v2239 = vadd.f32 %v2166, %v2238
        %v2240 = vpop.f32.mrb[0].mxu0
        %2241 = vdwg.mxu0
        %2242 = vrot.lane.b32.xlu0 %v1746, 112
        %v2243 = vpop.permute.xlu0 %2242
        %2244 = vrot.lane.b32.xlu0 %v1755, 80
        %v2245 = vpop.permute.xlu0 %2244
        %v2246 = vsel %vm468, %v2243, 0
        %v2248 = vsel %vm468, %v2245, 0
        %2250 = vmatprep.subr.mxu0 0.0
        %2251 = vmatpush1.xpose.msra.mxu0 %v2248
        %2252 = vmatprep.subr.mxu0 0.0
        %2253 = vmatpush1.xpose.msra.mxu0 0.0
        %2254 = vmatprep.subr.mxu0 0.0
        %2255 = vmatpush1.xpose.msra.mxu0 0.0
        %2256 = vmatprep.subr.mxu0 0.0
        %2257 = vmatpush1.xpose.msra.mxu0 0.0
        %2258 = vmatprep.subr.mxu0 0.0
        %2259 = vmatpush1.xpose.msra.mxu0 0.0
        %2260 = vmatprep.subr.mxu0 0.0
        %2261 = vmatpush1.xpose.msra.mxu0 0.0
        %2262 = vmatprep.subr.mxu0 0.0
        %2263 = vmatpush1.xpose.msra.mxu0 0.0
        %2264 = vmatprep.subr.mxu0 0.0
        %2265 = vmatpush1.xpose.msra.mxu0 0.0
        %2266 = vmatprep.subr.mxu0 0.0
        %2267 = vmatpush1.xpose.msra.mxu0 0.0
        %2268 = vmatprep.subr.mxu0 0.0
        %2269 = vmatpush1.xpose.msra.mxu0 0.0
        %2270 = vmatprep.subr.mxu0 0.0
        %2271 = vmatpush1.xpose.msra.mxu0 0.0
        %2272 = vmatprep.subr.mxu0 0.0
        %2273 = vmatpush1.xpose.msra.mxu0 0.0
        %2274 = vmatprep.subr.mxu0 0.0
        %2275 = vmatpush1.xpose.msra.mxu0 0.0
        %2276 = vmatprep.subr.mxu0 0.0
        %2277 = vmatpush1.xpose.msra.mxu0 0.0
        %2278 = vmatprep.subr.mxu0 0.0
        %2279 = vmatpush1.xpose.msra.mxu0 0.0
        %2280 = vmatprep.subr.mxu0 0.0
        %2281 = vmatpush1.xpose.msra.mxu0 0.0
        %2282 = vmatprep.subr.mxu0 0.0
        %2283 = vmatpush1.xpose.msra.mxu0 0.0
        %2284 = vmatprep.subr.mxu0 0.0
        %2285 = vmatpush1.xpose.msra.mxu0 0.0
        %2286 = vmatprep.subr.mxu0 0.0
        %2287 = vmatpush1.xpose.msra.mxu0 0.0
        %2288 = vmatprep.subr.mxu0 0.0
        %2289 = vmatpush1.xpose.msra.mxu0 0.0
        %2290 = vmatprep.subr.mxu0 0.0
        %2291 = vmatpush1.xpose.msra.mxu0 0.0
        %2292 = vmatprep.subr.mxu0 0.0
        %2293 = vmatpush1.xpose.msra.mxu0 0.0
        %2294 = vmatprep.subr.mxu0 0.0
        %2295 = vmatpush1.xpose.msra.mxu0 0.0
        %2296 = vmatprep.subr.mxu0 0.0
        %2297 = vmatpush1.xpose.msra.mxu0 0.0
        %2298 = vmatprep.subr.mxu0 0.0
        %2299 = vmatpush1.xpose.msra.mxu0 0.0
        %2300 = vmatprep.subr.mxu0 0.0
        %2301 = vmatpush1.xpose.msra.mxu0 0.0
        %2302 = vmatprep.subr.mxu0 0.0
        %2303 = vmatpush1.xpose.msra.mxu0 0.0
        %2304 = vmatprep.subr.mxu0 0.0
        %2305 = vmatpush1.xpose.msra.mxu0 0.0
        %2306 = vmatprep.subr.mxu0 0.0
        %2307 = vmatpush1.xpose.msra.mxu0 0.0
        %2308 = vmatprep.subr.mxu0 0.0
        %2309 = vmatpush1.xpose.msra.mxu0 0.0
        %2310 = vmatprep.subr.mxu0 0.0
        %2311 = vmatpush1.xpose.msra.mxu0 0.0
        %2312 = vmatprep.subr.mxu0 0.0
        %2313 = vmatpush1.xpose.msra.mxu0 0.0
        %2314 = vmatprep.mubr.f32.mxu0 0.0
        %2315 = vmatmul.mubr.f32.gmra.mrb[0].mxu0 %v2246
        %v2316 = vpop.f32.mrb[0].mxu0
        %v2317 = vadd.f32 %v313, %v2316
        %v2318 = vpop.f32.mrb[0].mxu0
        %2319 = vdwg.mxu0
        %v2320 = vsel %vm468, %v2317, -inf
        %2321 = vmax.xlane.f32.xlu0 %v2320
        %v2322 = vpop.xlane.xlu0 %2321
        %v2323 = vsub.f32 %v2317, %v2322
        %v2324 = vmul.f32 %v2323, 1.442695
        %v2325 = vpow.pop %v2324
        %v2326 = vsel %vm468, %v2325, 0.0
        %2327 = vadd.xlane.f32.xlu0 %v2326
        %v2328 = vpop.xlane.xlu0 %2327
        %v2329 = vrcp.pop %v2328
        %v2330 = vmul.f32 %v2325, %v2329
        %2331 = vrot.lane.b32.xlu0 %v1764, 48
        %v2332 = vpop.permute.xlu0 %2331
        %v2335 = vsel %vm468, %v2330, 0
        %2337 = vmatprep.subr.mxu0 0.0
        %2338 = vmatpush1.msra.mxu0 %v2332
        %2339 = vmatprep.subr.mxu0 0.0
        %2340 = vmatpush1.msra.mxu0 0.0
        %2341 = vmatprep.subr.mxu0 0.0
        %2342 = vmatpush1.msra.mxu0 0.0
        %2343 = vmatprep.subr.mxu0 0.0
        %2344 = vmatpush1.msra.mxu0 0.0
        %2345 = vmatprep.subr.mxu0 0.0
        %2346 = vmatpush1.msra.mxu0 0.0
        %2347 = vmatprep.subr.mxu0 0.0
        %2348 = vmatpush1.msra.mxu0 0.0
        %2349 = vmatprep.subr.mxu0 0.0
        %2350 = vmatpush1.msra.mxu0 0.0
        %2351 = vmatprep.subr.mxu0 0.0
        %2352 = vmatpush1.msra.mxu0 0.0
        %2353 = vmatprep.subr.mxu0 0.0
        %2354 = vmatpush1.msra.mxu0 0.0
        %2355 = vmatprep.subr.mxu0 0.0
        %2356 = vmatpush1.msra.mxu0 0.0
        %2357 = vmatprep.subr.mxu0 0.0
        %2358 = vmatpush1.msra.mxu0 0.0
        %2359 = vmatprep.subr.mxu0 0.0
        %2360 = vmatpush1.msra.mxu0 0.0
        %2361 = vmatprep.subr.mxu0 0.0
        %2362 = vmatpush1.msra.mxu0 0.0
        %2363 = vmatprep.subr.mxu0 0.0
        %2364 = vmatpush1.msra.mxu0 0.0
        %2365 = vmatprep.subr.mxu0 0.0
        %2366 = vmatpush1.msra.mxu0 0.0
        %2367 = vmatprep.subr.mxu0 0.0
        %2368 = vmatpush1.msra.mxu0 0.0
        %2369 = vmatprep.subr.mxu0 0.0
        %2370 = vmatpush1.msra.mxu0 0.0
        %2371 = vmatprep.subr.mxu0 0.0
        %2372 = vmatpush1.msra.mxu0 0.0
        %2373 = vmatprep.subr.mxu0 0.0
        %2374 = vmatpush1.msra.mxu0 0.0
        %2375 = vmatprep.subr.mxu0 0.0
        %2376 = vmatpush1.msra.mxu0 0.0
        %2377 = vmatprep.subr.mxu0 0.0
        %2378 = vmatpush1.msra.mxu0 0.0
        %2379 = vmatprep.subr.mxu0 0.0
        %2380 = vmatpush1.msra.mxu0 0.0
        %2381 = vmatprep.subr.mxu0 0.0
        %2382 = vmatpush1.msra.mxu0 0.0
        %2383 = vmatprep.subr.mxu0 0.0
        %2384 = vmatpush1.msra.mxu0 0.0
        %2385 = vmatprep.subr.mxu0 0.0
        %2386 = vmatpush1.msra.mxu0 0.0
        %2387 = vmatprep.subr.mxu0 0.0
        %2388 = vmatpush1.msra.mxu0 0.0
        %2389 = vmatprep.subr.mxu0 0.0
        %2390 = vmatpush1.msra.mxu0 0.0
        %2391 = vmatprep.subr.mxu0 0.0
        %2392 = vmatpush1.msra.mxu0 0.0
        %2393 = vmatprep.subr.mxu0 0.0
        %2394 = vmatpush1.msra.mxu0 0.0
        %2395 = vmatprep.subr.mxu0 0.0
        %2396 = vmatpush1.msra.mxu0 0.0
        %2397 = vmatprep.subr.mxu0 0.0
        %2398 = vmatpush1.msra.mxu0 0.0
        %2399 = vmatprep.subr.mxu0 0.0
        %2400 = vmatpush1.msra.mxu0 0.0
        %2401 = vmatprep.mubr.f32.mxu0 0.0
        %2402 = vmatmul.mubr.f32.gmra.mrb[0].mxu0 %v2335
        %v2403 = vpop.f32.mrb[0].mxu0
        %v2404 = vadd.f32 0.0, %v2403
        %v2405 = vpop.f32.mrb[0].mxu0
        %2406 = vdwg.mxu0
        %v2408 = vsel %vm468, %v2404, 0
        %2410 = vmatprep.subr.mxu0 0.0
        %2411 = vmatpush1.msra.mxu0 %v1622
        %2412 = vmatprep.subr.mxu0 0.0
        %2413 = vmatpush1.msra.mxu0 0.0
        %2414 = vmatprep.subr.mxu0 0.0
        %2415 = vmatpush1.msra.mxu0 0.0
        %2416 = vmatprep.subr.mxu0 0.0
        %2417 = vmatpush1.msra.mxu0 0.0
        %2418 = vmatprep.subr.mxu0 0.0
        %2419 = vmatpush1.msra.mxu0 0.0
        %2420 = vmatprep.subr.mxu0 0.0
        %2421 = vmatpush1.msra.mxu0 0.0
        %2422 = vmatprep.subr.mxu0 0.0
        %2423 = vmatpush1.msra.mxu0 0.0
        %2424 = vmatprep.subr.mxu0 0.0
        %2425 = vmatpush1.msra.mxu0 0.0
        %2426 = vmatprep.subr.mxu0 0.0
        %2427 = vmatpush1.msra.mxu0 0.0
        %2428 = vmatprep.subr.mxu0 0.0
        %2429 = vmatpush1.msra.mxu0 0.0
        %2430 = vmatprep.subr.mxu0 0.0
        %2431 = vmatpush1.msra.mxu0 0.0
        %2432 = vmatprep.subr.mxu0 0.0
        %2433 = vmatpush1.msra.mxu0 0.0
        %2434 = vmatprep.subr.mxu0 0.0
        %2435 = vmatpush1.msra.mxu0 0.0
        %2436 = vmatprep.subr.mxu0 0.0
        %2437 = vmatpush1.msra.mxu0 0.0
        %2438 = vmatprep.subr.mxu0 0.0
        %2439 = vmatpush1.msra.mxu0 0.0
        %2440 = vmatprep.subr.mxu0 0.0
        %2441 = vmatpush1.msra.mxu0 0.0
        %2442 = vmatprep.subr.mxu0 0.0
        %2443 = vmatpush1.msra.mxu0 0.0
        %2444 = vmatprep.subr.mxu0 0.0
        %2445 = vmatpush1.msra.mxu0 0.0
        %2446 = vmatprep.subr.mxu0 0.0
        %2447 = vmatpush1.msra.mxu0 0.0
        %2448 = vmatprep.subr.mxu0 0.0
        %2449 = vmatpush1.msra.mxu0 0.0
        %2450 = vmatprep.subr.mxu0 0.0
        %2451 = vmatpush1.msra.mxu0 0.0
        %2452 = vmatprep.subr.mxu0 0.0
        %2453 = vmatpush1.msra.mxu0 0.0
        %2454 = vmatprep.subr.mxu0 0.0
        %2455 = vmatpush1.msra.mxu0 0.0
        %2456 = vmatprep.subr.mxu0 0.0
        %2457 = vmatpush1.msra.mxu0 0.0
        %2458 = vmatprep.subr.mxu0 0.0
        %2459 = vmatpush1.msra.mxu0 0.0
        %2460 = vmatprep.subr.mxu0 0.0
        %2461 = vmatpush1.msra.mxu0 0.0
        %2462 = vmatprep.subr.mxu0 0.0
        %2463 = vmatpush1.msra.mxu0 0.0
        %2464 = vmatprep.subr.mxu0 0.0
        %2465 = vmatpush1.msra.mxu0 0.0
        %2466 = vmatprep.subr.mxu0 0.0
        %2467 = vmatpush1.msra.mxu0 0.0
        %2468 = vmatprep.subr.mxu0 0.0
        %2469 = vmatpush1.msra.mxu0 0.0
        %2470 = vmatprep.subr.mxu0 0.0
        %2471 = vmatpush1.msra.mxu0 0.0
        %2472 = vmatprep.subr.mxu0 0.0
        %2473 = vmatpush1.msra.mxu0 0.0
        %2474 = vmatprep.mubr.f32.mxu0 0.0
        %2475 = vmatmul.mubr.f32.gmra.mrb[0].mxu0 %v2408
        %v2476 = vpop.f32.mrb[0].mxu0
        %v2477 = vadd.f32 0.0, %v2476
        %v2478 = vpop.f32.mrb[0].mxu0
        %2479 = vdwg.mxu0
        %v2480 = vadd.f32 %v2239, %v2477
        %2481 = vrot.lane.b32.xlu0 %v1746, 104
        %v2482 = vpop.permute.xlu0 %2481
        %2483 = vrot.lane.b32.xlu0 %v1755, 72
        %v2484 = vpop.permute.xlu0 %2483
        %v2485 = vsel %vm468, %v2482, 0
        %v2487 = vsel %vm468, %v2484, 0
        %2489 = vmatprep.subr.mxu0 0.0
        %2490 = vmatpush1.xpose.msra.mxu0 %v2487
        %2491 = vmatprep.subr.mxu0 0.0
        %2492 = vmatpush1.xpose.msra.mxu0 0.0
        %2493 = vmatprep.subr.mxu0 0.0
        %2494 = vmatpush1.xpose.msra.mxu0 0.0
        %2495 = vmatprep.subr.mxu0 0.0
        %2496 = vmatpush1.xpose.msra.mxu0 0.0
        %2497 = vmatprep.subr.mxu0 0.0
        %2498 = vmatpush1.xpose.msra.mxu0 0.0
        %2499 = vmatprep.subr.mxu0 0.0
        %2500 = vmatpush1.xpose.msra.mxu0 0.0
        %2501 = vmatprep.subr.mxu0 0.0
        %2502 = vmatpush1.xpose.msra.mxu0 0.0
        %2503 = vmatprep.subr.mxu0 0.0
        %2504 = vmatpush1.xpose.msra.mxu0 0.0
        %2505 = vmatprep.subr.mxu0 0.0
        %2506 = vmatpush1.xpose.msra.mxu0 0.0
        %2507 = vmatprep.subr.mxu0 0.0
        %2508 = vmatpush1.xpose.msra.mxu0 0.0
        %2509 = vmatprep.subr.mxu0 0.0
        %2510 = vmatpush1.xpose.msra.mxu0 0.0
        %2511 = vmatprep.subr.mxu0 0.0
        %2512 = vmatpush1.xpose.msra.mxu0 0.0
        %2513 = vmatprep.subr.mxu0 0.0
        %2514 = vmatpush1.xpose.msra.mxu0 0.0
        %2515 = vmatprep.subr.mxu0 0.0
        %2516 = vmatpush1.xpose.msra.mxu0 0.0
        %2517 = vmatprep.subr.mxu0 0.0
        %2518 = vmatpush1.xpose.msra.mxu0 0.0
        %2519 = vmatprep.subr.mxu0 0.0
        %2520 = vmatpush1.xpose.msra.mxu0 0.0
        %2521 = vmatprep.subr.mxu0 0.0
        %2522 = vmatpush1.xpose.msra.mxu0 0.0
        %2523 = vmatprep.subr.mxu0 0.0
        %2524 = vmatpush1.xpose.msra.mxu0 0.0
        %2525 = vmatprep.subr.mxu0 0.0
        %2526 = vmatpush1.xpose.msra.mxu0 0.0
        %2527 = vmatprep.subr.mxu0 0.0
        %2528 = vmatpush1.xpose.msra.mxu0 0.0
        %2529 = vmatprep.subr.mxu0 0.0
        %2530 = vmatpush1.xpose.msra.mxu0 0.0
        %2531 = vmatprep.subr.mxu0 0.0
        %2532 = vmatpush1.xpose.msra.mxu0 0.0
        %2533 = vmatprep.subr.mxu0 0.0
        %2534 = vmatpush1.xpose.msra.mxu0 0.0
        %2535 = vmatprep.subr.mxu0 0.0
        %2536 = vmatpush1.xpose.msra.mxu0 0.0
        %2537 = vmatprep.subr.mxu0 0.0
        %2538 = vmatpush1.xpose.msra.mxu0 0.0
        %2539 = vmatprep.subr.mxu0 0.0
        %2540 = vmatpush1.xpose.msra.mxu0 0.0
        %2541 = vmatprep.subr.mxu0 0.0
        %2542 = vmatpush1.xpose.msra.mxu0 0.0
        %2543 = vmatprep.subr.mxu0 0.0
        %2544 = vmatpush1.xpose.msra.mxu0 0.0
        %2545 = vmatprep.subr.mxu0 0.0
        %2546 = vmatpush1.xpose.msra.mxu0 0.0
        %2547 = vmatprep.subr.mxu0 0.0
        %2548 = vmatpush1.xpose.msra.mxu0 0.0
        %2549 = vmatprep.subr.mxu0 0.0
        %2550 = vmatpush1.xpose.msra.mxu0 0.0
        %2551 = vmatprep.subr.mxu0 0.0
        %2552 = vmatpush1.xpose.msra.mxu0 0.0
        %2553 = vmatprep.mubr.f32.mxu0 0.0
        %2554 = vmatmul.mubr.f32.gmra.mrb[0].mxu0 %v2485
        %v2555 = vpop.f32.mrb[0].mxu0
        %v2556 = vadd.f32 %v313, %v2555
        %v2557 = vpop.f32.mrb[0].mxu0
        %2558 = vdwg.mxu0
        %v2559 = vsel %vm468, %v2556, -inf
        %2560 = vmax.xlane.f32.xlu0 %v2559
        %v2561 = vpop.xlane.xlu0 %2560
        %v2562 = vsub.f32 %v2556, %v2561
        %v2563 = vmul.f32 %v2562, 1.442695
        %v2564 = vpow.pop %v2563
        %v2565 = vsel %vm468, %v2564, 0.0
        %2566 = vadd.xlane.f32.xlu0 %v2565
        %v2567 = vpop.xlane.xlu0 %2566
        %v2568 = vrcp.pop %v2567
        %v2569 = vmul.f32 %v2564, %v2568
        %2570 = vrot.lane.b32.xlu0 %v1764, 40
        %v2571 = vpop.permute.xlu0 %2570
        %v2574 = vsel %vm468, %v2569, 0
        %2576 = vmatprep.subr.mxu0 0.0
        %2577 = vmatpush1.msra.mxu0 %v2571
        %2578 = vmatprep.subr.mxu0 0.0
        %2579 = vmatpush1.msra.mxu0 0.0
        %2580 = vmatprep.subr.mxu0 0.0
        %2581 = vmatpush1.msra.mxu0 0.0
        %2582 = vmatprep.subr.mxu0 0.0
        %2583 = vmatpush1.msra.mxu0 0.0
        %2584 = vmatprep.subr.mxu0 0.0
        %2585 = vmatpush1.msra.mxu0 0.0
        %2586 = vmatprep.subr.mxu0 0.0
        %2587 = vmatpush1.msra.mxu0 0.0
        %2588 = vmatprep.subr.mxu0 0.0
        %2589 = vmatpush1.msra.mxu0 0.0
        %2590 = vmatprep.subr.mxu0 0.0
        %2591 = vmatpush1.msra.mxu0 0.0
        %2592 = vmatprep.subr.mxu0 0.0
        %2593 = vmatpush1.msra.mxu0 0.0
        %2594 = vmatprep.subr.mxu0 0.0
        %2595 = vmatpush1.msra.mxu0 0.0
        %2596 = vmatprep.subr.mxu0 0.0
        %2597 = vmatpush1.msra.mxu0 0.0
        %2598 = vmatprep.subr.mxu0 0.0
        %2599 = vmatpush1.msra.mxu0 0.0
        %2600 = vmatprep.subr.mxu0 0.0
        %2601 = vmatpush1.msra.mxu0 0.0
        %2602 = vmatprep.subr.mxu0 0.0
        %2603 = vmatpush1.msra.mxu0 0.0
        %2604 = vmatprep.subr.mxu0 0.0
        %2605 = vmatpush1.msra.mxu0 0.0
        %2606 = vmatprep.subr.mxu0 0.0
        %2607 = vmatpush1.msra.mxu0 0.0
        %2608 = vmatprep.subr.mxu0 0.0
        %2609 = vmatpush1.msra.mxu0 0.0
        %2610 = vmatprep.subr.mxu0 0.0
        %2611 = vmatpush1.msra.mxu0 0.0
        %2612 = vmatprep.subr.mxu0 0.0
        %2613 = vmatpush1.msra.mxu0 0.0
        %2614 = vmatprep.subr.mxu0 0.0
        %2615 = vmatpush1.msra.mxu0 0.0
        %2616 = vmatprep.subr.mxu0 0.0
        %2617 = vmatpush1.msra.mxu0 0.0
        %2618 = vmatprep.subr.mxu0 0.0
        %2619 = vmatpush1.msra.mxu0 0.0
        %2620 = vmatprep.subr.mxu0 0.0
        %2621 = vmatpush1.msra.mxu0 0.0
        %2622 = vmatprep.subr.mxu0 0.0
        %2623 = vmatpush1.msra.mxu0 0.0
        %2624 = vmatprep.subr.mxu0 0.0
        %2625 = vmatpush1.msra.mxu0 0.0
        %2626 = vmatprep.subr.mxu0 0.0
        %2627 = vmatpush1.msra.mxu0 0.0
        %2628 = vmatprep.subr.mxu0 0.0
        %2629 = vmatpush1.msra.mxu0 0.0
        %2630 = vmatprep.subr.mxu0 0.0
        %2631 = vmatpush1.msra.mxu0 0.0
        %2632 = vmatprep.subr.mxu0 0.0
        %2633 = vmatpush1.msra.mxu0 0.0
        %2634 = vmatprep.subr.mxu0 0.0
        %2635 = vmatpush1.msra.mxu0 0.0
        %2636 = vmatprep.subr.mxu0 0.0
        %2637 = vmatpush1.msra.mxu0 0.0
        %2638 = vmatprep.subr.mxu0 0.0
        %2639 = vmatpush1.msra.mxu0 0.0
        %2640 = vmatprep.mubr.f32.mxu0 0.0
        %2641 = vmatmul.mubr.f32.gmra.mrb[0].mxu0 %v2574
        %v2642 = vpop.f32.mrb[0].mxu0
        %v2643 = vadd.f32 0.0, %v2642
        %v2644 = vpop.f32.mrb[0].mxu0
        %2645 = vdwg.mxu0
        %v2647 = vsel %vm468, %v2643, 0
        %2649 = vmatprep.subr.mxu0 0.0
        %2650 = vmatpush1.msra.mxu0 %v1623
        %2651 = vmatprep.subr.mxu0 0.0
        %2652 = vmatpush1.msra.mxu0 0.0
        %2653 = vmatprep.subr.mxu0 0.0
        %2654 = vmatpush1.msra.mxu0 0.0
        %2655 = vmatprep.subr.mxu0 0.0
        %2656 = vmatpush1.msra.mxu0 0.0
        %2657 = vmatprep.subr.mxu0 0.0
        %2658 = vmatpush1.msra.mxu0 0.0
        %2659 = vmatprep.subr.mxu0 0.0
        %2660 = vmatpush1.msra.mxu0 0.0
        %2661 = vmatprep.subr.mxu0 0.0
        %2662 = vmatpush1.msra.mxu0 0.0
        %2663 = vmatprep.subr.mxu0 0.0
        %2664 = vmatpush1.msra.mxu0 0.0
        %2665 = vmatprep.subr.mxu0 0.0
        %2666 = vmatpush1.msra.mxu0 0.0
        %2667 = vmatprep.subr.mxu0 0.0
        %2668 = vmatpush1.msra.mxu0 0.0
        %2669 = vmatprep.subr.mxu0 0.0
        %2670 = vmatpush1.msra.mxu0 0.0
        %2671 = vmatprep.subr.mxu0 0.0
        %2672 = vmatpush1.msra.mxu0 0.0
        %2673 = vmatprep.subr.mxu0 0.0
        %2674 = vmatpush1.msra.mxu0 0.0
        %2675 = vmatprep.subr.mxu0 0.0
        %2676 = vmatpush1.msra.mxu0 0.0
        %2677 = vmatprep.subr.mxu0 0.0
        %2678 = vmatpush1.msra.mxu0 0.0
        %2679 = vmatprep.subr.mxu0 0.0
        %2680 = vmatpush1.msra.mxu0 0.0
        %2681 = vmatprep.subr.mxu0 0.0
        %2682 = vmatpush1.msra.mxu0 0.0
        %2683 = vmatprep.subr.mxu0 0.0
        %2684 = vmatpush1.msra.mxu0 0.0
        %2685 = vmatprep.subr.mxu0 0.0
        %2686 = vmatpush1.msra.mxu0 0.0
        %2687 = vmatprep.subr.mxu0 0.0
        %2688 = vmatpush1.msra.mxu0 0.0
        %2689 = vmatprep.subr.mxu0 0.0
        %2690 = vmatpush1.msra.mxu0 0.0
        %2691 = vmatprep.subr.mxu0 0.0
        %2692 = vmatpush1.msra.mxu0 0.0
        %2693 = vmatprep.subr.mxu0 0.0
        %2694 = vmatpush1.msra.mxu0 0.0
        %2695 = vmatprep.subr.mxu0 0.0
        %2696 = vmatpush1.msra.mxu0 0.0
        %2697 = vmatprep.subr.mxu0 0.0
        %2698 = vmatpush1.msra.mxu0 0.0
        %2699 = vmatprep.subr.mxu0 0.0
        %2700 = vmatpush1.msra.mxu0 0.0
        %2701 = vmatprep.subr.mxu0 0.0
        %2702 = vmatpush1.msra.mxu0 0.0
        %2703 = vmatprep.subr.mxu0 0.0
        %2704 = vmatpush1.msra.mxu0 0.0
        %2705 = vmatprep.subr.mxu0 0.0
        %2706 = vmatpush1.msra.mxu0 0.0
        %2707 = vmatprep.subr.mxu0 0.0
        %2708 = vmatpush1.msra.mxu0 0.0
        %2709 = vmatprep.subr.mxu0 0.0
        %2710 = vmatpush1.msra.mxu0 0.0
        %2711 = vmatprep.subr.mxu0 0.0
        %2712 = vmatpush1.msra.mxu0 0.0
        %2713 = vmatprep.mubr.f32.mxu0 0.0
        %2714 = vmatmul.mubr.f32.gmra.mrb[0].mxu0 %v2647
        %v2715 = vpop.f32.mrb[0].mxu0
        %v2716 = vadd.f32 0.0, %v2715
        %v2717 = vpop.f32.mrb[0].mxu0
        %2718 = vdwg.mxu0
        %v2719 = vadd.f32 %v2480, %v2716
        %v2720 = vadd.f32 %v1610, %v2719
        %v2721 = vlaneseq
        %v2722 = vshrl.u32 %v2721, 7
        %v2723 = vsub.s32 4, %v2722
        %v2724 = vrot.slane %v1612, %v2723
        %v2725 = vadd.f32 %v2720, %v2724
        %v2726 = vsel %vm344, %v2725, 0.0
        %2727 = vadd.xlane.f32.xlu0 %v2726
        %v2728 = vpop.xlane.xlu0 %2727
        %v2729 = vmul.f32 %v2728, %v348
        %v2730 = vsub.f32 %v2725, %v2729
        %v2731 = vmul.f32 %v2730, %v2730
        %v2732 = vsel %vm344, %v2731, 0.0
        %2733 = vadd.xlane.f32.xlu0 %v2732
        %v2734 = vpop.xlane.xlu0 %2733
        %v2735 = vmul.f32 %v2734, %v348
        %v2736 = vadd.f32 %v2735, 1e-05
        %v2737 = vrsqrt.pop %v2736
        %v2738 = vmul.f32 %v2730, %v2737
        %v2739 = vlaneseq
        %v2740 = vshrl.u32 %v2739, 7
        %v2741 = vsub.s32 2, %v2740
        %v2742 = vrot.slane %v1612, %v2741
        %v2743 = vmul.f32 %v2738, %v2742
        %v2744 = vlaneseq
        %v2745 = vshrl.u32 %v2744, 7
        %v2746 = vsub.s32 3, %v2745
        %v2747 = vrot.slane %v1612, %v2746
        %v2748 = vadd.f32 %v2743, %v2747
        %v2749 = vlaneseq
        %v2750 = vshrl.u32 %v2749, 7
        %v2751 = vsub.s32 1, %v2750
        %v2752 = vrot.slane %v1613, %v2751
        %v2754 = vsel %vm344, %v2748, 0
        %2756 = vmatprep.subr.mxu0 0.0
        %2757 = vmatpush1.msra.mxu0 %v1625
        %2758 = vmatprep.subr.mxu0 0.0
        %2759 = vmatpush1.msra.mxu0 %v1626
        %2760 = vmatprep.subr.mxu0 0.0
        %2761 = vmatpush1.msra.mxu0 %v1627
        %2762 = vmatprep.subr.mxu0 0.0
        %2763 = vmatpush1.msra.mxu0 %v1628
        %2764 = vmatprep.subr.mxu0 0.0
        %2765 = vmatpush1.msra.mxu0 0.0
        %2766 = vmatprep.subr.mxu0 0.0
        %2767 = vmatpush1.msra.mxu0 0.0
        %2768 = vmatprep.subr.mxu0 0.0
        %2769 = vmatpush1.msra.mxu0 0.0
        %2770 = vmatprep.subr.mxu0 0.0
        %2771 = vmatpush1.msra.mxu0 0.0
        %2772 = vmatprep.subr.mxu0 0.0
        %2773 = vmatpush1.msra.mxu0 0.0
        %2774 = vmatprep.subr.mxu0 0.0
        %2775 = vmatpush1.msra.mxu0 0.0
        %2776 = vmatprep.subr.mxu0 0.0
        %2777 = vmatpush1.msra.mxu0 0.0
        %2778 = vmatprep.subr.mxu0 0.0
        %2779 = vmatpush1.msra.mxu0 0.0
        %2780 = vmatprep.subr.mxu0 0.0
        %2781 = vmatpush1.msra.mxu0 0.0
        %2782 = vmatprep.subr.mxu0 0.0
        %2783 = vmatpush1.msra.mxu0 0.0
        %2784 = vmatprep.subr.mxu0 0.0
        %2785 = vmatpush1.msra.mxu0 0.0
        %2786 = vmatprep.subr.mxu0 0.0
        %2787 = vmatpush1.msra.mxu0 0.0
        %2788 = vmatprep.subr.mxu0 0.0
        %2789 = vmatpush1.msra.mxu0 0.0
        %2790 = vmatprep.subr.mxu0 0.0
        %2791 = vmatpush1.msra.mxu0 0.0
        %2792 = vmatprep.subr.mxu0 0.0
        %2793 = vmatpush1.msra.mxu0 0.0
        %2794 = vmatprep.subr.mxu0 0.0
        %2795 = vmatpush1.msra.mxu0 0.0
        %2796 = vmatprep.subr.mxu0 0.0
        %2797 = vmatpush1.msra.mxu0 0.0
        %2798 = vmatprep.subr.mxu0 0.0
        %2799 = vmatpush1.msra.mxu0 0.0
        %2800 = vmatprep.subr.mxu0 0.0
        %2801 = vmatpush1.msra.mxu0 0.0
        %2802 = vmatprep.subr.mxu0 0.0
        %2803 = vmatpush1.msra.mxu0 0.0
        %2804 = vmatprep.subr.mxu0 0.0
        %2805 = vmatpush1.msra.mxu0 0.0
        %2806 = vmatprep.subr.mxu0 0.0
        %2807 = vmatpush1.msra.mxu0 0.0
        %2808 = vmatprep.subr.mxu0 0.0
        %2809 = vmatpush1.msra.mxu0 0.0
        %2810 = vmatprep.subr.mxu0 0.0
        %2811 = vmatpush1.msra.mxu0 0.0
        %2812 = vmatprep.subr.mxu0 0.0
        %2813 = vmatpush1.msra.mxu0 0.0
        %2814 = vmatprep.subr.mxu0 0.0
        %2815 = vmatpush1.msra.mxu0 0.0
        %2816 = vmatprep.subr.mxu0 0.0
        %2817 = vmatpush1.msra.mxu0 0.0
        %2818 = vmatprep.subr.mxu0 0.0
        %2819 = vmatpush1.msra.mxu0 0.0
        %2820 = vmatprep.mubr.f32.mxu0 0.0
        %2821 = vmatmul.mubr.f32.gmra.mrb[0].mxu0 %v2754
        %v2822 = vpop.f32.mrb[0].mxu0
        %v2823 = vadd.f32 %v2752, %v2822
        %v2824 = vpop.f32.mrb[0].mxu0
        %2825 = vdwg.mxu0
        %v2826 = vmul.f32 %v2823, 1.702
        %v2827 = vxor.u32 %v2826, 2147483648
        %v2828 = vmul.f32 %v2827, 1.442695
        %v2829 = vpow.pop %v2828
        %v2830 = vadd.f32 %v2829, 1.0
        %v2831 = vrcp.pop %v2830
        %v2832 = vmul.f32 1.0, %v2831
        %v2833 = vmul.f32 %v2823, %v2832
        %2834 = vmatprep.subr.mxu0 0.0
        %2835 = vmatpush1.msra.mxu0 %v1630
        %2836 = vmatprep.subr.mxu0 0.0
        %2837 = vmatpush1.msra.mxu0 %v1631
        %2838 = vmatprep.subr.mxu0 0.0
        %2839 = vmatpush1.msra.mxu0 %v1632
        %2840 = vmatprep.subr.mxu0 0.0
        %2841 = vmatpush1.msra.mxu0 %v1633
        %2842 = vmatprep.subr.mxu0 0.0
        %2843 = vmatpush1.msra.mxu0 %v1634
        %2844 = vmatprep.subr.mxu0 0.0
        %2845 = vmatpush1.msra.mxu0 %v1635
        %2846 = vmatprep.subr.mxu0 0.0
        %2847 = vmatpush1.msra.mxu0 %v1636
        %2848 = vmatprep.subr.mxu0 0.0
        %2849 = vmatpush1.msra.mxu0 %v1637
        %2850 = vmatprep.subr.mxu0 0.0
        %2851 = vmatpush1.msra.mxu0 %v1638
        %2852 = vmatprep.subr.mxu0 0.0
        %2853 = vmatpush1.msra.mxu0 %v1639
        %2854 = vmatprep.subr.mxu0 0.0
        %2855 = vmatpush1.msra.mxu0 %v1640
        %2856 = vmatprep.subr.mxu0 0.0
        %2857 = vmatpush1.msra.mxu0 %v1641
        %2858 = vmatprep.subr.mxu0 0.0
        %2859 = vmatpush1.msra.mxu0 %v1642
        %2860 = vmatprep.subr.mxu0 0.0
        %2861 = vmatpush1.msra.mxu0 %v1643
        %2862 = vmatprep.subr.mxu0 0.0
        %2863 = vmatpush1.msra.mxu0 %v1644
        %2864 = vmatprep.subr.mxu0 0.0
        %2865 = vmatpush1.msra.mxu0 %v1645
        %2866 = vmatprep.subr.mxu0 0.0
        %2867 = vmatpush1.msra.mxu0 0.0
        %2868 = vmatprep.subr.mxu0 0.0
        %2869 = vmatpush1.msra.mxu0 0.0
        %2870 = vmatprep.subr.mxu0 0.0
        %2871 = vmatpush1.msra.mxu0 0.0
        %2872 = vmatprep.subr.mxu0 0.0
        %2873 = vmatpush1.msra.mxu0 0.0
        %2874 = vmatprep.subr.mxu0 0.0
        %2875 = vmatpush1.msra.mxu0 0.0
        %2876 = vmatprep.subr.mxu0 0.0
        %2877 = vmatpush1.msra.mxu0 0.0
        %2878 = vmatprep.subr.mxu0 0.0
        %2879 = vmatpush1.msra.mxu0 0.0
        %2880 = vmatprep.subr.mxu0 0.0
        %2881 = vmatpush1.msra.mxu0 0.0
        %2882 = vmatprep.subr.mxu0 0.0
        %2883 = vmatpush1.msra.mxu0 0.0
        %2884 = vmatprep.subr.mxu0 0.0
        %2885 = vmatpush1.msra.mxu0 0.0
        %2886 = vmatprep.subr.mxu0 0.0
        %2887 = vmatpush1.msra.mxu0 0.0
        %2888 = vmatprep.subr.mxu0 0.0
        %2889 = vmatpush1.msra.mxu0 0.0
        %2890 = vmatprep.subr.mxu0 0.0
        %2891 = vmatpush1.msra.mxu0 0.0
        %2892 = vmatprep.subr.mxu0 0.0
        %2893 = vmatpush1.msra.mxu0 0.0
        %2894 = vmatprep.subr.mxu0 0.0
        %2895 = vmatpush1.msra.mxu0 0.0
        %2896 = vmatprep.subr.mxu0 0.0
        %2897 = vmatpush1.msra.mxu0 0.0
        %2898 = vmatprep.mubr.f32.mxu0 0.0
        %2899 = vmatmul.mubr.f32.gmra.mrb[0].mxu0 %v2833
        %v2900 = vpop.f32.mrb[0].mxu0
        %v2901 = vadd.f32 0.0, %v2900
        %v2902 = vpop.f32.mrb[0].mxu0
        %2903 = vdwg.mxu0
        %v2904 = vadd.f32 %v2725, %v2901
        %v2905 = vlaneseq
        %v2906 = vshrl.u32 %v2905, 7
        %v2907 = vsub.s32 5, %v2906
        %v2908 = vrot.slane %v1612, %v2907
        %v2909 = vadd.f32 %v2904, %v2908
        %2910 = vst.msk [vmem:[#allocation2] sm:$0xff] %vm344, %v2909
        %s2911 = sld [smem:[#allocation4 + %s29]]
        %s2912 = scalar_lea.vmem [#allocation2], %s2911
        %v2913 = vld [vmem:[%s2912] sm:$0x1]
        %v2914 = vld [vmem:[%s7] sm:$0x1]
        %v2915 = vld [vmem:[%s7 + $0x1] sm:$0x1]
        %vm2916 = vcmask 253952
        %v2917 = vsel %vm2916, %v2913, 0.0
        %2918 = vadd.xlane.f32.xlu0 %v2917
        %v2919 = vpop.xlane.xlu0 %2918
        %v2920 = vmul.f32 %v2919, %v348
        %v2921 = vsub.f32 %v2913, %v2920
        %v2922 = vmul.f32 %v2921, %v2921
        %v2923 = vsel %vm2916, %v2922, 0.0
        %2924 = vadd.xlane.f32.xlu0 %v2923
        %v2925 = vpop.xlane.xlu0 %2924
        %v2926 = vmul.f32 %v2925, %v348
        %v2927 = vadd.f32 %v2926, 1e-05
        %v2928 = vrsqrt.pop %v2927
        %v2929 = vmul.f32 %v2921, %v2928
        %v2930 = vmul.f32 %v2929, %v2914
        %v2931 = vadd.f32 %v2930, %v2915
        %v2932 = vld [vmem:[%s8] sm:$0xff]
        %v2933 = vld [vmem:[%s8 + $0x8] sm:$0xff]
        %v2934 = vld [vmem:[%s8 + $0x10] sm:$0xff]
        %v2935 = vld [vmem:[%s8 + $0x18] sm:$0xff]
        %v2937 = vsel %vm344, %v2931, 0
        %2939 = vmatprep.subr.mxu0 0.0
        %2940 = vmatpush1.msra.mxu0 %v2932
        %2941 = vmatprep.subr.mxu0 0.0
        %2942 = vmatpush1.msra.mxu0 %v2933
        %2943 = vmatprep.subr.mxu0 0.0
        %2944 = vmatpush1.msra.mxu0 %v2934
        %2945 = vmatprep.subr.mxu0 0.0
        %2946 = vmatpush1.msra.mxu0 %v2935
        %2947 = vmatprep.subr.mxu0 0.0
        %2948 = vmatpush1.msra.mxu0 0.0
        %2949 = vmatprep.subr.mxu0 0.0
        %2950 = vmatpush1.msra.mxu0 0.0
        %2951 = vmatprep.subr.mxu0 0.0
        %2952 = vmatpush1.msra.mxu0 0.0
        %2953 = vmatprep.subr.mxu0 0.0
        %2954 = vmatpush1.msra.mxu0 0.0
        %2955 = vmatprep.subr.mxu0 0.0
        %2956 = vmatpush1.msra.mxu0 0.0
        %2957 = vmatprep.subr.mxu0 0.0
        %2958 = vmatpush1.msra.mxu0 0.0
        %2959 = vmatprep.subr.mxu0 0.0
        %2960 = vmatpush1.msra.mxu0 0.0
        %2961 = vmatprep.subr.mxu0 0.0
        %2962 = vmatpush1.msra.mxu0 0.0
        %2963 = vmatprep.subr.mxu0 0.0
        %2964 = vmatpush1.msra.mxu0 0.0
        %2965 = vmatprep.subr.mxu0 0.0
        %2966 = vmatpush1.msra.mxu0 0.0
        %2967 = vmatprep.subr.mxu0 0.0
        %2968 = vmatpush1.msra.mxu0 0.0
        %2969 = vmatprep.subr.mxu0 0.0
        %2970 = vmatpush1.msra.mxu0 0.0
        %2971 = vmatprep.subr.mxu0 0.0
        %2972 = vmatpush1.msra.mxu0 0.0
        %2973 = vmatprep.subr.mxu0 0.0
        %2974 = vmatpush1.msra.mxu0 0.0
        %2975 = vmatprep.subr.mxu0 0.0
        %2976 = vmatpush1.msra.mxu0 0.0
        %2977 = vmatprep.subr.mxu0 0.0
        %2978 = vmatpush1.msra.mxu0 0.0
        %2979 = vmatprep.subr.mxu0 0.0
        %2980 = vmatpush1.msra.mxu0 0.0
        %2981 = vmatprep.subr.mxu0 0.0
        %2982 = vmatpush1.msra.mxu0 0.0
        %2983 = vmatprep.subr.mxu0 0.0
        %2984 = vmatpush1.msra.mxu0 0.0
        %2985 = vmatprep.subr.mxu0 0.0
        %2986 = vmatpush1.msra.mxu0 0.0
        %2987 = vmatprep.subr.mxu0 0.0
        %2988 = vmatpush1.msra.mxu0 0.0
        %2989 = vmatprep.subr.mxu0 0.0
        %2990 = vmatpush1.msra.mxu0 0.0
        %2991 = vmatprep.subr.mxu0 0.0
        %2992 = vmatpush1.msra.mxu0 0.0
        %2993 = vmatprep.subr.mxu0 0.0
        %2994 = vmatpush1.msra.mxu0 0.0
        %2995 = vmatprep.subr.mxu0 0.0
        %2996 = vmatpush1.msra.mxu0 0.0
        %2997 = vmatprep.subr.mxu0 0.0
        %2998 = vmatpush1.msra.mxu0 0.0
        %2999 = vmatprep.subr.mxu0 0.0
        %3000 = vmatpush1.msra.mxu0 0.0
        %3001 = vmatprep.subr.mxu0 0.0
        %3002 = vmatpush1.msra.mxu0 0.0
        %3003 = vmatprep.mubr.f32.mxu0 0.0
        %3004 = vmatmul.mubr.f32.gmra.mrb[0].mxu0 %v2937
        %v3005 = vpop.f32.mrb[0].mxu0
        %v3006 = vadd.f32 0.0, %v3005
        %v3007 = vpop.f32.mrb[0].mxu0
        %3008 = vdwg.mxu0
        %3009 = vst.msk [vmem:[%s302] sm:$0x1] %vm2916, %v3006
        %s3010 = sand.u32 %s210, 1
        %s3011 = scalar_lea.sflag [#allocation6], %s3010
        %s3012 = sand.u32 %s210, 1
        %s3013 = scalar_lea.vmem [#allocation5], %s3012
        // Predicated region
        $region53: #{tpu_custom_call.1} parent=51 // pred_check
          %p3014 = pneg %p220
        $region54: #{tpu_custom_call.1} parent=51 // pred_check_branch
          %3016 = sbr.rel (%p3014) target = $region56
        $region55: #{tpu_custom_call.1} parent=51 // pred_region
          %s3018 = ssub.s32 16, 16
          %3019 = vsyncadd %s3011, %s3018
          %s3020 = smul.addr %s29, 16
          %s3021 = scalar_lea.hbm %s9, %s3020
          %s3023 = sshll.u32 %s3013, 4
          %s3024 = int_to_ptr.vmem [resolvable:$true] %s3023
          %3026 = dma.vmem_to_hbm [thread:$0]  %s3024, 16, %s3021, %s3011
        $region56: #{tpu_custom_call.1} parent=51 // pred_fallthru
          _
      $region52: #{tpu_custom_call.1} parent=5 // pred_fallthru
        _
      %p3027 = scmp.le.s32.totalorder 2, %s24
      // Predicated region
      $region57: #{tpu_custom_call.1} parent=5 // pred_check
        %p3028 = pneg %p3027
      $region58: #{tpu_custom_call.1} parent=5 // pred_check_branch
        %3030 = sbr.rel (%p3028) target = $region60
      $region59: #{tpu_custom_call.1} parent=5 // pred_region
        %s3031 = ssub.s32 %s24, 2
        // Predicated region
        $region61: #{tpu_custom_call.1} parent=59 // pred_check
          %p3032 = pneg %p226
        $region62: #{tpu_custom_call.1} parent=59 // pred_check_branch
          %3034 = sbr.rel (%p3032) target = $region64
        $region63: #{tpu_custom_call.1} parent=59 // pred_region
          %s3035 = sand.u32 %s211, 1
          %s3036 = scalar_lea.sflag [#allocation6], %s3035
          %s3037 = sand.u32 %s211, 1
          %s3038 = scalar_lea.vmem [#allocation5], %s3037
          %3039 = dma.done %s3036, 16
        $region64: #{tpu_custom_call.1} parent=59 // pred_fallthru
          _
      $region60: #{tpu_custom_call.1} parent=5 // pred_fallthru
        _
    $region6: #{tpu_custom_call.1} parent=1 // loop_footer
      %s28 = sadd.s32 1, %s24
    $region7: #{tpu_custom_call.1} parent=1 // loop_footer_branch
      %23 = sbr.rel target = $region3
    $region8: #{tpu_custom_call.1} parent=1 // loop_exit
      _
    %3040 = vsyncpa [#allocation6], 1
    %s3041 = scalar_lea.sflag [#allocation6], 1
    %3042 = vsyncpa %s3041, 1

</llo_original>
